<compile_context>
chip_gen: v5e
topology: v5e:2x2
jax: 0.10.0
libtpu: 0.0.40
codegen_flags: <defaults>
</compile_context>

<pallas_src>
import jax
import jax.numpy as jnp
from jax.experimental import pallas as pl
from jax.experimental.pallas import tpu as pltpu


# ---------------------------------------------------------------------------
# in-kernel building block (operates on VMEM-resident values)
# ---------------------------------------------------------------------------
def _conv_in_lrelu(x, wmat, sel):
    """Conv2dBlock: reflect-pad 1, 4x4 stride-2 conv, InstanceNorm2d, LeakyReLU(0.2).

    x    : (H, Cin, W) float32 activation in (H, C, W) layout.
    wmat : (Cout, 16*Cin) bfloat16; torch weight (Cout, Cin, 4, 4) flattened as
           column index = j*(4*Cin) + i*Cin + c.
    sel  : (W, 4*(W//2)) bfloat16 0/1 matrix folding reflect-pad-1 + stride-2
           column selection: sel[w, j*Wout + b] = 1 iff w == reflect(2*b + j).
    returns (H//2, Cout, W//2) float32.
    """
    h, cin, w = x.shape
    cout = wmat.shape[0]
    hout, wout = h // 2, w // 2

    # reflection pad (pad=1) along H: leading-dim slices + concat (cheap, layout-free).
    xp = jnp.concatenate([x[1:2], x, x[h - 2:h - 1]], axis=0)          # (h+2, cin, w)
    # stride-2 row selection: free leading-dim parity reshape + static slices.
    xq = xp.reshape((h + 2) // 2, 2, cin, w)
    u = jnp.concatenate(
        [xq[0:hout, 0],          # kernel row i = 0 -> padded input rows 2a
         xq[0:hout, 1],          # i = 1            -> 2a + 1
         xq[1:hout + 1, 0],      # i = 2            -> 2a + 2
         xq[1:hout + 1, 1]],     # i = 3            -> 2a + 3
        axis=1)                                                        # (hout, 4*cin, w)

    # reflect-pad + stride-2 column selection as one bf16 MXU matmul (batch = out rows).
    selb = jnp.broadcast_to(sel, (hout,) + sel.shape)                  # (hout, w, 4*wout)
    pw = jnp.einsum('akw,awm->akm', u.astype(jnp.bfloat16), selb,
                    preferred_element_type=jnp.float32)                # (hout, 4cin, 4wout)
    # regroup the 4 column shifts onto the contraction axis -> im2col patches in VMEM.
    pa = jnp.concatenate([pw[:, :, j * wout:(j + 1) * wout] for j in range(4)],
                         axis=1)                                       # (hout, 16cin, wout)

    # the convolution: bf16 MXU operands, f32 accumulation (bias dropped: IN cancels it).
    wb = jnp.broadcast_to(wmat, (hout,) + wmat.shape)                  # (hout, cout, 16cin)
    y = jnp.einsum('aok,akb->aob', wb, pa.astype(jnp.bfloat16),
                   preferred_element_type=jnp.float32)                 # (hout, cout, wout)

    # InstanceNorm2d: per-channel over spatial, biased variance, eps=1e-5, affine=False.
    n = float(hout * wout)
    s = jnp.sum(jnp.sum(y, axis=2, keepdims=True), axis=0, keepdims=True)
    mean = s / n
    d = y - mean
    v = jnp.sum(jnp.sum(d * d, axis=2, keepdims=True), axis=0, keepdims=True) / n
    y = d * jax.lax.rsqrt(v + 1e-5)
    # LeakyReLU(0.2)
    return jnp.maximum(y, 0.2 * y)


# ---------------------------------------------------------------------------
# constants / parameters
# ---------------------------------------------------------------------------
def _make_col_selector(w_in):
    """(w_in, 4*(w_in//2)) 0/1 bf16 matrix: reflect-pad-1 + stride-2 column gather."""
    wout = w_in // 2
    p = (jnp.arange(4)[:, None] + 2 * jnp.arange(wout)[None, :]).reshape(-1)  # padded col
    src = jnp.where(p == 0, 1, jnp.where(p == w_in + 1, w_in - 2, p - 1))     # reflect map
    return (jnp.arange(w_in)[:, None] == src[None, :]).astype(jnp.bfloat16)


def init_discriminator_params(key, *, img_size, conv_dim, num_emotion, repeat_num):
    """Parameters in PyTorch layout.  Conv biases are omitted: InstanceNorm2d
    (affine=False) subtracts the per-channel mean immediately after the conv, so a
    per-channel bias cancels exactly and never affects the forward output."""
    params = {"blocks": []}
    cin, cout = 3, conv_dim
    for _ in range(repeat_num):
        key, kw = jax.random.split(key)
        w = jax.random.normal(kw, (cout, cin, 4, 4), jnp.float32) / jnp.sqrt(cin * 16.0)
        params["blocks"].append(w)
        cin, cout = cout, cout * 2
    cf = cin
    k_s = img_size // (2 ** repeat_num)
    key, k1, k3 = jax.random.split(key, 3)
    params["conv1_w"] = jax.random.normal(k1, (1, cf, 2, 2), jnp.float32) / jnp.sqrt(cf * 4.0)
    params["conv3_w"] = jax.random.normal(
        k3, (num_emotion, cf, k_s, k_s), jnp.float32) / jnp.sqrt(float(cf * k_s * k_s))
    # TODO(synk): conv2 (identity head, num_id outputs) is never used in forward(); omitted.
    return params


# ---------------------------------------------------------------------------
# fused forward builder
# ---------------------------------------------------------------------------
def build_discriminator_forward(params, *, img_size, num_emotion):
    blocks = params["blocks"]
    n_l = len(blocks)

    # static per-layer config (square activations)
    cfgs = []
    h = img_size
    for w in blocks:
        cout, cin, k, _ = w.shape
        assert k == 4 and h % 2 == 0
        cfgs.append((cin, cout, h))
        h //= 2
    hf = h                      # final spatial size (= k_s)
    cf = cfgs[-1][1]            # final channel count
    assert hf >= 2 and params["conv3_w"].shape[2] == hf
    for (cin, _, _) in cfgs[1:]:
        assert cin % 8 == 0, "conv_dim must be a multiple of 8"

    # ---- kernel-ready constants (built ONCE, outside the jitted forward) ----
    c0 = cfgs[0][0]
    c0p = max(8, ((c0 + 7) // 8) * 8)            # pad input channels for clean tiling

    wmats, sels = [], []
    for li, (wt_raw, (cin, cout, hl)) in enumerate(zip(blocks, cfgs)):
        wt = jnp.transpose(wt_raw, (0, 3, 2, 1))              # (cout, kj, ki, cin)
        if li == 0 and c0p != c0:
            wt = jnp.pad(wt, ((0, 0), (0, 0), (0, 0), (0, c0p - c0)))
        cin_p = wt.shape[-1]
        wmats.append(wt.reshape(cout, 16 * cin_p).astype(jnp.bfloat16))
        sels.append(_make_col_selector(hl))

    w1 = params["conv1_w"]                                     # (1, cf, 2, 2)
    wj_arr = jnp.transpose(w1[0], (1, 2, 0)).reshape(4, cf)[:, None, :, None]  # (4,1,cf,1)
    w3u = jnp.transpose(params["conv3_w"], (0, 2, 1, 3))       # (nem, hf, cf, wf)

    H0, W0 = img_size, img_size

    def kernel(*refs):
        x_ref = refs[0]
        w_refs = refs[1:1 + n_l]
        s_refs = refs[1 + n_l:1 + 2 * n_l]
        wj_ref = refs[1 + 2 * n_l]
        we_ref = refs[2 + 2 * n_l]
        judge_ref = refs[3 + 2 * n_l]
        emo_ref = refs[4 + 2 * n_l]

        # backbone: all Conv2dBlocks fused; activations never leave VMEM.
        x = x_ref[0]                                   # (H0, c0p, W0) f32, (H,C,W) layout
        for l in range(n_l):
            x = _conv_in_lrelu(x, w_refs[l][...], s_refs[l][...])

        # ---- judge head: bias-free 2x2 stride-1 conv, Cout = 1 (VPU) ----
        hf_, cf_, wf_ = x.shape
        wj = wj_ref[...]                               # (4, 1, cf, 1)
        acc = jnp.zeros((hf_ - 1, 1, wf_ - 1), jnp.float32)
        for i in range(2):
            for j in range(2):
                slab = x[i:i + hf_ - 1, :, j:j + wf_ - 1]            # (hf-1, cf, wf-1)
                acc = acc + jnp.sum(slab * wj[2 * i + j], axis=1, keepdims=True)
        judge_ref[0] = acc                             # (hf-1, 1, wf-1)

        # ---- emotion head: bias-free k_s x k_s conv -> (num_emotion,) (VPU) ----
        w3 = we_ref[...]                               # (nem, hf, cf, wf)
        prod = w3 * x[None]                            # (nem, hf, cf, wf)
        e = jnp.sum(prod, axis=3, keepdims=True)
        e = jnp.sum(e, axis=2, keepdims=True)
        e = jnp.sum(e, axis=1, keepdims=True)          # (nem, 1, 1, 1)
        emo_ref[0] = e[:, 0]                           # (nem, 1, 1)

    in_specs = [pl.BlockSpec((1, H0, c0p, W0), lambda b: (b, 0, 0, 0))]
    for wm in wmats:
        in_specs.append(pl.BlockSpec(wm.shape, lambda b: (0, 0)))
    for s in sels:
        in_specs.append(pl.BlockSpec(s.shape, lambda b: (0, 0)))
    in_specs.append(pl.BlockSpec(wj_arr.shape, lambda b: (0, 0, 0, 0)))
    in_specs.append(pl.BlockSpec(w3u.shape, lambda b: (0, 0, 0, 0)))

    out_specs = (
        pl.BlockSpec((1, hf - 1, 1, hf - 1), lambda b: (b, 0, 0, 0)),
        pl.BlockSpec((1, num_emotion, 1, 1), lambda b: (b, 0, 0, 0)),
    )

    @jax.jit
    def forward(x):
        B = x.shape[0]
        # NCHW -> per-sample (H, C, W) layout; zero-pad input channels once.
        xt = jnp.transpose(x, (0, 2, 1, 3))
        if c0p != c0:
            xt = jnp.pad(xt, ((0, 0), (0, 0), (0, c0p - c0), (0, 0)))
        judge, emo = pl.pallas_call(
            kernel,
            out_shape=(
                jax.ShapeDtypeStruct((B, hf - 1, 1, hf - 1), jnp.float32),
                jax.ShapeDtypeStruct((B, num_emotion, 1, 1), jnp.float32),
            ),
            grid=(B,),
            in_specs=in_specs,
            out_specs=out_specs,
            compiler_params=pltpu.CompilerParams(
                dimension_semantics=("parallel",)),
        )(xt, *wmats, *sels, wj_arr, w3u)
        # layout fix-ups on tiny outputs (pure metadata-sized reshapes)
        return judge.reshape(B, 1, hf - 1, hf - 1), emo.reshape(B, num_emotion)

    return forward


# ---------------------------------------------------------------------------
if __name__ == "__main__":
    # Small-but-consistent configuration of the module:
    #   img_size=32, conv_dim=8, repeat_num=3, num_emotion=8  ->  k_s = 32 / 2^3 = 4
    B, IMG, CDIM, REPEAT, NEMO = 2, 32, 8, 3, 8

    key = jax.random.PRNGKey(0)
    key, kx = jax.random.split(key)
    x = jax.random.normal(kx, (B, 3, IMG, IMG), jnp.float32)   # NCHW, like PyTorch

    params = init_discriminator_params(
        key, img_size=IMG, conv_dim=CDIM, num_emotion=NEMO, repeat_num=REPEAT)
    fwd = build_discriminator_forward(params, img_size=IMG, num_emotion=NEMO)

    judge, emotion = fwd(x)
    judge = jax.block_until_ready(judge)
    emotion = jax.block_until_ready(emotion)

    k_s = IMG // (2 ** REPEAT)
    assert judge.shape == (B, 1, k_s - 1, k_s - 1), judge.shape
    assert emotion.shape == (B, NEMO), emotion.shape
    assert bool(jnp.all(jnp.isfinite(judge))) and bool(jnp.all(jnp.isfinite(emotion)))

    print("KERNEL_OK")
</pallas_src>

<mosaic_0001>
module attributes {stable_mosaic.version = 11 : i64} {
  func.func @kernel(%arg0: i32, %arg1: memref<1x32x8x32xf32, #tpu.memory_space<vmem>>, %arg2: memref<8x128xbf16, #tpu.memory_space<vmem>>, %arg3: memref<16x128xbf16, #tpu.memory_space<vmem>>, %arg4: memref<32x256xbf16, #tpu.memory_space<vmem>>, %arg5: memref<32x64xbf16, #tpu.memory_space<vmem>>, %arg6: memref<16x32xbf16, #tpu.memory_space<vmem>>, %arg7: memref<8x16xbf16, #tpu.memory_space<vmem>>, %arg8: memref<4x1x32x1xf32, #tpu.memory_space<vmem>>, %arg9: memref<8x4x32x4xf32, #tpu.memory_space<vmem>>, %arg10: memref<1x3x1x3xf32, #tpu.memory_space<vmem>>, %arg11: memref<1x8x1x1xf32, #tpu.memory_space<vmem>>) attributes {dimension_semantics = [#tpu.dimension_semantics<parallel>], iteration_bounds = array<i64: 2>, scalar_prefetch = 0 : i64, scratch_operands = 0 : i64, tpu.core_type = #tpu.core_type<tc>, window_params = [{transform_indices = @transform_0, window_bounds = array<i64: 1, 32, 8, 32>}, {pipeline_mode = #tpu.pipeline_mode<synchronous>, transform_indices = @transform_1, window_bounds = array<i64: 8, 128>}, {pipeline_mode = #tpu.pipeline_mode<synchronous>, transform_indices = @transform_2, window_bounds = array<i64: 16, 128>}, {pipeline_mode = #tpu.pipeline_mode<synchronous>, transform_indices = @transform_3, window_bounds = array<i64: 32, 256>}, {pipeline_mode = #tpu.pipeline_mode<synchronous>, transform_indices = @transform_4, window_bounds = array<i64: 32, 64>}, {pipeline_mode = #tpu.pipeline_mode<synchronous>, transform_indices = @transform_5, window_bounds = array<i64: 16, 32>}, {pipeline_mode = #tpu.pipeline_mode<synchronous>, transform_indices = @transform_6, window_bounds = array<i64: 8, 16>}, {pipeline_mode = #tpu.pipeline_mode<synchronous>, transform_indices = @transform_7, window_bounds = array<i64: 4, 1, 32, 1>}, {pipeline_mode = #tpu.pipeline_mode<synchronous>, transform_indices = @transform_8, window_bounds = array<i64: 8, 4, 32, 4>}, {transform_indices = @transform_9, window_bounds = array<i64: 1, 3, 1, 3>}, {transform_indices = @transform_10, window_bounds = array<i64: 1, 8, 1, 1>}]} {
    %c0 = arith.constant 0 : index
    %c0_0 = arith.constant 0 : index
    %c0_1 = arith.constant 0 : index
    %c0_2 = arith.constant 0 : index
    %0 = vector.load %arg1[%c0, %c0_0, %c0_1, %c0_2] : memref<1x32x8x32xf32, #tpu.memory_space<vmem>>, vector<1x32x8x32xf32>
    %1 = vector.shape_cast %0 : vector<1x32x8x32xf32> to vector<32x8x32xf32>
    %c0_3 = arith.constant 0 : index
    %c0_4 = arith.constant 0 : index
    %2 = vector.load %arg2[%c0_3, %c0_4] : memref<8x128xbf16, #tpu.memory_space<vmem>>, vector<8x128xbf16>
    %c0_5 = arith.constant 0 : index
    %c0_6 = arith.constant 0 : index
    %3 = vector.load %arg5[%c0_5, %c0_6] : memref<32x64xbf16, #tpu.memory_space<vmem>>, vector<32x64xbf16>
    %4 = vector.extract_strided_slice %1 {offsets = [1, 0, 0], sizes = [1, 8, 32], strides = [1, 1, 1]} : vector<32x8x32xf32> to vector<1x8x32xf32>
    %5 = vector.extract_strided_slice %1 {offsets = [30, 0, 0], sizes = [1, 8, 32], strides = [1, 1, 1]} : vector<32x8x32xf32> to vector<1x8x32xf32>
    %6 = tpu.concatenate %4, %1, %5 in 0 : vector<1x8x32xf32>, vector<32x8x32xf32>, vector<1x8x32xf32> -> vector<34x8x32xf32>
    %7 = vector.shape_cast %6 : vector<34x8x32xf32> to vector<17x2x8x32xf32>
    %8 = vector.extract_strided_slice %7 {offsets = [0, 0, 0, 0], sizes = [16, 1, 8, 32], strides = [1, 1, 1, 1]} : vector<17x2x8x32xf32> to vector<16x1x8x32xf32>
    %9 = vector.shape_cast %8 : vector<16x1x8x32xf32> to vector<16x8x32xf32>
    %10 = vector.extract_strided_slice %7 {offsets = [0, 1, 0, 0], sizes = [16, 1, 8, 32], strides = [1, 1, 1, 1]} : vector<17x2x8x32xf32> to vector<16x1x8x32xf32>
    %11 = vector.shape_cast %10 : vector<16x1x8x32xf32> to vector<16x8x32xf32>
    %12 = vector.extract_strided_slice %7 {offsets = [1, 0, 0, 0], sizes = [16, 1, 8, 32], strides = [1, 1, 1, 1]} : vector<17x2x8x32xf32> to vector<16x1x8x32xf32>
    %13 = vector.shape_cast %12 : vector<16x1x8x32xf32> to vector<16x8x32xf32>
    %14 = vector.extract_strided_slice %7 {offsets = [1, 1, 0, 0], sizes = [16, 1, 8, 32], strides = [1, 1, 1, 1]} : vector<17x2x8x32xf32> to vector<16x1x8x32xf32>
    %15 = vector.shape_cast %14 : vector<16x1x8x32xf32> to vector<16x8x32xf32>
    %16 = tpu.concatenate %9, %11, %13, %15 in 1 : vector<16x8x32xf32>, vector<16x8x32xf32>, vector<16x8x32xf32>, vector<16x8x32xf32> -> vector<16x32x32xf32>
    %17 = vector.shape_cast %3 : vector<32x64xbf16> to vector<1x32x64xbf16>
    %18 = vector.broadcast %17 : vector<1x32x64xbf16> to vector<16x32x64xbf16>
    %19 = arith.truncf %16 : vector<16x32x32xf32> to vector<16x32x32xbf16>
    "tpu.trace_start"() <{level = 10 : i32, message = "akw,awm->akm"}> : () -> ()
    %cst = arith.constant dense<0.000000e+00> : vector<16x32x64xf32>
    %20 = tpu.matmul %19, %18, %cst {dimension_numbers = #tpu.dot_dimension_numbers<[2], [1], [1], [2], [0, 0, 0, 1, 1, 2], [0], [0]>} : vector<16x32x32xbf16>, vector<16x32x64xbf16>, vector<16x32x64xf32> -> vector<16x32x64xf32>
    "tpu.trace_stop"() : () -> ()
    %21 = vector.extract_strided_slice %20 {offsets = [0, 0, 0], sizes = [16, 32, 16], strides = [1, 1, 1]} : vector<16x32x64xf32> to vector<16x32x16xf32>
    %22 = vector.extract_strided_slice %20 {offsets = [0, 0, 16], sizes = [16, 32, 16], strides = [1, 1, 1]} : vector<16x32x64xf32> to vector<16x32x16xf32>
    %23 = vector.extract_strided_slice %20 {offsets = [0, 0, 32], sizes = [16, 32, 16], strides = [1, 1, 1]} : vector<16x32x64xf32> to vector<16x32x16xf32>
    %24 = vector.extract_strided_slice %20 {offsets = [0, 0, 48], sizes = [16, 32, 16], strides = [1, 1, 1]} : vector<16x32x64xf32> to vector<16x32x16xf32>
    %25 = tpu.concatenate %21, %22, %23, %24 in 1 : vector<16x32x16xf32>, vector<16x32x16xf32>, vector<16x32x16xf32>, vector<16x32x16xf32> -> vector<16x128x16xf32>
    %26 = vector.shape_cast %2 : vector<8x128xbf16> to vector<1x8x128xbf16>
    %27 = vector.broadcast %26 : vector<1x8x128xbf16> to vector<16x8x128xbf16>
    %28 = arith.truncf %25 : vector<16x128x16xf32> to vector<16x128x16xbf16>
    "tpu.trace_start"() <{level = 10 : i32, message = "aok,akb->aob"}> : () -> ()
    %cst_7 = arith.constant dense<0.000000e+00> : vector<16x8x16xf32>
    %29 = tpu.matmul %27, %28, %cst_7 {dimension_numbers = #tpu.dot_dimension_numbers<[2], [1], [1], [2], [0, 0, 0, 1, 1, 2], [0], [0]>} : vector<16x8x128xbf16>, vector<16x128x16xbf16>, vector<16x8x16xf32> -> vector<16x8x16xf32>
    "tpu.trace_stop"() : () -> ()
    %cst_8 = arith.constant dense<0.000000e+00> : vector<16x8xf32>
    %30 = vector.multi_reduction <add>, %29, %cst_8 [2] : vector<16x8x16xf32> to vector<16x8xf32>
    %31 = vector.shape_cast %30 : vector<16x8xf32> to vector<16x8x1xf32>
    %cst_9 = arith.constant dense<0.000000e+00> : vector<8x1xf32>
    %32 = vector.multi_reduction <add>, %31, %cst_9 [0] : vector<16x8x1xf32> to vector<8x1xf32>
    %33 = vector.shape_cast %32 : vector<8x1xf32> to vector<1x8x1xf32>
    %cst_10 = arith.constant 2.560000e+02 : f32
    %34 = vector.broadcast %cst_10 : f32 to vector<1x8x1xf32>
    %35 = arith.divf %33, %34 : vector<1x8x1xf32>
    %36 = vector.broadcast %35 : vector<1x8x1xf32> to vector<16x8x16xf32>
    %37 = arith.subf %29, %36 : vector<16x8x16xf32>
    %38 = arith.mulf %37, %37 : vector<16x8x16xf32>
    %cst_11 = arith.constant dense<0.000000e+00> : vector<16x8xf32>
    %39 = vector.multi_reduction <add>, %38, %cst_11 [2] : vector<16x8x16xf32> to vector<16x8xf32>
    %40 = vector.shape_cast %39 : vector<16x8xf32> to vector<16x8x1xf32>
    %cst_12 = arith.constant dense<0.000000e+00> : vector<8x1xf32>
    %41 = vector.multi_reduction <add>, %40, %cst_12 [0] : vector<16x8x1xf32> to vector<8x1xf32>
    %42 = vector.shape_cast %41 : vector<8x1xf32> to vector<1x8x1xf32>
    %cst_13 = arith.constant 2.560000e+02 : f32
    %43 = vector.broadcast %cst_13 : f32 to vector<1x8x1xf32>
    %44 = arith.divf %42, %43 : vector<1x8x1xf32>
    %cst_14 = arith.constant 9.99999974E-6 : f32
    %45 = vector.broadcast %cst_14 : f32 to vector<1x8x1xf32>
    %46 = arith.addf %44, %45 : vector<1x8x1xf32>
    %47 = math.rsqrt %46 : vector<1x8x1xf32>
    %48 = vector.broadcast %47 : vector<1x8x1xf32> to vector<16x8x16xf32>
    %49 = arith.mulf %37, %48 : vector<16x8x16xf32>
    %cst_15 = arith.constant 2.000000e-01 : f32
    %50 = vector.broadcast %cst_15 : f32 to vector<16x8x16xf32>
    %51 = arith.mulf %50, %49 : vector<16x8x16xf32>
    %52 = arith.maximumf %49, %51 : vector<16x8x16xf32>
    %c0_16 = arith.constant 0 : index
    %c0_17 = arith.constant 0 : index
    %53 = vector.load %arg3[%c0_16, %c0_17] : memref<16x128xbf16, #tpu.memory_space<vmem>>, vector<16x128xbf16>
    %c0_18 = arith.constant 0 : index
    %c0_19 = arith.constant 0 : index
    %54 = vector.load %arg6[%c0_18, %c0_19] : memref<16x32xbf16, #tpu.memory_space<vmem>>, vector<16x32xbf16>
    %55 = vector.extract_strided_slice %52 {offsets = [1, 0, 0], sizes = [1, 8, 16], strides = [1, 1, 1]} : vector<16x8x16xf32> to vector<1x8x16xf32>
    %56 = vector.extract_strided_slice %52 {offsets = [14, 0, 0], sizes = [1, 8, 16], strides = [1, 1, 1]} : vector<16x8x16xf32> to vector<1x8x16xf32>
    %57 = tpu.concatenate %55, %52, %56 in 0 : vector<1x8x16xf32>, vector<16x8x16xf32>, vector<1x8x16xf32> -> vector<18x8x16xf32>
    %58 = vector.shape_cast %57 : vector<18x8x16xf32> to vector<9x2x8x16xf32>
    %59 = vector.extract_strided_slice %58 {offsets = [0, 0, 0, 0], sizes = [8, 1, 8, 16], strides = [1, 1, 1, 1]} : vector<9x2x8x16xf32> to vector<8x1x8x16xf32>
    %60 = vector.shape_cast %59 : vector<8x1x8x16xf32> to vector<8x8x16xf32>
    %61 = vector.extract_strided_slice %58 {offsets = [0, 1, 0, 0], sizes = [8, 1, 8, 16], strides = [1, 1, 1, 1]} : vector<9x2x8x16xf32> to vector<8x1x8x16xf32>
    %62 = vector.shape_cast %61 : vector<8x1x8x16xf32> to vector<8x8x16xf32>
    %63 = vector.extract_strided_slice %58 {offsets = [1, 0, 0, 0], sizes = [8, 1, 8, 16], strides = [1, 1, 1, 1]} : vector<9x2x8x16xf32> to vector<8x1x8x16xf32>
    %64 = vector.shape_cast %63 : vector<8x1x8x16xf32> to vector<8x8x16xf32>
    %65 = vector.extract_strided_slice %58 {offsets = [1, 1, 0, 0], sizes = [8, 1, 8, 16], strides = [1, 1, 1, 1]} : vector<9x2x8x16xf32> to vector<8x1x8x16xf32>
    %66 = vector.shape_cast %65 : vector<8x1x8x16xf32> to vector<8x8x16xf32>
    %67 = tpu.concatenate %60, %62, %64, %66 in 1 : vector<8x8x16xf32>, vector<8x8x16xf32>, vector<8x8x16xf32>, vector<8x8x16xf32> -> vector<8x32x16xf32>
    %68 = vector.shape_cast %54 : vector<16x32xbf16> to vector<1x16x32xbf16>
    %69 = vector.broadcast %68 : vector<1x16x32xbf16> to vector<8x16x32xbf16>
    %70 = arith.truncf %67 : vector<8x32x16xf32> to vector<8x32x16xbf16>
    "tpu.trace_start"() <{level = 10 : i32, message = "akw,awm->akm"}> : () -> ()
    %cst_20 = arith.constant dense<0.000000e+00> : vector<8x32x32xf32>
    %71 = tpu.matmul %70, %69, %cst_20 {dimension_numbers = #tpu.dot_dimension_numbers<[2], [1], [1], [2], [0, 0, 0, 1, 1, 2], [0], [0]>} : vector<8x32x16xbf16>, vector<8x16x32xbf16>, vector<8x32x32xf32> -> vector<8x32x32xf32>
    "tpu.trace_stop"() : () -> ()
    %72 = vector.extract_strided_slice %71 {offsets = [0, 0, 0], sizes = [8, 32, 8], strides = [1, 1, 1]} : vector<8x32x32xf32> to vector<8x32x8xf32>
    %73 = vector.extract_strided_slice %71 {offsets = [0, 0, 8], sizes = [8, 32, 8], strides = [1, 1, 1]} : vector<8x32x32xf32> to vector<8x32x8xf32>
    %74 = vector.extract_strided_slice %71 {offsets = [0, 0, 16], sizes = [8, 32, 8], strides = [1, 1, 1]} : vector<8x32x32xf32> to vector<8x32x8xf32>
    %75 = vector.extract_strided_slice %71 {offsets = [0, 0, 24], sizes = [8, 32, 8], strides = [1, 1, 1]} : vector<8x32x32xf32> to vector<8x32x8xf32>
    %76 = tpu.concatenate %72, %73, %74, %75 in 1 : vector<8x32x8xf32>, vector<8x32x8xf32>, vector<8x32x8xf32>, vector<8x32x8xf32> -> vector<8x128x8xf32>
    %77 = vector.shape_cast %53 : vector<16x128xbf16> to vector<1x16x128xbf16>
    %78 = vector.broadcast %77 : vector<1x16x128xbf16> to vector<8x16x128xbf16>
    %79 = arith.truncf %76 : vector<8x128x8xf32> to vector<8x128x8xbf16>
    "tpu.trace_start"() <{level = 10 : i32, message = "aok,akb->aob"}> : () -> ()
    %cst_21 = arith.constant dense<0.000000e+00> : vector<8x16x8xf32>
    %80 = tpu.matmul %78, %79, %cst_21 {dimension_numbers = #tpu.dot_dimension_numbers<[2], [1], [1], [2], [0, 0, 0, 1, 1, 2], [0], [0]>} : vector<8x16x128xbf16>, vector<8x128x8xbf16>, vector<8x16x8xf32> -> vector<8x16x8xf32>
    "tpu.trace_stop"() : () -> ()
    %cst_22 = arith.constant dense<0.000000e+00> : vector<8x16xf32>
    %81 = vector.multi_reduction <add>, %80, %cst_22 [2] : vector<8x16x8xf32> to vector<8x16xf32>
    %82 = vector.shape_cast %81 : vector<8x16xf32> to vector<8x16x1xf32>
    %cst_23 = arith.constant dense<0.000000e+00> : vector<16x1xf32>
    %83 = vector.multi_reduction <add>, %82, %cst_23 [0] : vector<8x16x1xf32> to vector<16x1xf32>
    %84 = vector.shape_cast %83 : vector<16x1xf32> to vector<1x16x1xf32>
    %cst_24 = arith.constant 6.400000e+01 : f32
    %85 = vector.broadcast %cst_24 : f32 to vector<1x16x1xf32>
    %86 = arith.divf %84, %85 : vector<1x16x1xf32>
    %87 = vector.broadcast %86 : vector<1x16x1xf32> to vector<8x16x8xf32>
    %88 = arith.subf %80, %87 : vector<8x16x8xf32>
    %89 = arith.mulf %88, %88 : vector<8x16x8xf32>
    %cst_25 = arith.constant dense<0.000000e+00> : vector<8x16xf32>
    %90 = vector.multi_reduction <add>, %89, %cst_25 [2] : vector<8x16x8xf32> to vector<8x16xf32>
    %91 = vector.shape_cast %90 : vector<8x16xf32> to vector<8x16x1xf32>
    %cst_26 = arith.constant dense<0.000000e+00> : vector<16x1xf32>
    %92 = vector.multi_reduction <add>, %91, %cst_26 [0] : vector<8x16x1xf32> to vector<16x1xf32>
    %93 = vector.shape_cast %92 : vector<16x1xf32> to vector<1x16x1xf32>
    %cst_27 = arith.constant 6.400000e+01 : f32
    %94 = vector.broadcast %cst_27 : f32 to vector<1x16x1xf32>
    %95 = arith.divf %93, %94 : vector<1x16x1xf32>
    %cst_28 = arith.constant 9.99999974E-6 : f32
    %96 = vector.broadcast %cst_28 : f32 to vector<1x16x1xf32>
    %97 = arith.addf %95, %96 : vector<1x16x1xf32>
    %98 = math.rsqrt %97 : vector<1x16x1xf32>
    %99 = vector.broadcast %98 : vector<1x16x1xf32> to vector<8x16x8xf32>
    %100 = arith.mulf %88, %99 : vector<8x16x8xf32>
    %cst_29 = arith.constant 2.000000e-01 : f32
    %101 = vector.broadcast %cst_29 : f32 to vector<8x16x8xf32>
    %102 = arith.mulf %101, %100 : vector<8x16x8xf32>
    %103 = arith.maximumf %100, %102 : vector<8x16x8xf32>
    %c0_30 = arith.constant 0 : index
    %c0_31 = arith.constant 0 : index
    %104 = vector.load %arg4[%c0_30, %c0_31] : memref<32x256xbf16, #tpu.memory_space<vmem>>, vector<32x256xbf16>
    %c0_32 = arith.constant 0 : index
    %c0_33 = arith.constant 0 : index
    %105 = vector.load %arg7[%c0_32, %c0_33] : memref<8x16xbf16, #tpu.memory_space<vmem>>, vector<8x16xbf16>
    %106 = vector.extract_strided_slice %103 {offsets = [1, 0, 0], sizes = [1, 16, 8], strides = [1, 1, 1]} : vector<8x16x8xf32> to vector<1x16x8xf32>
    %107 = vector.extract_strided_slice %103 {offsets = [6, 0, 0], sizes = [1, 16, 8], strides = [1, 1, 1]} : vector<8x16x8xf32> to vector<1x16x8xf32>
    %108 = tpu.concatenate %106, %103, %107 in 0 : vector<1x16x8xf32>, vector<8x16x8xf32>, vector<1x16x8xf32> -> vector<10x16x8xf32>
    %109 = vector.shape_cast %108 : vector<10x16x8xf32> to vector<5x2x16x8xf32>
    %110 = vector.extract_strided_slice %109 {offsets = [0, 0, 0, 0], sizes = [4, 1, 16, 8], strides = [1, 1, 1, 1]} : vector<5x2x16x8xf32> to vector<4x1x16x8xf32>
    %111 = vector.shape_cast %110 : vector<4x1x16x8xf32> to vector<4x16x8xf32>
    %112 = vector.extract_strided_slice %109 {offsets = [0, 1, 0, 0], sizes = [4, 1, 16, 8], strides = [1, 1, 1, 1]} : vector<5x2x16x8xf32> to vector<4x1x16x8xf32>
    %113 = vector.shape_cast %112 : vector<4x1x16x8xf32> to vector<4x16x8xf32>
    %114 = vector.extract_strided_slice %109 {offsets = [1, 0, 0, 0], sizes = [4, 1, 16, 8], strides = [1, 1, 1, 1]} : vector<5x2x16x8xf32> to vector<4x1x16x8xf32>
    %115 = vector.shape_cast %114 : vector<4x1x16x8xf32> to vector<4x16x8xf32>
    %116 = vector.extract_strided_slice %109 {offsets = [1, 1, 0, 0], sizes = [4, 1, 16, 8], strides = [1, 1, 1, 1]} : vector<5x2x16x8xf32> to vector<4x1x16x8xf32>
    %117 = vector.shape_cast %116 : vector<4x1x16x8xf32> to vector<4x16x8xf32>
    %118 = tpu.concatenate %111, %113, %115, %117 in 1 : vector<4x16x8xf32>, vector<4x16x8xf32>, vector<4x16x8xf32>, vector<4x16x8xf32> -> vector<4x64x8xf32>
    %119 = vector.shape_cast %105 : vector<8x16xbf16> to vector<1x8x16xbf16>
    %120 = vector.broadcast %119 : vector<1x8x16xbf16> to vector<4x8x16xbf16>
    %121 = arith.truncf %118 : vector<4x64x8xf32> to vector<4x64x8xbf16>
    "tpu.trace_start"() <{level = 10 : i32, message = "akw,awm->akm"}> : () -> ()
    %cst_34 = arith.constant dense<0.000000e+00> : vector<4x64x16xf32>
    %122 = tpu.matmul %121, %120, %cst_34 {dimension_numbers = #tpu.dot_dimension_numbers<[2], [1], [1], [2], [0, 0, 0, 1, 1, 2], [0], [0]>} : vector<4x64x8xbf16>, vector<4x8x16xbf16>, vector<4x64x16xf32> -> vector<4x64x16xf32>
    "tpu.trace_stop"() : () -> ()
    %123 = vector.extract_strided_slice %122 {offsets = [0, 0, 0], sizes = [4, 64, 4], strides = [1, 1, 1]} : vector<4x64x16xf32> to vector<4x64x4xf32>
    %124 = vector.extract_strided_slice %122 {offsets = [0, 0, 4], sizes = [4, 64, 4], strides = [1, 1, 1]} : vector<4x64x16xf32> to vector<4x64x4xf32>
    %125 = vector.extract_strided_slice %122 {offsets = [0, 0, 8], sizes = [4, 64, 4], strides = [1, 1, 1]} : vector<4x64x16xf32> to vector<4x64x4xf32>
    %126 = vector.extract_strided_slice %122 {offsets = [0, 0, 12], sizes = [4, 64, 4], strides = [1, 1, 1]} : vector<4x64x16xf32> to vector<4x64x4xf32>
    %127 = tpu.concatenate %123, %124, %125, %126 in 1 : vector<4x64x4xf32>, vector<4x64x4xf32>, vector<4x64x4xf32>, vector<4x64x4xf32> -> vector<4x256x4xf32>
    %128 = vector.shape_cast %104 : vector<32x256xbf16> to vector<1x32x256xbf16>
    %129 = vector.broadcast %128 : vector<1x32x256xbf16> to vector<4x32x256xbf16>
    %130 = arith.truncf %127 : vector<4x256x4xf32> to vector<4x256x4xbf16>
    "tpu.trace_start"() <{level = 10 : i32, message = "aok,akb->aob"}> : () -> ()
    %cst_35 = arith.constant dense<0.000000e+00> : vector<4x32x4xf32>
    %131 = tpu.matmul %129, %130, %cst_35 {dimension_numbers = #tpu.dot_dimension_numbers<[2], [1], [1], [2], [0, 0, 0, 1, 1, 2], [0], [0]>} : vector<4x32x256xbf16>, vector<4x256x4xbf16>, vector<4x32x4xf32> -> vector<4x32x4xf32>
    "tpu.trace_stop"() : () -> ()
    %cst_36 = arith.constant dense<0.000000e+00> : vector<4x32xf32>
    %132 = vector.multi_reduction <add>, %131, %cst_36 [2] : vector<4x32x4xf32> to vector<4x32xf32>
    %133 = vector.shape_cast %132 : vector<4x32xf32> to vector<4x32x1xf32>
    %cst_37 = arith.constant dense<0.000000e+00> : vector<32x1xf32>
    %134 = vector.multi_reduction <add>, %133, %cst_37 [0] : vector<4x32x1xf32> to vector<32x1xf32>
    %135 = vector.shape_cast %134 : vector<32x1xf32> to vector<1x32x1xf32>
    %cst_38 = arith.constant 1.600000e+01 : f32
    %136 = vector.broadcast %cst_38 : f32 to vector<1x32x1xf32>
    %137 = arith.divf %135, %136 : vector<1x32x1xf32>
    %138 = vector.broadcast %137 : vector<1x32x1xf32> to vector<4x32x4xf32>
    %139 = arith.subf %131, %138 : vector<4x32x4xf32>
    %140 = arith.mulf %139, %139 : vector<4x32x4xf32>
    %cst_39 = arith.constant dense<0.000000e+00> : vector<4x32xf32>
    %141 = vector.multi_reduction <add>, %140, %cst_39 [2] : vector<4x32x4xf32> to vector<4x32xf32>
    %142 = vector.shape_cast %141 : vector<4x32xf32> to vector<4x32x1xf32>
    %cst_40 = arith.constant dense<0.000000e+00> : vector<32x1xf32>
    %143 = vector.multi_reduction <add>, %142, %cst_40 [0] : vector<4x32x1xf32> to vector<32x1xf32>
    %144 = vector.shape_cast %143 : vector<32x1xf32> to vector<1x32x1xf32>
    %cst_41 = arith.constant 1.600000e+01 : f32
    %145 = vector.broadcast %cst_41 : f32 to vector<1x32x1xf32>
    %146 = arith.divf %144, %145 : vector<1x32x1xf32>
    %cst_42 = arith.constant 9.99999974E-6 : f32
    %147 = vector.broadcast %cst_42 : f32 to vector<1x32x1xf32>
    %148 = arith.addf %146, %147 : vector<1x32x1xf32>
    %149 = math.rsqrt %148 : vector<1x32x1xf32>
    %150 = vector.broadcast %149 : vector<1x32x1xf32> to vector<4x32x4xf32>
    %151 = arith.mulf %139, %150 : vector<4x32x4xf32>
    %cst_43 = arith.constant 2.000000e-01 : f32
    %152 = vector.broadcast %cst_43 : f32 to vector<4x32x4xf32>
    %153 = arith.mulf %152, %151 : vector<4x32x4xf32>
    %154 = arith.maximumf %151, %153 : vector<4x32x4xf32>
    %c0_44 = arith.constant 0 : index
    %c0_45 = arith.constant 0 : index
    %c0_46 = arith.constant 0 : index
    %c0_47 = arith.constant 0 : index
    %155 = vector.load %arg8[%c0_44, %c0_45, %c0_46, %c0_47] : memref<4x1x32x1xf32, #tpu.memory_space<vmem>>, vector<4x1x32x1xf32>
    %cst_48 = arith.constant 0.000000e+00 : f32
    %156 = vector.broadcast %cst_48 : f32 to vector<3x1x3xf32>
    %157 = vector.extract_strided_slice %154 {offsets = [0, 0, 0], sizes = [3, 32, 3], strides = [1, 1, 1]} : vector<4x32x4xf32> to vector<3x32x3xf32>
    %158 = vector.extract_strided_slice %155 {offsets = [0, 0, 0, 0], sizes = [1, 1, 32, 1], strides = [1, 1, 1, 1]} : vector<4x1x32x1xf32> to vector<1x1x32x1xf32>
    %159 = vector.shape_cast %158 : vector<1x1x32x1xf32> to vector<1x32x1xf32>
    %160 = vector.broadcast %159 : vector<1x32x1xf32> to vector<3x32x3xf32>
    %161 = arith.mulf %157, %160 : vector<3x32x3xf32>
    %cst_49 = arith.constant dense<0.000000e+00> : vector<3x3xf32>
    %162 = vector.multi_reduction <add>, %161, %cst_49 [1] : vector<3x32x3xf32> to vector<3x3xf32>
    %163 = vector.shape_cast %162 : vector<3x3xf32> to vector<3x1x3xf32>
    %164 = arith.addf %156, %163 : vector<3x1x3xf32>
    %165 = vector.extract_strided_slice %154 {offsets = [0, 0, 1], sizes = [3, 32, 3], strides = [1, 1, 1]} : vector<4x32x4xf32> to vector<3x32x3xf32>
    %166 = vector.extract_strided_slice %155 {offsets = [1, 0, 0, 0], sizes = [1, 1, 32, 1], strides = [1, 1, 1, 1]} : vector<4x1x32x1xf32> to vector<1x1x32x1xf32>
    %167 = vector.shape_cast %166 : vector<1x1x32x1xf32> to vector<1x32x1xf32>
    %168 = vector.broadcast %167 : vector<1x32x1xf32> to vector<3x32x3xf32>
    %169 = arith.mulf %165, %168 : vector<3x32x3xf32>
    %cst_50 = arith.constant dense<0.000000e+00> : vector<3x3xf32>
    %170 = vector.multi_reduction <add>, %169, %cst_50 [1] : vector<3x32x3xf32> to vector<3x3xf32>
    %171 = vector.shape_cast %170 : vector<3x3xf32> to vector<3x1x3xf32>
    %172 = arith.addf %164, %171 : vector<3x1x3xf32>
    %173 = vector.extract_strided_slice %154 {offsets = [1, 0, 0], sizes = [3, 32, 3], strides = [1, 1, 1]} : vector<4x32x4xf32> to vector<3x32x3xf32>
    %174 = vector.extract_strided_slice %155 {offsets = [2, 0, 0, 0], sizes = [1, 1, 32, 1], strides = [1, 1, 1, 1]} : vector<4x1x32x1xf32> to vector<1x1x32x1xf32>
    %175 = vector.shape_cast %174 : vector<1x1x32x1xf32> to vector<1x32x1xf32>
    %176 = vector.broadcast %175 : vector<1x32x1xf32> to vector<3x32x3xf32>
    %177 = arith.mulf %173, %176 : vector<3x32x3xf32>
    %cst_51 = arith.constant dense<0.000000e+00> : vector<3x3xf32>
    %178 = vector.multi_reduction <add>, %177, %cst_51 [1] : vector<3x32x3xf32> to vector<3x3xf32>
    %179 = vector.shape_cast %178 : vector<3x3xf32> to vector<3x1x3xf32>
    %180 = arith.addf %172, %179 : vector<3x1x3xf32>
    %181 = vector.extract_strided_slice %154 {offsets = [1, 0, 1], sizes = [3, 32, 3], strides = [1, 1, 1]} : vector<4x32x4xf32> to vector<3x32x3xf32>
    %182 = vector.extract_strided_slice %155 {offsets = [3, 0, 0, 0], sizes = [1, 1, 32, 1], strides = [1, 1, 1, 1]} : vector<4x1x32x1xf32> to vector<1x1x32x1xf32>
    %183 = vector.shape_cast %182 : vector<1x1x32x1xf32> to vector<1x32x1xf32>
    %184 = vector.broadcast %183 : vector<1x32x1xf32> to vector<3x32x3xf32>
    %185 = arith.mulf %181, %184 : vector<3x32x3xf32>
    %cst_52 = arith.constant dense<0.000000e+00> : vector<3x3xf32>
    %186 = vector.multi_reduction <add>, %185, %cst_52 [1] : vector<3x32x3xf32> to vector<3x3xf32>
    %187 = vector.shape_cast %186 : vector<3x3xf32> to vector<3x1x3xf32>
    %188 = arith.addf %180, %187 : vector<3x1x3xf32>
    %c0_53 = arith.constant 0 : index
    %c0_54 = arith.constant 0 : index
    %c0_55 = arith.constant 0 : index
    %c0_56 = arith.constant 0 : index
    %189 = vector.load %arg10[%c0_53, %c0_54, %c0_55, %c0_56] : memref<1x3x1x3xf32, #tpu.memory_space<vmem>>, vector<1x3x1x3xf32>
    %190 = vector.shape_cast %189 : vector<1x3x1x3xf32> to vector<3x1x3xf32>
    %191 = vector.shape_cast %188 : vector<3x1x3xf32> to vector<1x3x1x3xf32>
    tpu.vector_store %arg10[%c0_53, %c0_54, %c0_55, %c0_56], %191 {strides = array<i32>} : memref<1x3x1x3xf32, #tpu.memory_space<vmem>>, vector<1x3x1x3xf32>,
    %c0_57 = arith.constant 0 : index
    %c0_58 = arith.constant 0 : index
    %c0_59 = arith.constant 0 : index
    %c0_60 = arith.constant 0 : index
    %192 = vector.load %arg9[%c0_57, %c0_58, %c0_59, %c0_60] : memref<8x4x32x4xf32, #tpu.memory_space<vmem>>, vector<8x4x32x4xf32>
    %193 = vector.shape_cast %154 : vector<4x32x4xf32> to vector<1x4x32x4xf32>
    %194 = vector.broadcast %193 : vector<1x4x32x4xf32> to vector<8x4x32x4xf32>
    %195 = arith.mulf %192, %194 : vector<8x4x32x4xf32>
    %cst_61 = arith.constant dense<0.000000e+00> : vector<8x4x32xf32>
    %196 = vector.multi_reduction <add>, %195, %cst_61 [3] : vector<8x4x32x4xf32> to vector<8x4x32xf32>
    %197 = vector.shape_cast %196 : vector<8x4x32xf32> to vector<8x4x32x1xf32>
    %cst_62 = arith.constant dense<0.000000e+00> : vector<8x4x1xf32>
    %198 = vector.multi_reduction <add>, %197, %cst_62 [2] : vector<8x4x32x1xf32> to vector<8x4x1xf32>
    %199 = vector.shape_cast %198 : vector<8x4x1xf32> to vector<8x4x1x1xf32>
    %cst_63 = arith.constant dense<0.000000e+00> : vector<8x1x1xf32>
    %200 = vector.multi_reduction <add>, %199, %cst_63 [1] : vector<8x4x1x1xf32> to vector<8x1x1xf32>
    %201 = vector.shape_cast %200 : vector<8x1x1xf32> to vector<8x1x1x1xf32>
    %202 = vector.shape_cast %201 : vector<8x1x1x1xf32> to vector<8x1x1xf32>
    %c0_64 = arith.constant 0 : index
    %c0_65 = arith.constant 0 : index
    %c0_66 = arith.constant 0 : index
    %c0_67 = arith.constant 0 : index
    %203 = vector.load %arg11[%c0_64, %c0_65, %c0_66, %c0_67] : memref<1x8x1x1xf32, #tpu.memory_space<vmem>>, vector<1x8x1x1xf32>
    %204 = vector.shape_cast %203 : vector<1x8x1x1xf32> to vector<8x1x1xf32>
    %205 = vector.shape_cast %202 : vector<8x1x1xf32> to vector<1x8x1x1xf32>
    tpu.vector_store %arg11[%c0_64, %c0_65, %c0_66, %c0_67], %205 {strides = array<i32>} : memref<1x8x1x1xf32, #tpu.memory_space<vmem>>, vector<1x8x1x1xf32>,
    return
  }
  func.func @transform_0(%arg0: i32) -> (i32, i32, i32, i32) {
    %c0_i32 = arith.constant 0 : i32
    %c0_i32_0 = arith.constant 0 : i32
    %c0_i32_1 = arith.constant 0 : i32
    %c0_i32_2 = arith.constant 0 : i32
    return %arg0, %c0_i32, %c0_i32_0, %c0_i32_1 : i32, i32, i32, i32
  }
  func.func @transform_1(%arg0: i32) -> (i32, i32) {
    %c0_i32 = arith.constant 0 : i32
    %c0_i32_0 = arith.constant 0 : i32
    %c0_i32_1 = arith.constant 0 : i32
    return %c0_i32, %c0_i32_0 : i32, i32
  }
  func.func @transform_2(%arg0: i32) -> (i32, i32) {
    %c0_i32 = arith.constant 0 : i32
    %c0_i32_0 = arith.constant 0 : i32
    %c0_i32_1 = arith.constant 0 : i32
    return %c0_i32, %c0_i32_0 : i32, i32
  }
  func.func @transform_3(%arg0: i32) -> (i32, i32) {
    %c0_i32 = arith.constant 0 : i32
    %c0_i32_0 = arith.constant 0 : i32
    %c0_i32_1 = arith.constant 0 : i32
    return %c0_i32, %c0_i32_0 : i32, i32
  }
  func.func @transform_4(%arg0: i32) -> (i32, i32) {
    %c0_i32 = arith.constant 0 : i32
    %c0_i32_0 = arith.constant 0 : i32
    %c0_i32_1 = arith.constant 0 : i32
    return %c0_i32, %c0_i32_0 : i32, i32
  }
  func.func @transform_5(%arg0: i32) -> (i32, i32) {
    %c0_i32 = arith.constant 0 : i32
    %c0_i32_0 = arith.constant 0 : i32
    %c0_i32_1 = arith.constant 0 : i32
    return %c0_i32, %c0_i32_0 : i32, i32
  }
  func.func @transform_6(%arg0: i32) -> (i32, i32) {
    %c0_i32 = arith.constant 0 : i32
    %c0_i32_0 = arith.constant 0 : i32
    %c0_i32_1 = arith.constant 0 : i32
    return %c0_i32, %c0_i32_0 : i32, i32
  }
  func.func @transform_7(%arg0: i32) -> (i32, i32, i32, i32) {
    %c0_i32 = arith.constant 0 : i32
    %c0_i32_0 = arith.constant 0 : i32
    %c0_i32_1 = arith.constant 0 : i32
    %c0_i32_2 = arith.constant 0 : i32
    %c0_i32_3 = arith.constant 0 : i32
    return %c0_i32, %c0_i32_0, %c0_i32_1, %c0_i32_2 : i32, i32, i32, i32
  }
  func.func @transform_8(%arg0: i32) -> (i32, i32, i32, i32) {
    %c0_i32 = arith.constant 0 : i32
    %c0_i32_0 = arith.constant 0 : i32
    %c0_i32_1 = arith.constant 0 : i32
    %c0_i32_2 = arith.constant 0 : i32
    %c0_i32_3 = arith.constant 0 : i32
    return %c0_i32, %c0_i32_0, %c0_i32_1, %c0_i32_2 : i32, i32, i32, i32
  }
  func.func @transform_9(%arg0: i32) -> (i32, i32, i32, i32) {
    %c0_i32 = arith.constant 0 : i32
    %c0_i32_0 = arith.constant 0 : i32
    %c0_i32_1 = arith.constant 0 : i32
    %c0_i32_2 = arith.constant 0 : i32
    return %arg0, %c0_i32, %c0_i32_0, %c0_i32_1 : i32, i32, i32, i32
  }
  func.func @transform_10(%arg0: i32) -> (i32, i32, i32, i32) {
    %c0_i32 = arith.constant 0 : i32
    %c0_i32_0 = arith.constant 0 : i32
    %c0_i32_1 = arith.constant 0 : i32
    %c0_i32_2 = arith.constant 0 : i32
    return %arg0, %c0_i32, %c0_i32_0, %c0_i32_1 : i32, i32, i32, i32
  }
}

</mosaic_0001>

<llo_original>
// kernel: forward.1
$region0: #{forward.1}
  #allocation0 [shape = 'u32[]', space=smem, size = 0x4, offset = 0x4, fixed_abs, tag = 'smem constant byte address 0x4 - core index']
  #allocation1 [shape = 'u32[72,128]{1,0:T(1,128)}', space=vmem, size = 0x9000, scoped, tag = 'internal scratch']
  %s0 = inlined_call_operand.vmem [shape: f32[2,32,8,32], index: 0, kind: input, shape index: {}]
  %s1 = inlined_call_operand.vmem [shape: bf16[8,128], index: 1, kind: input, shape index: {}]
  %s2 = inlined_call_operand.vmem [shape: bf16[16,128], index: 2, kind: input, shape index: {}]
  %s3 = inlined_call_operand.vmem [shape: bf16[32,256], index: 3, kind: input, shape index: {}]
  %s4 = inlined_call_operand.vmem [shape: bf16[32,64], index: 4, kind: input, shape index: {}]
  %s5 = inlined_call_operand.vmem [shape: bf16[16,32], index: 5, kind: input, shape index: {}]
  %s6 = inlined_call_operand.vmem [shape: bf16[8,16], index: 6, kind: input, shape index: {}]
  %s7 = inlined_call_operand.vmem [shape: f32[4,1,32,1], index: 7, kind: input, shape index: {}]
  %s8 = inlined_call_operand.vmem [shape: f32[8,4,32,4], index: 8, kind: input, shape index: {}]
  %s9 = inlined_call_operand.vmem [shape: f32[2,3,1,3], index: 9, kind: output, shape index: {0}]
  %s10 = inlined_call_operand.vmem [shape: f32[2,8,1,1], index: 10, kind: output, shape index: {1}]
  %11 = xla_tuple %s9, %s10
  %s12 = sld [smem:[#allocation0]]
  $region77: #{forward.1} parent=0
    _
  %s14 = ssub.s32 1, %s12
  %s15 = scalar_select 0, %s14, %s12
  loop: start=0, step=1, limit=4
  $region2: #{forward.1} parent=0 // loop_pre_header
    _
  $region3: #{forward.1} parent=0 // loop_header
    %s17 = sphi 0, %s21
    %p18 = scmp.ge.s32.totalorder %s17, 4
    %s27 = sphi 0, %s29
    %s30 = sphi 0, %s27
    %s31 = sphi 0, %s30
    %s47 = sphi 0, %s31
    %s51 = sphi 0, %s51
    %s53 = sphi 0, %s51
    %s54 = sphi 0, %s53
    %s68 = sphi 0, %s54
    %s72 = sphi 0, %s72
    %s74 = sphi 0, %s72
    %s75 = sphi 0, %s74
    %s89 = sphi 0, %s75
    %s93 = sphi 0, %s93
    %s95 = sphi 0, %s93
    %s96 = sphi 0, %s95
    %s110 = sphi 0, %s96
    %s114 = sphi 0, %s114
    %s116 = sphi 0, %s114
    %s117 = sphi 0, %s116
    %s131 = sphi 0, %s117
    %s135 = sphi 0, %s135
    %s137 = sphi 0, %s135
    %s138 = sphi 0, %s137
    %s152 = sphi 0, %s138
    %s156 = sphi 0, %s156
    %s158 = sphi 0, %s156
    %s159 = sphi 0, %s158
    %s173 = sphi 0, %s159
    %s177 = sphi 0, %s177
    %s179 = sphi 0, %s177
    %s180 = sphi 0, %s179
    %s194 = sphi 0, %s180
    %s198 = sphi 0, %s198
    %s200 = sphi 0, %s198
    %s201 = sphi 0, %s200
    %s215 = sphi 0, %s201
    %s221 = sphi 0, %s223
    %s224 = sphi 0, %s221
    %s225 = sphi 0, %s224
    %s241 = sphi 0, %s225
    %s247 = sphi 0, %s249
    %s250 = sphi 0, %s247
    %s251 = sphi 0, %s250
    %s267 = sphi 0, %s251
  $region4: #{forward.1} parent=0 // loop_header_branch
    %20 = sbr.rel (%p18) target = $region8
  $region5: #{forward.1} parent=0 // loop_body
    %s22 = ssub.s32 %s17, 1
    %s23 = ssub.s32 %s17, 2
    %s24 = sadd.s32 %s17, 1
    %s25 = ssub.s32 %s17, %s24
    %p26 = scmp.eq.s32.totalorder %s25, 0
    %s28 = sadd.s32 %s27, 1
    %s29 = scalar_select %p26, %s27, %s28
    %p32 = pneg %p26
    %p33 = scmp.eq.s32.totalorder %s17, 1
    %p34 = por %p32, %p33
    %p35 = scmp.ne.s32.totalorder %s27, %s30
    %p36 = scmp.eq.s32.totalorder %s17, 0
    %p37 = por %p35, %p36
    %p38 = scmp.ne.s32.totalorder %s27, %s30
    %p39 = scmp.eq.s32.totalorder %s22, 1
    %p40 = por %p38, %p39
    %p41 = scmp.ne.s32.totalorder %s30, %s31
    %p42 = scmp.eq.s32.totalorder %s22, 0
    %p43 = por %p41, %p42
    %p44 = scmp.ne.s32.totalorder %s30, %s31
    %p45 = scmp.eq.s32.totalorder %s23, 1
    %p46 = por %p44, %p45
    %p48 = scmp.ne.s32.totalorder %s31, %s47
    %p49 = scmp.eq.s32.totalorder %s23, 0
    %p50 = por %p48, %p49
    %s52 = sadd.s32 %s51, 1
    %p55 = scmp.eq.s32.totalorder %s17, 1
    %p56 = scmp.ne.s32.totalorder %s51, %s53
    %p57 = scmp.eq.s32.totalorder %s17, 0
    %p58 = por %p56, %p57
    %p59 = scmp.ne.s32.totalorder %s51, %s53
    %p60 = scmp.eq.s32.totalorder %s22, 1
    %p61 = por %p59, %p60
    %p62 = scmp.ne.s32.totalorder %s53, %s54
    %p63 = scmp.eq.s32.totalorder %s22, 0
    %p64 = por %p62, %p63
    %p65 = scmp.ne.s32.totalorder %s53, %s54
    %p66 = scmp.eq.s32.totalorder %s23, 1
    %p67 = por %p65, %p66
    %p69 = scmp.ne.s32.totalorder %s54, %s68
    %p70 = scmp.eq.s32.totalorder %s23, 0
    %p71 = por %p69, %p70
    %s73 = sadd.s32 %s72, 1
    %p76 = scmp.eq.s32.totalorder %s17, 1
    %p77 = scmp.ne.s32.totalorder %s72, %s74
    %p78 = scmp.eq.s32.totalorder %s17, 0
    %p79 = por %p77, %p78
    %p80 = scmp.ne.s32.totalorder %s72, %s74
    %p81 = scmp.eq.s32.totalorder %s22, 1
    %p82 = por %p80, %p81
    %p83 = scmp.ne.s32.totalorder %s74, %s75
    %p84 = scmp.eq.s32.totalorder %s22, 0
    %p85 = por %p83, %p84
    %p86 = scmp.ne.s32.totalorder %s74, %s75
    %p87 = scmp.eq.s32.totalorder %s23, 1
    %p88 = por %p86, %p87
    %p90 = scmp.ne.s32.totalorder %s75, %s89
    %p91 = scmp.eq.s32.totalorder %s23, 0
    %p92 = por %p90, %p91
    %s94 = sadd.s32 %s93, 1
    %p97 = scmp.eq.s32.totalorder %s17, 1
    %p98 = scmp.ne.s32.totalorder %s93, %s95
    %p99 = scmp.eq.s32.totalorder %s17, 0
    %p100 = por %p98, %p99
    %p101 = scmp.ne.s32.totalorder %s93, %s95
    %p102 = scmp.eq.s32.totalorder %s22, 1
    %p103 = por %p101, %p102
    %p104 = scmp.ne.s32.totalorder %s95, %s96
    %p105 = scmp.eq.s32.totalorder %s22, 0
    %p106 = por %p104, %p105
    %p107 = scmp.ne.s32.totalorder %s95, %s96
    %p108 = scmp.eq.s32.totalorder %s23, 1
    %p109 = por %p107, %p108
    %p111 = scmp.ne.s32.totalorder %s96, %s110
    %p112 = scmp.eq.s32.totalorder %s23, 0
    %p113 = por %p111, %p112
    %s115 = sadd.s32 %s114, 1
    %p118 = scmp.eq.s32.totalorder %s17, 1
    %p119 = scmp.ne.s32.totalorder %s114, %s116
    %p120 = scmp.eq.s32.totalorder %s17, 0
    %p121 = por %p119, %p120
    %p122 = scmp.ne.s32.totalorder %s114, %s116
    %p123 = scmp.eq.s32.totalorder %s22, 1
    %p124 = por %p122, %p123
    %p125 = scmp.ne.s32.totalorder %s116, %s117
    %p126 = scmp.eq.s32.totalorder %s22, 0
    %p127 = por %p125, %p126
    %p128 = scmp.ne.s32.totalorder %s116, %s117
    %p129 = scmp.eq.s32.totalorder %s23, 1
    %p130 = por %p128, %p129
    %p132 = scmp.ne.s32.totalorder %s117, %s131
    %p133 = scmp.eq.s32.totalorder %s23, 0
    %p134 = por %p132, %p133
    %s136 = sadd.s32 %s135, 1
    %p139 = scmp.eq.s32.totalorder %s17, 1
    %p140 = scmp.ne.s32.totalorder %s135, %s137
    %p141 = scmp.eq.s32.totalorder %s17, 0
    %p142 = por %p140, %p141
    %p143 = scmp.ne.s32.totalorder %s135, %s137
    %p144 = scmp.eq.s32.totalorder %s22, 1
    %p145 = por %p143, %p144
    %p146 = scmp.ne.s32.totalorder %s137, %s138
    %p147 = scmp.eq.s32.totalorder %s22, 0
    %p148 = por %p146, %p147
    %p149 = scmp.ne.s32.totalorder %s137, %s138
    %p150 = scmp.eq.s32.totalorder %s23, 1
    %p151 = por %p149, %p150
    %p153 = scmp.ne.s32.totalorder %s138, %s152
    %p154 = scmp.eq.s32.totalorder %s23, 0
    %p155 = por %p153, %p154
    %s157 = sadd.s32 %s156, 1
    %p160 = scmp.eq.s32.totalorder %s17, 1
    %p161 = scmp.ne.s32.totalorder %s156, %s158
    %p162 = scmp.eq.s32.totalorder %s17, 0
    %p163 = por %p161, %p162
    %p164 = scmp.ne.s32.totalorder %s156, %s158
    %p165 = scmp.eq.s32.totalorder %s22, 1
    %p166 = por %p164, %p165
    %p167 = scmp.ne.s32.totalorder %s158, %s159
    %p168 = scmp.eq.s32.totalorder %s22, 0
    %p169 = por %p167, %p168
    %p170 = scmp.ne.s32.totalorder %s158, %s159
    %p171 = scmp.eq.s32.totalorder %s23, 1
    %p172 = por %p170, %p171
    %p174 = scmp.ne.s32.totalorder %s159, %s173
    %p175 = scmp.eq.s32.totalorder %s23, 0
    %p176 = por %p174, %p175
    %s178 = sadd.s32 %s177, 1
    %p181 = scmp.eq.s32.totalorder %s17, 1
    %p182 = scmp.ne.s32.totalorder %s177, %s179
    %p183 = scmp.eq.s32.totalorder %s17, 0
    %p184 = por %p182, %p183
    %p185 = scmp.ne.s32.totalorder %s177, %s179
    %p186 = scmp.eq.s32.totalorder %s22, 1
    %p187 = por %p185, %p186
    %p188 = scmp.ne.s32.totalorder %s179, %s180
    %p189 = scmp.eq.s32.totalorder %s22, 0
    %p190 = por %p188, %p189
    %p191 = scmp.ne.s32.totalorder %s179, %s180
    %p192 = scmp.eq.s32.totalorder %s23, 1
    %p193 = por %p191, %p192
    %p195 = scmp.ne.s32.totalorder %s180, %s194
    %p196 = scmp.eq.s32.totalorder %s23, 0
    %p197 = por %p195, %p196
    %s199 = sadd.s32 %s198, 1
    %p202 = scmp.eq.s32.totalorder %s17, 1
    %p203 = scmp.ne.s32.totalorder %s198, %s200
    %p204 = scmp.eq.s32.totalorder %s17, 0
    %p205 = por %p203, %p204
    %p206 = scmp.ne.s32.totalorder %s198, %s200
    %p207 = scmp.eq.s32.totalorder %s22, 1
    %p208 = por %p206, %p207
    %p209 = scmp.ne.s32.totalorder %s200, %s201
    %p210 = scmp.eq.s32.totalorder %s22, 0
    %p211 = por %p209, %p210
    %p212 = scmp.ne.s32.totalorder %s200, %s201
    %p213 = scmp.eq.s32.totalorder %s23, 1
    %p214 = por %p212, %p213
    %p216 = scmp.ne.s32.totalorder %s201, %s215
    %p217 = scmp.eq.s32.totalorder %s23, 0
    %p218 = por %p216, %p217
    %s219 = ssub.s32 %s17, %s24
    %p220 = scmp.eq.s32.totalorder %s219, 0
    %s222 = sadd.s32 %s221, 1
    %s223 = scalar_select %p220, %s221, %s222
    %p226 = pneg %p220
    %p227 = scmp.eq.s32.totalorder %s17, 1
    %p228 = por %p226, %p227
    %p229 = scmp.ne.s32.totalorder %s221, %s224
    %p230 = scmp.eq.s32.totalorder %s17, 0
    %p231 = por %p229, %p230
    %p232 = scmp.ne.s32.totalorder %s221, %s224
    %p233 = scmp.eq.s32.totalorder %s22, 1
    %p234 = por %p232, %p233
    %p235 = scmp.ne.s32.totalorder %s224, %s225
    %p236 = scmp.eq.s32.totalorder %s22, 0
    %p237 = por %p235, %p236
    %p238 = scmp.ne.s32.totalorder %s224, %s225
    %p239 = scmp.eq.s32.totalorder %s23, 1
    %p240 = por %p238, %p239
    %p242 = scmp.ne.s32.totalorder %s225, %s241
    %p243 = scmp.eq.s32.totalorder %s23, 0
    %p244 = por %p242, %p243
    %s245 = ssub.s32 %s17, %s24
    %p246 = scmp.eq.s32.totalorder %s245, 0
    %s248 = sadd.s32 %s247, 1
    %s249 = scalar_select %p246, %s247, %s248
    %p252 = pneg %p246
    %p253 = scmp.eq.s32.totalorder %s17, 1
    %p254 = por %p252, %p253
    %p255 = scmp.ne.s32.totalorder %s247, %s250
    %p256 = scmp.eq.s32.totalorder %s17, 0
    %p257 = por %p255, %p256
    %p258 = scmp.ne.s32.totalorder %s247, %s250
    %p259 = scmp.eq.s32.totalorder %s22, 1
    %p260 = por %p258, %p259
    %p261 = scmp.ne.s32.totalorder %s250, %s251
    %p262 = scmp.eq.s32.totalorder %s22, 0
    %p263 = por %p261, %p262
    %p264 = scmp.ne.s32.totalorder %s250, %s251
    %p265 = scmp.eq.s32.totalorder %s23, 1
    %p266 = por %p264, %p265
    %p268 = scmp.ne.s32.totalorder %s251, %s267
    %p269 = scmp.eq.s32.totalorder %s23, 0
    %p270 = por %p268, %p269
    %p271 = scmp.le.s32.totalorder 1, %s17
    %p272 = scmp.lt.s32.totalorder %s17, 3
    %p273 = pnand %p271, %p272
    %p274 = pneg %p273
    // Predicated region
    $region9: #{forward.1} parent=5 // pred_check
      _
    $region10: #{forward.1} parent=5 // pred_check_branch
      %276 = sbr.rel (%p273) target = $region12
    $region11: #{forward.1} parent=5 // pred_region
      %s277 = ssub.s32 %s17, 1
      // Predicated region
      $region13: #{forward.1} parent=11 // pred_check
        %p278 = pneg %p64
      $region14: #{forward.1} parent=11 // pred_check_branch
        %280 = sbr.rel (%p278) target = $region16
      $region15: #{forward.1} parent=11 // pred_region
        _
      $region16: #{forward.1} parent=11 // pred_fallthru
        _
      // Predicated region
      $region17: #{forward.1} parent=11 // pred_check
        %p281 = pneg %p85
      $region18: #{forward.1} parent=11 // pred_check_branch
        %283 = sbr.rel (%p281) target = $region20
      $region19: #{forward.1} parent=11 // pred_region
        _
      $region20: #{forward.1} parent=11 // pred_fallthru
        _
      // Predicated region
      $region21: #{forward.1} parent=11 // pred_check
        %p284 = pneg %p106
      $region22: #{forward.1} parent=11 // pred_check_branch
        %286 = sbr.rel (%p284) target = $region24
      $region23: #{forward.1} parent=11 // pred_region
        _
      $region24: #{forward.1} parent=11 // pred_fallthru
        _
      // Predicated region
      $region25: #{forward.1} parent=11 // pred_check
        %p287 = pneg %p127
      $region26: #{forward.1} parent=11 // pred_check_branch
        %289 = sbr.rel (%p287) target = $region28
      $region27: #{forward.1} parent=11 // pred_region
        _
      $region28: #{forward.1} parent=11 // pred_fallthru
        _
      // Predicated region
      $region29: #{forward.1} parent=11 // pred_check
        %p290 = pneg %p148
      $region30: #{forward.1} parent=11 // pred_check_branch
        %292 = sbr.rel (%p290) target = $region32
      $region31: #{forward.1} parent=11 // pred_region
        _
      $region32: #{forward.1} parent=11 // pred_fallthru
        _
      // Predicated region
      $region33: #{forward.1} parent=11 // pred_check
        %p293 = pneg %p169
      $region34: #{forward.1} parent=11 // pred_check_branch
        %295 = sbr.rel (%p293) target = $region36
      $region35: #{forward.1} parent=11 // pred_region
        _
      $region36: #{forward.1} parent=11 // pred_fallthru
        _
      // Predicated region
      $region37: #{forward.1} parent=11 // pred_check
        %p296 = pneg %p190
      $region38: #{forward.1} parent=11 // pred_check_branch
        %298 = sbr.rel (%p296) target = $region40
      $region39: #{forward.1} parent=11 // pred_region
        _
      $region40: #{forward.1} parent=11 // pred_fallthru
        _
      // Predicated region
      $region41: #{forward.1} parent=11 // pred_check
        %p299 = pneg %p211
      $region42: #{forward.1} parent=11 // pred_check_branch
        %301 = sbr.rel (%p299) target = $region44
      $region43: #{forward.1} parent=11 // pred_region
        _
      $region44: #{forward.1} parent=11 // pred_fallthru
        _
    $region12: #{forward.1} parent=5 // pred_fallthru
      _
    %p302 = scmp.lt.s32.totalorder %s17, 2
    // Predicated region
    $region45: #{forward.1} parent=5 // pred_check
      %p303 = pneg %p302
    $region46: #{forward.1} parent=5 // pred_check_branch
      %305 = sbr.rel (%p303) target = $region48
    $region47: #{forward.1} parent=5 // pred_region
      // Predicated region
      $region49: #{forward.1} parent=47 // pred_check
        %p306 = pneg %p37
      $region50: #{forward.1} parent=47 // pred_check_branch
        %308 = sbr.rel (%p306) target = $region52
      $region51: #{forward.1} parent=47 // pred_region
        %p309 = scmp.lt.s32.totalorder %s17, 1
        %s310 = scalar_select %p309, %s17, 1
        %s311 = smul.addr %s310, 32
        %s312 = smul.addr %s311, 8
        %s313 = scalar_lea.vmem %s0, %s312
      $region52: #{forward.1} parent=47 // pred_fallthru
        _
    $region48: #{forward.1} parent=5 // pred_fallthru
      _
    %p314 = scmp.le.s32.totalorder 1, %s17
    %p315 = scmp.lt.s32.totalorder %s17, 3
    %p316 = pnand %p314, %p315
    %p317 = pneg %p316
    // Predicated region
    $region53: #{forward.1} parent=5 // pred_check
      _
    $region54: #{forward.1} parent=5 // pred_check_branch
      %319 = sbr.rel (%p316) target = $region56
    $region55: #{forward.1} parent=5 // pred_region
      %s320 = ssub.s32 %s17, 1
      %p321 = scmp.lt.s32.totalorder %s22, 1
      %s322 = scalar_select %p321, %s22, 1
      %s323 = smul.addr %s322, 32
      %s324 = smul.addr %s323, 8
      %s325 = scalar_lea.vmem %s0, %s324
      %p326 = pneg %p43
      %p327 = pneg %p40
      %p328 = pneg %p64
      %p329 = pneg %p61
      %p330 = pneg %p85
      %p331 = pneg %p82
      %p332 = pneg %p106
      %p333 = pneg %p103
      %p334 = pneg %p127
      %p335 = pneg %p124
      %p336 = pneg %p148
      %p337 = pneg %p145
      %p338 = pneg %p169
      %p339 = pneg %p166
      %p340 = pneg %p190
      %p341 = pneg %p187
      %p342 = pneg %p211
      %p343 = pneg %p208
      %p344 = pneg %p237
      %p345 = pneg %p234
      %p346 = scmp.lt.s32.totalorder %s22, 1
      %s347 = scalar_select %p346, %s22, 1
      %s348 = smul.addr %s347, 3
      %s349 = scalar_lea.vmem %s9, %s348
      %p350 = pneg %p263
      %p351 = pneg %p260
      %p352 = scmp.lt.s32.totalorder %s22, 1
      %s353 = scalar_select %p352, %s22, 1
      %s354 = smul.addr %s353, 8
      %s355 = scalar_lea.vmem %s10, %s354
      %p356 = scmp.lt.s32.totalorder %s22, 1
      %s357 = scalar_select %p356, %s22, 1
      %s358 = smul.addr %s357, 32
      %s359 = smul.addr %s358, 8
      %s360 = scalar_lea.vmem %s0, %s359
      %p361 = scmp.lt.s32.totalorder %s22, 1
      %s362 = scalar_select %p361, %s22, 1
      %s363 = smul.addr %s362, 3
      %s364 = scalar_lea.vmem %s9, %s363
      %p365 = scmp.lt.s32.totalorder %s22, 1
      %s366 = scalar_select %p365, %s22, 1
      %s367 = smul.addr %s366, 8
      %s368 = scalar_lea.vmem %s10, %s367
      %v370 = vld [vmem:[%s360] sm:$0xff]
      %v371 = vld [vmem:[%s360 + $0x8] sm:$0xff]
      %v372 = vld [vmem:[%s360 + $0x10] sm:$0xff]
      %v373 = vld [vmem:[%s360 + $0x18] sm:$0xff]
      %v374 = vld [vmem:[%s360 + $0x20] sm:$0xff]
      %v375 = vld [vmem:[%s360 + $0x28] sm:$0xff]
      %v376 = vld [vmem:[%s360 + $0x30] sm:$0xff]
      %v377 = vld [vmem:[%s360 + $0x38] sm:$0xff]
      %v378 = vld [vmem:[%s360 + $0x40] sm:$0xff]
      %v379 = vld [vmem:[%s360 + $0x48] sm:$0xff]
      %v380 = vld [vmem:[%s360 + $0x50] sm:$0xff]
      %v381 = vld [vmem:[%s360 + $0x58] sm:$0xff]
      %v382 = vld [vmem:[%s360 + $0x60] sm:$0xff]
      %v383 = vld [vmem:[%s360 + $0x68] sm:$0xff]
      %v384 = vld [vmem:[%s360 + $0x70] sm:$0xff]
      %v385 = vld [vmem:[%s360 + $0x78] sm:$0xff]
      %v386 = vld [vmem:[%s360 + $0x80] sm:$0xff]
      %v387 = vld [vmem:[%s360 + $0x88] sm:$0xff]
      %v388 = vld [vmem:[%s360 + $0x90] sm:$0xff]
      %v389 = vld [vmem:[%s360 + $0x98] sm:$0xff]
      %v390 = vld [vmem:[%s360 + $0xa0] sm:$0xff]
      %v391 = vld [vmem:[%s360 + $0xa8] sm:$0xff]
      %v392 = vld [vmem:[%s360 + $0xb0] sm:$0xff]
      %v393 = vld [vmem:[%s360 + $0xb8] sm:$0xff]
      %v394 = vld [vmem:[%s360 + $0xc0] sm:$0xff]
      %v395 = vld [vmem:[%s360 + $0xc8] sm:$0xff]
      %v396 = vld [vmem:[%s360 + $0xd0] sm:$0xff]
      %v397 = vld [vmem:[%s360 + $0xd8] sm:$0xff]
      %v398 = vld [vmem:[%s360 + $0xe0] sm:$0xff]
      %v399 = vld [vmem:[%s360 + $0xe8] sm:$0xff]
      %v400 = vld [vmem:[%s360 + $0xf0] sm:$0xff]
      %v401 = vld [vmem:[%s360 + $0xf8] sm:$0xff]
      %v402 = vld [vmem:[%s1] sm:$0xf]
      %v403 = vld [vmem:[%s4] sm:$0xf]
      %v404 = vld [vmem:[%s4 + $0x4] sm:$0xf]
      %v405 = vld [vmem:[%s4 + $0x8] sm:$0xf]
      %v406 = vld [vmem:[%s4 + $0xc] sm:$0xf]
      %v407 = vpack.c.bf16 %v371, %v371
      %v408 = vpack.c.bf16 %v370, %v370
      %v409 = vpack.c.bf16 %v372, %v372
      %v410 = vpack.c.bf16 %v373, %v373
      %v411 = vpack.c.bf16 %v374, %v374
      %v412 = vpack.c.bf16 %v375, %v375
      %v413 = vpack.c.bf16 %v376, %v376
      %v414 = vpack.c.bf16 %v377, %v377
      %v415 = vpack.c.bf16 %v378, %v378
      %v416 = vpack.c.bf16 %v379, %v379
      %v417 = vpack.c.bf16 %v380, %v380
      %v418 = vpack.c.bf16 %v381, %v381
      %v419 = vpack.c.bf16 %v382, %v382
      %v420 = vpack.c.bf16 %v383, %v383
      %v421 = vpack.c.bf16 %v384, %v384
      %v422 = vpack.c.bf16 %v385, %v385
      %v423 = vpack.c.bf16 %v386, %v386
      %v424 = vpack.c.bf16 %v387, %v387
      %v425 = vpack.c.bf16 %v388, %v388
      %v426 = vpack.c.bf16 %v389, %v389
      %v427 = vpack.c.bf16 %v390, %v390
      %v428 = vpack.c.bf16 %v391, %v391
      %v429 = vpack.c.bf16 %v392, %v392
      %v430 = vpack.c.bf16 %v393, %v393
      %v431 = vpack.c.bf16 %v394, %v394
      %v432 = vpack.c.bf16 %v395, %v395
      %v433 = vpack.c.bf16 %v396, %v396
      %v434 = vpack.c.bf16 %v397, %v397
      %v435 = vpack.c.bf16 %v398, %v398
      %v436 = vpack.c.bf16 %v399, %v399
      %v437 = vpack.c.bf16 %v400, %v400
      %v438 = vpack.c.bf16 %v401, %v401
      %v442 = vunpack.c.l.b16 %v407
      %v443 = vunpack.c.l.b16 %v408
      %v444 = vunpack.c.l.b16 %v409
      %v445 = vpack.c.b16 %v443, %v442
      %v446 = vpack.c.b16 %v444, %v442
      %v451 = vunpack.c.l.b16 %v403
      %v452 = vunpack.c.l.b16 %v404
      %v453 = vunpack.c.l.b16 %v405
      %v454 = vunpack.c.l.b16 %v406
      %v455 = vpack.c.b16 %v452, %v451
      %v456 = vpack.c.b16 %v454, %v453
      %vm459 = vcmask 261120
      %v461 = vsel %vm459, %v445, 0
      %v464 = vsel %vm459, %v446, 0
      %466 = vmatpush.bf16.msra.mxu0 0
      %467 = vmatpush.bf16.msra.mxu0 0
      %468 = vmatpush.bf16.msra.mxu0 0
      %469 = vmatpush.bf16.msra.mxu0 0
      %470 = vmatpush.bf16.msra.mxu0 0
      %471 = vmatpush.bf16.msra.mxu0 0
      %472 = vmatpush.bf16.msra.mxu0 %v456
      %473 = vmatpush.bf16.msra.mxu0 %v455
      %474 = vmatmul.bf16.gmra.mxu0 %v461
      %v475 = vpop.f32.mrf.mxu0
      %v476 = vadd.f32 0.0, %v475
      %v477 = vpop.f32.mrf.mxu0
      %v478 = vadd.f32 0.0, %v477
      %479 = vmatmul.bf16.gmra.mxu0 %v464
      %v480 = vpop.f32.mrf.mxu0
      %v481 = vadd.f32 0.0, %v480
      %v482 = vpop.f32.mrf.mxu0
      %v483 = vadd.f32 0.0, %v482
      %484 = vdwg.mxu0
      %v487 = vunpack.c.l.b16 %v410
      %v488 = vunpack.c.l.b16 %v411
      %v489 = vpack.c.b16 %v488, %v487
      %v491 = vsel %vm459, %v489, 0
      %493 = vmatpush.bf16.msra.mxu0 0
      %494 = vmatpush.bf16.msra.mxu0 0
      %495 = vmatpush.bf16.msra.mxu0 0
      %496 = vmatpush.bf16.msra.mxu0 0
      %497 = vmatpush.bf16.msra.mxu0 0
      %498 = vmatpush.bf16.msra.mxu0 0
      %499 = vmatpush.bf16.msra.mxu0 %v456
      %500 = vmatpush.bf16.msra.mxu0 %v455
      %501 = vmatmul.bf16.gmra.mxu0 %v464
      %v502 = vpop.f32.mrf.mxu0
      %v503 = vadd.f32 0.0, %v502
      %v504 = vpop.f32.mrf.mxu0
      %v505 = vadd.f32 0.0, %v504
      %506 = vmatmul.bf16.gmra.mxu0 %v491
      %v507 = vpop.f32.mrf.mxu0
      %v508 = vadd.f32 0.0, %v507
      %v509 = vpop.f32.mrf.mxu0
      %v510 = vadd.f32 0.0, %v509
      %511 = vdwg.mxu0
      %v514 = vunpack.c.l.b16 %v412
      %v515 = vunpack.c.l.b16 %v413
      %v516 = vpack.c.b16 %v515, %v514
      %v518 = vsel %vm459, %v516, 0
      %520 = vmatpush.bf16.msra.mxu0 0
      %521 = vmatpush.bf16.msra.mxu0 0
      %522 = vmatpush.bf16.msra.mxu0 0
      %523 = vmatpush.bf16.msra.mxu0 0
      %524 = vmatpush.bf16.msra.mxu0 0
      %525 = vmatpush.bf16.msra.mxu0 0
      %526 = vmatpush.bf16.msra.mxu0 %v456
      %527 = vmatpush.bf16.msra.mxu0 %v455
      %528 = vmatmul.bf16.gmra.mxu0 %v491
      %v529 = vpop.f32.mrf.mxu0
      %v530 = vadd.f32 0.0, %v529
      %v531 = vpop.f32.mrf.mxu0
      %v532 = vadd.f32 0.0, %v531
      %533 = vmatmul.bf16.gmra.mxu0 %v518
      %v534 = vpop.f32.mrf.mxu0
      %v535 = vadd.f32 0.0, %v534
      %v536 = vpop.f32.mrf.mxu0
      %v537 = vadd.f32 0.0, %v536
      %538 = vdwg.mxu0
      %v541 = vunpack.c.l.b16 %v414
      %v542 = vunpack.c.l.b16 %v415
      %v543 = vpack.c.b16 %v542, %v541
      %v545 = vsel %vm459, %v543, 0
      %547 = vmatpush.bf16.msra.mxu0 0
      %548 = vmatpush.bf16.msra.mxu0 0
      %549 = vmatpush.bf16.msra.mxu0 0
      %550 = vmatpush.bf16.msra.mxu0 0
      %551 = vmatpush.bf16.msra.mxu0 0
      %552 = vmatpush.bf16.msra.mxu0 0
      %553 = vmatpush.bf16.msra.mxu0 %v456
      %554 = vmatpush.bf16.msra.mxu0 %v455
      %555 = vmatmul.bf16.gmra.mxu0 %v518
      %v556 = vpop.f32.mrf.mxu0
      %v557 = vadd.f32 0.0, %v556
      %v558 = vpop.f32.mrf.mxu0
      %v559 = vadd.f32 0.0, %v558
      %560 = vmatmul.bf16.gmra.mxu0 %v545
      %v561 = vpop.f32.mrf.mxu0
      %v562 = vadd.f32 0.0, %v561
      %v563 = vpop.f32.mrf.mxu0
      %v564 = vadd.f32 0.0, %v563
      %565 = vdwg.mxu0
      %v568 = vunpack.c.l.b16 %v416
      %v569 = vunpack.c.l.b16 %v417
      %v570 = vpack.c.b16 %v569, %v568
      %v572 = vsel %vm459, %v570, 0
      %574 = vmatpush.bf16.msra.mxu0 0
      %575 = vmatpush.bf16.msra.mxu0 0
      %576 = vmatpush.bf16.msra.mxu0 0
      %577 = vmatpush.bf16.msra.mxu0 0
      %578 = vmatpush.bf16.msra.mxu0 0
      %579 = vmatpush.bf16.msra.mxu0 0
      %580 = vmatpush.bf16.msra.mxu0 %v456
      %581 = vmatpush.bf16.msra.mxu0 %v455
      %582 = vmatmul.bf16.gmra.mxu0 %v545
      %v583 = vpop.f32.mrf.mxu0
      %v584 = vadd.f32 0.0, %v583
      %v585 = vpop.f32.mrf.mxu0
      %v586 = vadd.f32 0.0, %v585
      %587 = vmatmul.bf16.gmra.mxu0 %v572
      %v588 = vpop.f32.mrf.mxu0
      %v589 = vadd.f32 0.0, %v588
      %v590 = vpop.f32.mrf.mxu0
      %v591 = vadd.f32 0.0, %v590
      %592 = vdwg.mxu0
      %v595 = vunpack.c.l.b16 %v418
      %v596 = vunpack.c.l.b16 %v419
      %v597 = vpack.c.b16 %v596, %v595
      %v599 = vsel %vm459, %v597, 0
      %601 = vmatpush.bf16.msra.mxu0 0
      %602 = vmatpush.bf16.msra.mxu0 0
      %603 = vmatpush.bf16.msra.mxu0 0
      %604 = vmatpush.bf16.msra.mxu0 0
      %605 = vmatpush.bf16.msra.mxu0 0
      %606 = vmatpush.bf16.msra.mxu0 0
      %607 = vmatpush.bf16.msra.mxu0 %v456
      %608 = vmatpush.bf16.msra.mxu0 %v455
      %609 = vmatmul.bf16.gmra.mxu0 %v572
      %v610 = vpop.f32.mrf.mxu0
      %v611 = vadd.f32 0.0, %v610
      %v612 = vpop.f32.mrf.mxu0
      %v613 = vadd.f32 0.0, %v612
      %614 = vmatmul.bf16.gmra.mxu0 %v599
      %v615 = vpop.f32.mrf.mxu0
      %v616 = vadd.f32 0.0, %v615
      %v617 = vpop.f32.mrf.mxu0
      %v618 = vadd.f32 0.0, %v617
      %619 = vdwg.mxu0
      %v622 = vunpack.c.l.b16 %v420
      %v623 = vunpack.c.l.b16 %v421
      %v624 = vpack.c.b16 %v623, %v622
      %v626 = vsel %vm459, %v624, 0
      %628 = vmatpush.bf16.msra.mxu0 0
      %629 = vmatpush.bf16.msra.mxu0 0
      %630 = vmatpush.bf16.msra.mxu0 0
      %631 = vmatpush.bf16.msra.mxu0 0
      %632 = vmatpush.bf16.msra.mxu0 0
      %633 = vmatpush.bf16.msra.mxu0 0
      %634 = vmatpush.bf16.msra.mxu0 %v456
      %635 = vmatpush.bf16.msra.mxu0 %v455
      %636 = vmatmul.bf16.gmra.mxu0 %v599
      %v637 = vpop.f32.mrf.mxu0
      %v638 = vadd.f32 0.0, %v637
      %v639 = vpop.f32.mrf.mxu0
      %v640 = vadd.f32 0.0, %v639
      %641 = vmatmul.bf16.gmra.mxu0 %v626
      %v642 = vpop.f32.mrf.mxu0
      %v643 = vadd.f32 0.0, %v642
      %v644 = vpop.f32.mrf.mxu0
      %v645 = vadd.f32 0.0, %v644
      %646 = vdwg.mxu0
      %v649 = vunpack.c.l.b16 %v422
      %v650 = vunpack.c.l.b16 %v423
      %v651 = vpack.c.b16 %v650, %v649
      %v653 = vsel %vm459, %v651, 0
      %655 = vmatpush.bf16.msra.mxu0 0
      %656 = vmatpush.bf16.msra.mxu0 0
      %657 = vmatpush.bf16.msra.mxu0 0
      %658 = vmatpush.bf16.msra.mxu0 0
      %659 = vmatpush.bf16.msra.mxu0 0
      %660 = vmatpush.bf16.msra.mxu0 0
      %661 = vmatpush.bf16.msra.mxu0 %v456
      %662 = vmatpush.bf16.msra.mxu0 %v455
      %663 = vmatmul.bf16.gmra.mxu0 %v626
      %v664 = vpop.f32.mrf.mxu0
      %v665 = vadd.f32 0.0, %v664
      %v666 = vpop.f32.mrf.mxu0
      %v667 = vadd.f32 0.0, %v666
      %668 = vmatmul.bf16.gmra.mxu0 %v653
      %v669 = vpop.f32.mrf.mxu0
      %v670 = vadd.f32 0.0, %v669
      %v671 = vpop.f32.mrf.mxu0
      %v672 = vadd.f32 0.0, %v671
      %673 = vdwg.mxu0
      %v676 = vunpack.c.l.b16 %v424
      %v677 = vunpack.c.l.b16 %v425
      %v678 = vpack.c.b16 %v677, %v676
      %v680 = vsel %vm459, %v678, 0
      %682 = vmatpush.bf16.msra.mxu0 0
      %683 = vmatpush.bf16.msra.mxu0 0
      %684 = vmatpush.bf16.msra.mxu0 0
      %685 = vmatpush.bf16.msra.mxu0 0
      %686 = vmatpush.bf16.msra.mxu0 0
      %687 = vmatpush.bf16.msra.mxu0 0
      %688 = vmatpush.bf16.msra.mxu0 %v456
      %689 = vmatpush.bf16.msra.mxu0 %v455
      %690 = vmatmul.bf16.gmra.mxu0 %v653
      %v691 = vpop.f32.mrf.mxu0
      %v692 = vadd.f32 0.0, %v691
      %v693 = vpop.f32.mrf.mxu0
      %v694 = vadd.f32 0.0, %v693
      %695 = vmatmul.bf16.gmra.mxu0 %v680
      %v696 = vpop.f32.mrf.mxu0
      %v697 = vadd.f32 0.0, %v696
      %v698 = vpop.f32.mrf.mxu0
      %v699 = vadd.f32 0.0, %v698
      %700 = vdwg.mxu0
      %v703 = vunpack.c.l.b16 %v426
      %v704 = vunpack.c.l.b16 %v427
      %v705 = vpack.c.b16 %v704, %v703
      %v707 = vsel %vm459, %v705, 0
      %709 = vmatpush.bf16.msra.mxu0 0
      %710 = vmatpush.bf16.msra.mxu0 0
      %711 = vmatpush.bf16.msra.mxu0 0
      %712 = vmatpush.bf16.msra.mxu0 0
      %713 = vmatpush.bf16.msra.mxu0 0
      %714 = vmatpush.bf16.msra.mxu0 0
      %715 = vmatpush.bf16.msra.mxu0 %v456
      %716 = vmatpush.bf16.msra.mxu0 %v455
      %717 = vmatmul.bf16.gmra.mxu0 %v680
      %v718 = vpop.f32.mrf.mxu0
      %v719 = vadd.f32 0.0, %v718
      %v720 = vpop.f32.mrf.mxu0
      %v721 = vadd.f32 0.0, %v720
      %722 = vmatmul.bf16.gmra.mxu0 %v707
      %v723 = vpop.f32.mrf.mxu0
      %v724 = vadd.f32 0.0, %v723
      %v725 = vpop.f32.mrf.mxu0
      %v726 = vadd.f32 0.0, %v725
      %727 = vdwg.mxu0
      %v730 = vunpack.c.l.b16 %v428
      %v731 = vunpack.c.l.b16 %v429
      %v732 = vpack.c.b16 %v731, %v730
      %v734 = vsel %vm459, %v732, 0
      %736 = vmatpush.bf16.msra.mxu0 0
      %737 = vmatpush.bf16.msra.mxu0 0
      %738 = vmatpush.bf16.msra.mxu0 0
      %739 = vmatpush.bf16.msra.mxu0 0
      %740 = vmatpush.bf16.msra.mxu0 0
      %741 = vmatpush.bf16.msra.mxu0 0
      %742 = vmatpush.bf16.msra.mxu0 %v456
      %743 = vmatpush.bf16.msra.mxu0 %v455
      %744 = vmatmul.bf16.gmra.mxu0 %v707
      %v745 = vpop.f32.mrf.mxu0
      %v746 = vadd.f32 0.0, %v745
      %v747 = vpop.f32.mrf.mxu0
      %v748 = vadd.f32 0.0, %v747
      %749 = vmatmul.bf16.gmra.mxu0 %v734
      %v750 = vpop.f32.mrf.mxu0
      %v751 = vadd.f32 0.0, %v750
      %v752 = vpop.f32.mrf.mxu0
      %v753 = vadd.f32 0.0, %v752
      %754 = vdwg.mxu0
      %v757 = vunpack.c.l.b16 %v430
      %v758 = vunpack.c.l.b16 %v431
      %v759 = vpack.c.b16 %v758, %v757
      %v761 = vsel %vm459, %v759, 0
      %763 = vmatpush.bf16.msra.mxu0 0
      %764 = vmatpush.bf16.msra.mxu0 0
      %765 = vmatpush.bf16.msra.mxu0 0
      %766 = vmatpush.bf16.msra.mxu0 0
      %767 = vmatpush.bf16.msra.mxu0 0
      %768 = vmatpush.bf16.msra.mxu0 0
      %769 = vmatpush.bf16.msra.mxu0 %v456
      %770 = vmatpush.bf16.msra.mxu0 %v455
      %771 = vmatmul.bf16.gmra.mxu0 %v734
      %v772 = vpop.f32.mrf.mxu0
      %v773 = vadd.f32 0.0, %v772
      %v774 = vpop.f32.mrf.mxu0
      %v775 = vadd.f32 0.0, %v774
      %776 = vmatmul.bf16.gmra.mxu0 %v761
      %v777 = vpop.f32.mrf.mxu0
      %v778 = vadd.f32 0.0, %v777
      %v779 = vpop.f32.mrf.mxu0
      %v780 = vadd.f32 0.0, %v779
      %781 = vdwg.mxu0
      %v784 = vunpack.c.l.b16 %v432
      %v785 = vunpack.c.l.b16 %v433
      %v786 = vpack.c.b16 %v785, %v784
      %v788 = vsel %vm459, %v786, 0
      %790 = vmatpush.bf16.msra.mxu0 0
      %791 = vmatpush.bf16.msra.mxu0 0
      %792 = vmatpush.bf16.msra.mxu0 0
      %793 = vmatpush.bf16.msra.mxu0 0
      %794 = vmatpush.bf16.msra.mxu0 0
      %795 = vmatpush.bf16.msra.mxu0 0
      %796 = vmatpush.bf16.msra.mxu0 %v456
      %797 = vmatpush.bf16.msra.mxu0 %v455
      %798 = vmatmul.bf16.gmra.mxu0 %v761
      %v799 = vpop.f32.mrf.mxu0
      %v800 = vadd.f32 0.0, %v799
      %v801 = vpop.f32.mrf.mxu0
      %v802 = vadd.f32 0.0, %v801
      %803 = vmatmul.bf16.gmra.mxu0 %v788
      %v804 = vpop.f32.mrf.mxu0
      %v805 = vadd.f32 0.0, %v804
      %v806 = vpop.f32.mrf.mxu0
      %v807 = vadd.f32 0.0, %v806
      %808 = vdwg.mxu0
      %v811 = vunpack.c.l.b16 %v434
      %v812 = vunpack.c.l.b16 %v435
      %v813 = vpack.c.b16 %v812, %v811
      %v815 = vsel %vm459, %v813, 0
      %817 = vmatpush.bf16.msra.mxu0 0
      %818 = vmatpush.bf16.msra.mxu0 0
      %819 = vmatpush.bf16.msra.mxu0 0
      %820 = vmatpush.bf16.msra.mxu0 0
      %821 = vmatpush.bf16.msra.mxu0 0
      %822 = vmatpush.bf16.msra.mxu0 0
      %823 = vmatpush.bf16.msra.mxu0 %v456
      %824 = vmatpush.bf16.msra.mxu0 %v455
      %825 = vmatmul.bf16.gmra.mxu0 %v788
      %v826 = vpop.f32.mrf.mxu0
      %v827 = vadd.f32 0.0, %v826
      %v828 = vpop.f32.mrf.mxu0
      %v829 = vadd.f32 0.0, %v828
      %830 = vmatmul.bf16.gmra.mxu0 %v815
      %v831 = vpop.f32.mrf.mxu0
      %v832 = vadd.f32 0.0, %v831
      %v833 = vpop.f32.mrf.mxu0
      %v834 = vadd.f32 0.0, %v833
      %835 = vdwg.mxu0
      %v838 = vunpack.c.l.b16 %v436
      %v839 = vunpack.c.l.b16 %v437
      %v840 = vpack.c.b16 %v839, %v838
      %v842 = vsel %vm459, %v840, 0
      %844 = vmatpush.bf16.msra.mxu0 0
      %845 = vmatpush.bf16.msra.mxu0 0
      %846 = vmatpush.bf16.msra.mxu0 0
      %847 = vmatpush.bf16.msra.mxu0 0
      %848 = vmatpush.bf16.msra.mxu0 0
      %849 = vmatpush.bf16.msra.mxu0 0
      %850 = vmatpush.bf16.msra.mxu0 %v456
      %851 = vmatpush.bf16.msra.mxu0 %v455
      %852 = vmatmul.bf16.gmra.mxu0 %v815
      %v853 = vpop.f32.mrf.mxu0
      %v854 = vadd.f32 0.0, %v853
      %v855 = vpop.f32.mrf.mxu0
      %v856 = vadd.f32 0.0, %v855
      %857 = vmatmul.bf16.gmra.mxu0 %v842
      %v858 = vpop.f32.mrf.mxu0
      %v859 = vadd.f32 0.0, %v858
      %v860 = vpop.f32.mrf.mxu0
      %v861 = vadd.f32 0.0, %v860
      %862 = vdwg.mxu0
      %v864 = vunpack.c.l.b16 %v438
      %v865 = vpack.c.b16 %v839, %v864
      %v867 = vsel %vm459, %v865, 0
      %869 = vmatpush.bf16.msra.mxu0 0
      %870 = vmatpush.bf16.msra.mxu0 0
      %871 = vmatpush.bf16.msra.mxu0 0
      %872 = vmatpush.bf16.msra.mxu0 0
      %873 = vmatpush.bf16.msra.mxu0 0
      %874 = vmatpush.bf16.msra.mxu0 0
      %875 = vmatpush.bf16.msra.mxu0 %v456
      %876 = vmatpush.bf16.msra.mxu0 %v455
      %877 = vmatmul.bf16.gmra.mxu0 %v842
      %v878 = vpop.f32.mrf.mxu0
      %v879 = vadd.f32 0.0, %v878
      %v880 = vpop.f32.mrf.mxu0
      %v881 = vadd.f32 0.0, %v880
      %882 = vmatmul.bf16.gmra.mxu0 %v867
      %v883 = vpop.f32.mrf.mxu0
      %v884 = vadd.f32 0.0, %v883
      %v885 = vpop.f32.mrf.mxu0
      %v886 = vadd.f32 0.0, %v885
      %887 = vdwg.mxu0
      %952 = vrot.lane.b32.xlu0 %v476, 112
      %v953 = vpop.permute.xlu0 %952
      %954 = vrot.lane.b32.xlu0 %v478, 112
      %v955 = vpop.permute.xlu0 %954
      %956 = vrot.lane.b32.xlu0 %v481, 112
      %v957 = vpop.permute.xlu0 %956
      %958 = vrot.lane.b32.xlu0 %v483, 112
      %v959 = vpop.permute.xlu0 %958
      %960 = vrot.lane.b32.xlu0 %v503, 112
      %v961 = vpop.permute.xlu0 %960
      %962 = vrot.lane.b32.xlu0 %v505, 112
      %v963 = vpop.permute.xlu0 %962
      %964 = vrot.lane.b32.xlu0 %v508, 112
      %v965 = vpop.permute.xlu0 %964
      %966 = vrot.lane.b32.xlu0 %v510, 112
      %v967 = vpop.permute.xlu0 %966
      %968 = vrot.lane.b32.xlu0 %v530, 112
      %v969 = vpop.permute.xlu0 %968
      %970 = vrot.lane.b32.xlu0 %v532, 112
      %v971 = vpop.permute.xlu0 %970
      %972 = vrot.lane.b32.xlu0 %v535, 112
      %v973 = vpop.permute.xlu0 %972
      %974 = vrot.lane.b32.xlu0 %v537, 112
      %v975 = vpop.permute.xlu0 %974
      %976 = vrot.lane.b32.xlu0 %v557, 112
      %v977 = vpop.permute.xlu0 %976
      %978 = vrot.lane.b32.xlu0 %v559, 112
      %v979 = vpop.permute.xlu0 %978
      %980 = vrot.lane.b32.xlu0 %v562, 112
      %v981 = vpop.permute.xlu0 %980
      %982 = vrot.lane.b32.xlu0 %v564, 112
      %v983 = vpop.permute.xlu0 %982
      %984 = vrot.lane.b32.xlu0 %v584, 112
      %v985 = vpop.permute.xlu0 %984
      %986 = vrot.lane.b32.xlu0 %v586, 112
      %v987 = vpop.permute.xlu0 %986
      %988 = vrot.lane.b32.xlu0 %v589, 112
      %v989 = vpop.permute.xlu0 %988
      %990 = vrot.lane.b32.xlu0 %v591, 112
      %v991 = vpop.permute.xlu0 %990
      %992 = vrot.lane.b32.xlu0 %v611, 112
      %v993 = vpop.permute.xlu0 %992
      %994 = vrot.lane.b32.xlu0 %v613, 112
      %v995 = vpop.permute.xlu0 %994
      %996 = vrot.lane.b32.xlu0 %v616, 112
      %v997 = vpop.permute.xlu0 %996
      %998 = vrot.lane.b32.xlu0 %v618, 112
      %v999 = vpop.permute.xlu0 %998
      %1000 = vrot.lane.b32.xlu0 %v638, 112
      %v1001 = vpop.permute.xlu0 %1000
      %1002 = vrot.lane.b32.xlu0 %v640, 112
      %v1003 = vpop.permute.xlu0 %1002
      %1004 = vrot.lane.b32.xlu0 %v643, 112
      %v1005 = vpop.permute.xlu0 %1004
      %1006 = vrot.lane.b32.xlu0 %v645, 112
      %v1007 = vpop.permute.xlu0 %1006
      %1008 = vrot.lane.b32.xlu0 %v665, 112
      %v1009 = vpop.permute.xlu0 %1008
      %1010 = vrot.lane.b32.xlu0 %v667, 112
      %v1011 = vpop.permute.xlu0 %1010
      %1012 = vrot.lane.b32.xlu0 %v670, 112
      %v1013 = vpop.permute.xlu0 %1012
      %1014 = vrot.lane.b32.xlu0 %v672, 112
      %v1015 = vpop.permute.xlu0 %1014
      %1016 = vrot.lane.b32.xlu0 %v692, 112
      %v1017 = vpop.permute.xlu0 %1016
      %1018 = vrot.lane.b32.xlu0 %v694, 112
      %v1019 = vpop.permute.xlu0 %1018
      %1020 = vrot.lane.b32.xlu0 %v697, 112
      %v1021 = vpop.permute.xlu0 %1020
      %1022 = vrot.lane.b32.xlu0 %v699, 112
      %v1023 = vpop.permute.xlu0 %1022
      %1024 = vrot.lane.b32.xlu0 %v719, 112
      %v1025 = vpop.permute.xlu0 %1024
      %1026 = vrot.lane.b32.xlu0 %v721, 112
      %v1027 = vpop.permute.xlu0 %1026
      %1028 = vrot.lane.b32.xlu0 %v724, 112
      %v1029 = vpop.permute.xlu0 %1028
      %1030 = vrot.lane.b32.xlu0 %v726, 112
      %v1031 = vpop.permute.xlu0 %1030
      %1032 = vrot.lane.b32.xlu0 %v746, 112
      %v1033 = vpop.permute.xlu0 %1032
      %1034 = vrot.lane.b32.xlu0 %v748, 112
      %v1035 = vpop.permute.xlu0 %1034
      %1036 = vrot.lane.b32.xlu0 %v751, 112
      %v1037 = vpop.permute.xlu0 %1036
      %1038 = vrot.lane.b32.xlu0 %v753, 112
      %v1039 = vpop.permute.xlu0 %1038
      %1040 = vrot.lane.b32.xlu0 %v773, 112
      %v1041 = vpop.permute.xlu0 %1040
      %1042 = vrot.lane.b32.xlu0 %v775, 112
      %v1043 = vpop.permute.xlu0 %1042
      %1044 = vrot.lane.b32.xlu0 %v778, 112
      %v1045 = vpop.permute.xlu0 %1044
      %1046 = vrot.lane.b32.xlu0 %v780, 112
      %v1047 = vpop.permute.xlu0 %1046
      %1048 = vrot.lane.b32.xlu0 %v800, 112
      %v1049 = vpop.permute.xlu0 %1048
      %1050 = vrot.lane.b32.xlu0 %v802, 112
      %v1051 = vpop.permute.xlu0 %1050
      %1052 = vrot.lane.b32.xlu0 %v805, 112
      %v1053 = vpop.permute.xlu0 %1052
      %1054 = vrot.lane.b32.xlu0 %v807, 112
      %v1055 = vpop.permute.xlu0 %1054
      %1056 = vrot.lane.b32.xlu0 %v827, 112
      %v1057 = vpop.permute.xlu0 %1056
      %1058 = vrot.lane.b32.xlu0 %v829, 112
      %v1059 = vpop.permute.xlu0 %1058
      %1060 = vrot.lane.b32.xlu0 %v832, 112
      %v1061 = vpop.permute.xlu0 %1060
      %1062 = vrot.lane.b32.xlu0 %v834, 112
      %v1063 = vpop.permute.xlu0 %1062
      %1064 = vrot.lane.b32.xlu0 %v854, 112
      %v1065 = vpop.permute.xlu0 %1064
      %1066 = vrot.lane.b32.xlu0 %v856, 112
      %v1067 = vpop.permute.xlu0 %1066
      %1068 = vrot.lane.b32.xlu0 %v859, 112
      %v1069 = vpop.permute.xlu0 %1068
      %1070 = vrot.lane.b32.xlu0 %v861, 112
      %v1071 = vpop.permute.xlu0 %1070
      %1072 = vrot.lane.b32.xlu0 %v879, 112
      %v1073 = vpop.permute.xlu0 %1072
      %1074 = vrot.lane.b32.xlu0 %v881, 112
      %v1075 = vpop.permute.xlu0 %1074
      %1076 = vrot.lane.b32.xlu0 %v884, 112
      %v1077 = vpop.permute.xlu0 %1076
      %1078 = vrot.lane.b32.xlu0 %v886, 112
      %v1079 = vpop.permute.xlu0 %1078
      %1144 = vrot.lane.b32.xlu0 %v476, 96
      %v1145 = vpop.permute.xlu0 %1144
      %1146 = vrot.lane.b32.xlu0 %v478, 96
      %v1147 = vpop.permute.xlu0 %1146
      %1148 = vrot.lane.b32.xlu0 %v481, 96
      %v1149 = vpop.permute.xlu0 %1148
      %1150 = vrot.lane.b32.xlu0 %v483, 96
      %v1151 = vpop.permute.xlu0 %1150
      %1152 = vrot.lane.b32.xlu0 %v503, 96
      %v1153 = vpop.permute.xlu0 %1152
      %1154 = vrot.lane.b32.xlu0 %v505, 96
      %v1155 = vpop.permute.xlu0 %1154
      %1156 = vrot.lane.b32.xlu0 %v508, 96
      %v1157 = vpop.permute.xlu0 %1156
      %1158 = vrot.lane.b32.xlu0 %v510, 96
      %v1159 = vpop.permute.xlu0 %1158
      %1160 = vrot.lane.b32.xlu0 %v530, 96
      %v1161 = vpop.permute.xlu0 %1160
      %1162 = vrot.lane.b32.xlu0 %v532, 96
      %v1163 = vpop.permute.xlu0 %1162
      %1164 = vrot.lane.b32.xlu0 %v535, 96
      %v1165 = vpop.permute.xlu0 %1164
      %1166 = vrot.lane.b32.xlu0 %v537, 96
      %v1167 = vpop.permute.xlu0 %1166
      %1168 = vrot.lane.b32.xlu0 %v557, 96
      %v1169 = vpop.permute.xlu0 %1168
      %1170 = vrot.lane.b32.xlu0 %v559, 96
      %v1171 = vpop.permute.xlu0 %1170
      %1172 = vrot.lane.b32.xlu0 %v562, 96
      %v1173 = vpop.permute.xlu0 %1172
      %1174 = vrot.lane.b32.xlu0 %v564, 96
      %v1175 = vpop.permute.xlu0 %1174
      %1176 = vrot.lane.b32.xlu0 %v584, 96
      %v1177 = vpop.permute.xlu0 %1176
      %1178 = vrot.lane.b32.xlu0 %v586, 96
      %v1179 = vpop.permute.xlu0 %1178
      %1180 = vrot.lane.b32.xlu0 %v589, 96
      %v1181 = vpop.permute.xlu0 %1180
      %1182 = vrot.lane.b32.xlu0 %v591, 96
      %v1183 = vpop.permute.xlu0 %1182
      %1184 = vrot.lane.b32.xlu0 %v611, 96
      %v1185 = vpop.permute.xlu0 %1184
      %1186 = vrot.lane.b32.xlu0 %v613, 96
      %v1187 = vpop.permute.xlu0 %1186
      %1188 = vrot.lane.b32.xlu0 %v616, 96
      %v1189 = vpop.permute.xlu0 %1188
      %1190 = vrot.lane.b32.xlu0 %v618, 96
      %v1191 = vpop.permute.xlu0 %1190
      %1192 = vrot.lane.b32.xlu0 %v638, 96
      %v1193 = vpop.permute.xlu0 %1192
      %1194 = vrot.lane.b32.xlu0 %v640, 96
      %v1195 = vpop.permute.xlu0 %1194
      %1196 = vrot.lane.b32.xlu0 %v643, 96
      %v1197 = vpop.permute.xlu0 %1196
      %1198 = vrot.lane.b32.xlu0 %v645, 96
      %v1199 = vpop.permute.xlu0 %1198
      %1200 = vrot.lane.b32.xlu0 %v665, 96
      %v1201 = vpop.permute.xlu0 %1200
      %1202 = vrot.lane.b32.xlu0 %v667, 96
      %v1203 = vpop.permute.xlu0 %1202
      %1204 = vrot.lane.b32.xlu0 %v670, 96
      %v1205 = vpop.permute.xlu0 %1204
      %1206 = vrot.lane.b32.xlu0 %v672, 96
      %v1207 = vpop.permute.xlu0 %1206
      %1208 = vrot.lane.b32.xlu0 %v692, 96
      %v1209 = vpop.permute.xlu0 %1208
      %1210 = vrot.lane.b32.xlu0 %v694, 96
      %v1211 = vpop.permute.xlu0 %1210
      %1212 = vrot.lane.b32.xlu0 %v697, 96
      %v1213 = vpop.permute.xlu0 %1212
      %1214 = vrot.lane.b32.xlu0 %v699, 96
      %v1215 = vpop.permute.xlu0 %1214
      %1216 = vrot.lane.b32.xlu0 %v719, 96
      %v1217 = vpop.permute.xlu0 %1216
      %1218 = vrot.lane.b32.xlu0 %v721, 96
      %v1219 = vpop.permute.xlu0 %1218
      %1220 = vrot.lane.b32.xlu0 %v724, 96
      %v1221 = vpop.permute.xlu0 %1220
      %1222 = vrot.lane.b32.xlu0 %v726, 96
      %v1223 = vpop.permute.xlu0 %1222
      %1224 = vrot.lane.b32.xlu0 %v746, 96
      %v1225 = vpop.permute.xlu0 %1224
      %1226 = vrot.lane.b32.xlu0 %v748, 96
      %v1227 = vpop.permute.xlu0 %1226
      %1228 = vrot.lane.b32.xlu0 %v751, 96
      %v1229 = vpop.permute.xlu0 %1228
      %1230 = vrot.lane.b32.xlu0 %v753, 96
      %v1231 = vpop.permute.xlu0 %1230
      %1232 = vrot.lane.b32.xlu0 %v773, 96
      %v1233 = vpop.permute.xlu0 %1232
      %1234 = vrot.lane.b32.xlu0 %v775, 96
      %v1235 = vpop.permute.xlu0 %1234
      %1236 = vrot.lane.b32.xlu0 %v778, 96
      %v1237 = vpop.permute.xlu0 %1236
      %1238 = vrot.lane.b32.xlu0 %v780, 96
      %v1239 = vpop.permute.xlu0 %1238
      %1240 = vrot.lane.b32.xlu0 %v800, 96
      %v1241 = vpop.permute.xlu0 %1240
      %1242 = vrot.lane.b32.xlu0 %v802, 96
      %v1243 = vpop.permute.xlu0 %1242
      %1244 = vrot.lane.b32.xlu0 %v805, 96
      %v1245 = vpop.permute.xlu0 %1244
      %1246 = vrot.lane.b32.xlu0 %v807, 96
      %v1247 = vpop.permute.xlu0 %1246
      %1248 = vrot.lane.b32.xlu0 %v827, 96
      %v1249 = vpop.permute.xlu0 %1248
      %1250 = vrot.lane.b32.xlu0 %v829, 96
      %v1251 = vpop.permute.xlu0 %1250
      %1252 = vrot.lane.b32.xlu0 %v832, 96
      %v1253 = vpop.permute.xlu0 %1252
      %1254 = vrot.lane.b32.xlu0 %v834, 96
      %v1255 = vpop.permute.xlu0 %1254
      %1256 = vrot.lane.b32.xlu0 %v854, 96
      %v1257 = vpop.permute.xlu0 %1256
      %1258 = vrot.lane.b32.xlu0 %v856, 96
      %v1259 = vpop.permute.xlu0 %1258
      %1260 = vrot.lane.b32.xlu0 %v859, 96
      %v1261 = vpop.permute.xlu0 %1260
      %1262 = vrot.lane.b32.xlu0 %v861, 96
      %v1263 = vpop.permute.xlu0 %1262
      %1264 = vrot.lane.b32.xlu0 %v879, 96
      %v1265 = vpop.permute.xlu0 %1264
      %1266 = vrot.lane.b32.xlu0 %v881, 96
      %v1267 = vpop.permute.xlu0 %1266
      %1268 = vrot.lane.b32.xlu0 %v884, 96
      %v1269 = vpop.permute.xlu0 %1268
      %1270 = vrot.lane.b32.xlu0 %v886, 96
      %v1271 = vpop.permute.xlu0 %1270
      %1336 = vrot.lane.b32.xlu0 %v476, 80
      %v1337 = vpop.permute.xlu0 %1336
      %1338 = vrot.lane.b32.xlu0 %v478, 80
      %v1339 = vpop.permute.xlu0 %1338
      %1340 = vrot.lane.b32.xlu0 %v481, 80
      %v1341 = vpop.permute.xlu0 %1340
      %1342 = vrot.lane.b32.xlu0 %v483, 80
      %v1343 = vpop.permute.xlu0 %1342
      %1344 = vrot.lane.b32.xlu0 %v503, 80
      %v1345 = vpop.permute.xlu0 %1344
      %1346 = vrot.lane.b32.xlu0 %v505, 80
      %v1347 = vpop.permute.xlu0 %1346
      %1348 = vrot.lane.b32.xlu0 %v508, 80
      %v1349 = vpop.permute.xlu0 %1348
      %1350 = vrot.lane.b32.xlu0 %v510, 80
      %v1351 = vpop.permute.xlu0 %1350
      %1352 = vrot.lane.b32.xlu0 %v530, 80
      %v1353 = vpop.permute.xlu0 %1352
      %1354 = vrot.lane.b32.xlu0 %v532, 80
      %v1355 = vpop.permute.xlu0 %1354
      %1356 = vrot.lane.b32.xlu0 %v535, 80
      %v1357 = vpop.permute.xlu0 %1356
      %1358 = vrot.lane.b32.xlu0 %v537, 80
      %v1359 = vpop.permute.xlu0 %1358
      %1360 = vrot.lane.b32.xlu0 %v557, 80
      %v1361 = vpop.permute.xlu0 %1360
      %1362 = vrot.lane.b32.xlu0 %v559, 80
      %v1363 = vpop.permute.xlu0 %1362
      %1364 = vrot.lane.b32.xlu0 %v562, 80
      %v1365 = vpop.permute.xlu0 %1364
      %1366 = vrot.lane.b32.xlu0 %v564, 80
      %v1367 = vpop.permute.xlu0 %1366
      %1368 = vrot.lane.b32.xlu0 %v584, 80
      %v1369 = vpop.permute.xlu0 %1368
      %1370 = vrot.lane.b32.xlu0 %v586, 80
      %v1371 = vpop.permute.xlu0 %1370
      %1372 = vrot.lane.b32.xlu0 %v589, 80
      %v1373 = vpop.permute.xlu0 %1372
      %1374 = vrot.lane.b32.xlu0 %v591, 80
      %v1375 = vpop.permute.xlu0 %1374
      %1376 = vrot.lane.b32.xlu0 %v611, 80
      %v1377 = vpop.permute.xlu0 %1376
      %1378 = vrot.lane.b32.xlu0 %v613, 80
      %v1379 = vpop.permute.xlu0 %1378
      %1380 = vrot.lane.b32.xlu0 %v616, 80
      %v1381 = vpop.permute.xlu0 %1380
      %1382 = vrot.lane.b32.xlu0 %v618, 80
      %v1383 = vpop.permute.xlu0 %1382
      %1384 = vrot.lane.b32.xlu0 %v638, 80
      %v1385 = vpop.permute.xlu0 %1384
      %1386 = vrot.lane.b32.xlu0 %v640, 80
      %v1387 = vpop.permute.xlu0 %1386
      %1388 = vrot.lane.b32.xlu0 %v643, 80
      %v1389 = vpop.permute.xlu0 %1388
      %1390 = vrot.lane.b32.xlu0 %v645, 80
      %v1391 = vpop.permute.xlu0 %1390
      %1392 = vrot.lane.b32.xlu0 %v665, 80
      %v1393 = vpop.permute.xlu0 %1392
      %1394 = vrot.lane.b32.xlu0 %v667, 80
      %v1395 = vpop.permute.xlu0 %1394
      %1396 = vrot.lane.b32.xlu0 %v670, 80
      %v1397 = vpop.permute.xlu0 %1396
      %1398 = vrot.lane.b32.xlu0 %v672, 80
      %v1399 = vpop.permute.xlu0 %1398
      %1400 = vrot.lane.b32.xlu0 %v692, 80
      %v1401 = vpop.permute.xlu0 %1400
      %1402 = vrot.lane.b32.xlu0 %v694, 80
      %v1403 = vpop.permute.xlu0 %1402
      %1404 = vrot.lane.b32.xlu0 %v697, 80
      %v1405 = vpop.permute.xlu0 %1404
      %1406 = vrot.lane.b32.xlu0 %v699, 80
      %v1407 = vpop.permute.xlu0 %1406
      %1408 = vrot.lane.b32.xlu0 %v719, 80
      %v1409 = vpop.permute.xlu0 %1408
      %1410 = vrot.lane.b32.xlu0 %v721, 80
      %v1411 = vpop.permute.xlu0 %1410
      %1412 = vrot.lane.b32.xlu0 %v724, 80
      %v1413 = vpop.permute.xlu0 %1412
      %1414 = vrot.lane.b32.xlu0 %v726, 80
      %v1415 = vpop.permute.xlu0 %1414
      %1416 = vrot.lane.b32.xlu0 %v746, 80
      %v1417 = vpop.permute.xlu0 %1416
      %1418 = vrot.lane.b32.xlu0 %v748, 80
      %v1419 = vpop.permute.xlu0 %1418
      %1420 = vrot.lane.b32.xlu0 %v751, 80
      %v1421 = vpop.permute.xlu0 %1420
      %1422 = vrot.lane.b32.xlu0 %v753, 80
      %v1423 = vpop.permute.xlu0 %1422
      %1424 = vrot.lane.b32.xlu0 %v773, 80
      %v1425 = vpop.permute.xlu0 %1424
      %1426 = vrot.lane.b32.xlu0 %v775, 80
      %v1427 = vpop.permute.xlu0 %1426
      %1428 = vrot.lane.b32.xlu0 %v778, 80
      %v1429 = vpop.permute.xlu0 %1428
      %1430 = vrot.lane.b32.xlu0 %v780, 80
      %v1431 = vpop.permute.xlu0 %1430
      %1432 = vrot.lane.b32.xlu0 %v800, 80
      %v1433 = vpop.permute.xlu0 %1432
      %1434 = vrot.lane.b32.xlu0 %v802, 80
      %v1435 = vpop.permute.xlu0 %1434
      %1436 = vrot.lane.b32.xlu0 %v805, 80
      %v1437 = vpop.permute.xlu0 %1436
      %1438 = vrot.lane.b32.xlu0 %v807, 80
      %v1439 = vpop.permute.xlu0 %1438
      %1440 = vrot.lane.b32.xlu0 %v827, 80
      %v1441 = vpop.permute.xlu0 %1440
      %1442 = vrot.lane.b32.xlu0 %v829, 80
      %v1443 = vpop.permute.xlu0 %1442
      %1444 = vrot.lane.b32.xlu0 %v832, 80
      %v1445 = vpop.permute.xlu0 %1444
      %1446 = vrot.lane.b32.xlu0 %v834, 80
      %v1447 = vpop.permute.xlu0 %1446
      %1448 = vrot.lane.b32.xlu0 %v854, 80
      %v1449 = vpop.permute.xlu0 %1448
      %1450 = vrot.lane.b32.xlu0 %v856, 80
      %v1451 = vpop.permute.xlu0 %1450
      %1452 = vrot.lane.b32.xlu0 %v859, 80
      %v1453 = vpop.permute.xlu0 %1452
      %1454 = vrot.lane.b32.xlu0 %v861, 80
      %v1455 = vpop.permute.xlu0 %1454
      %1456 = vrot.lane.b32.xlu0 %v879, 80
      %v1457 = vpop.permute.xlu0 %1456
      %1458 = vrot.lane.b32.xlu0 %v881, 80
      %v1459 = vpop.permute.xlu0 %1458
      %1460 = vrot.lane.b32.xlu0 %v884, 80
      %v1461 = vpop.permute.xlu0 %1460
      %1462 = vrot.lane.b32.xlu0 %v886, 80
      %v1463 = vpop.permute.xlu0 %1462
      %v1528 = vpack.c.bf16 %v476, %v476
      %v1529 = vpack.c.bf16 %v478, %v478
      %v1530 = vpack.c.bf16 %v481, %v481
      %v1531 = vpack.c.bf16 %v483, %v483
      %v1532 = vpack.c.bf16 %v953, %v953
      %v1533 = vpack.c.bf16 %v955, %v955
      %v1534 = vpack.c.bf16 %v957, %v957
      %v1535 = vpack.c.bf16 %v959, %v959
      %v1536 = vpack.c.bf16 %v1145, %v1145
      %v1537 = vpack.c.bf16 %v1147, %v1147
      %v1538 = vpack.c.bf16 %v1149, %v1149
      %v1539 = vpack.c.bf16 %v1151, %v1151
      %v1540 = vpack.c.bf16 %v1337, %v1337
      %v1541 = vpack.c.bf16 %v1339, %v1339
      %v1542 = vpack.c.bf16 %v1341, %v1341
      %v1543 = vpack.c.bf16 %v1343, %v1343
      %v1544 = vpack.c.bf16 %v503, %v503
      %v1545 = vpack.c.bf16 %v505, %v505
      %v1546 = vpack.c.bf16 %v508, %v508
      %v1547 = vpack.c.bf16 %v510, %v510
      %v1548 = vpack.c.bf16 %v961, %v961
      %v1549 = vpack.c.bf16 %v963, %v963
      %v1550 = vpack.c.bf16 %v965, %v965
      %v1551 = vpack.c.bf16 %v967, %v967
      %v1552 = vpack.c.bf16 %v1153, %v1153
      %v1553 = vpack.c.bf16 %v1155, %v1155
      %v1554 = vpack.c.bf16 %v1157, %v1157
      %v1555 = vpack.c.bf16 %v1159, %v1159
      %v1556 = vpack.c.bf16 %v1345, %v1345
      %v1557 = vpack.c.bf16 %v1347, %v1347
      %v1558 = vpack.c.bf16 %v1349, %v1349
      %v1559 = vpack.c.bf16 %v1351, %v1351
      %v1560 = vpack.c.bf16 %v530, %v530
      %v1561 = vpack.c.bf16 %v532, %v532
      %v1562 = vpack.c.bf16 %v535, %v535
      %v1563 = vpack.c.bf16 %v537, %v537
      %v1564 = vpack.c.bf16 %v969, %v969
      %v1565 = vpack.c.bf16 %v971, %v971
      %v1566 = vpack.c.bf16 %v973, %v973
      %v1567 = vpack.c.bf16 %v975, %v975
      %v1568 = vpack.c.bf16 %v1161, %v1161
      %v1569 = vpack.c.bf16 %v1163, %v1163
      %v1570 = vpack.c.bf16 %v1165, %v1165
      %v1571 = vpack.c.bf16 %v1167, %v1167
      %v1572 = vpack.c.bf16 %v1353, %v1353
      %v1573 = vpack.c.bf16 %v1355, %v1355
      %v1574 = vpack.c.bf16 %v1357, %v1357
      %v1575 = vpack.c.bf16 %v1359, %v1359
      %v1576 = vpack.c.bf16 %v557, %v557
      %v1577 = vpack.c.bf16 %v559, %v559
      %v1578 = vpack.c.bf16 %v562, %v562
      %v1579 = vpack.c.bf16 %v564, %v564
      %v1580 = vpack.c.bf16 %v977, %v977
      %v1581 = vpack.c.bf16 %v979, %v979
      %v1582 = vpack.c.bf16 %v981, %v981
      %v1583 = vpack.c.bf16 %v983, %v983
      %v1584 = vpack.c.bf16 %v1169, %v1169
      %v1585 = vpack.c.bf16 %v1171, %v1171
      %v1586 = vpack.c.bf16 %v1173, %v1173
      %v1587 = vpack.c.bf16 %v1175, %v1175
      %v1588 = vpack.c.bf16 %v1361, %v1361
      %v1589 = vpack.c.bf16 %v1363, %v1363
      %v1590 = vpack.c.bf16 %v1365, %v1365
      %v1591 = vpack.c.bf16 %v1367, %v1367
      %v1592 = vpack.c.bf16 %v584, %v584
      %v1593 = vpack.c.bf16 %v586, %v586
      %v1594 = vpack.c.bf16 %v589, %v589
      %v1595 = vpack.c.bf16 %v591, %v591
      %v1596 = vpack.c.bf16 %v985, %v985
      %v1597 = vpack.c.bf16 %v987, %v987
      %v1598 = vpack.c.bf16 %v989, %v989
      %v1599 = vpack.c.bf16 %v991, %v991
      %v1600 = vpack.c.bf16 %v1177, %v1177
      %v1601 = vpack.c.bf16 %v1179, %v1179
      %v1602 = vpack.c.bf16 %v1181, %v1181
      %v1603 = vpack.c.bf16 %v1183, %v1183
      %v1604 = vpack.c.bf16 %v1369, %v1369
      %v1605 = vpack.c.bf16 %v1371, %v1371
      %v1606 = vpack.c.bf16 %v1373, %v1373
      %v1607 = vpack.c.bf16 %v1375, %v1375
      %v1608 = vpack.c.bf16 %v611, %v611
      %v1609 = vpack.c.bf16 %v613, %v613
      %v1610 = vpack.c.bf16 %v616, %v616
      %v1611 = vpack.c.bf16 %v618, %v618
      %v1612 = vpack.c.bf16 %v993, %v993
      %v1613 = vpack.c.bf16 %v995, %v995
      %v1614 = vpack.c.bf16 %v997, %v997
      %v1615 = vpack.c.bf16 %v999, %v999
      %v1616 = vpack.c.bf16 %v1185, %v1185
      %v1617 = vpack.c.bf16 %v1187, %v1187
      %v1618 = vpack.c.bf16 %v1189, %v1189
      %v1619 = vpack.c.bf16 %v1191, %v1191
      %v1620 = vpack.c.bf16 %v1377, %v1377
      %v1621 = vpack.c.bf16 %v1379, %v1379
      %v1622 = vpack.c.bf16 %v1381, %v1381
      %v1623 = vpack.c.bf16 %v1383, %v1383
      %v1624 = vpack.c.bf16 %v638, %v638
      %v1625 = vpack.c.bf16 %v640, %v640
      %v1626 = vpack.c.bf16 %v643, %v643
      %v1627 = vpack.c.bf16 %v645, %v645
      %v1628 = vpack.c.bf16 %v1001, %v1001
      %v1629 = vpack.c.bf16 %v1003, %v1003
      %v1630 = vpack.c.bf16 %v1005, %v1005
      %v1631 = vpack.c.bf16 %v1007, %v1007
      %v1632 = vpack.c.bf16 %v1193, %v1193
      %v1633 = vpack.c.bf16 %v1195, %v1195
      %v1634 = vpack.c.bf16 %v1197, %v1197
      %v1635 = vpack.c.bf16 %v1199, %v1199
      %v1636 = vpack.c.bf16 %v1385, %v1385
      %v1637 = vpack.c.bf16 %v1387, %v1387
      %v1638 = vpack.c.bf16 %v1389, %v1389
      %v1639 = vpack.c.bf16 %v1391, %v1391
      %v1640 = vpack.c.bf16 %v665, %v665
      %v1641 = vpack.c.bf16 %v667, %v667
      %v1642 = vpack.c.bf16 %v670, %v670
      %v1643 = vpack.c.bf16 %v672, %v672
      %v1644 = vpack.c.bf16 %v1009, %v1009
      %v1645 = vpack.c.bf16 %v1011, %v1011
      %v1646 = vpack.c.bf16 %v1013, %v1013
      %v1647 = vpack.c.bf16 %v1015, %v1015
      %v1648 = vpack.c.bf16 %v1201, %v1201
      %v1649 = vpack.c.bf16 %v1203, %v1203
      %v1650 = vpack.c.bf16 %v1205, %v1205
      %v1651 = vpack.c.bf16 %v1207, %v1207
      %v1652 = vpack.c.bf16 %v1393, %v1393
      %v1653 = vpack.c.bf16 %v1395, %v1395
      %v1654 = vpack.c.bf16 %v1397, %v1397
      %v1655 = vpack.c.bf16 %v1399, %v1399
      %v1656 = vpack.c.bf16 %v692, %v692
      %v1657 = vpack.c.bf16 %v694, %v694
      %v1658 = vpack.c.bf16 %v697, %v697
      %v1659 = vpack.c.bf16 %v699, %v699
      %v1660 = vpack.c.bf16 %v1017, %v1017
      %v1661 = vpack.c.bf16 %v1019, %v1019
      %v1662 = vpack.c.bf16 %v1021, %v1021
      %v1663 = vpack.c.bf16 %v1023, %v1023
      %v1664 = vpack.c.bf16 %v1209, %v1209
      %v1665 = vpack.c.bf16 %v1211, %v1211
      %v1666 = vpack.c.bf16 %v1213, %v1213
      %v1667 = vpack.c.bf16 %v1215, %v1215
      %v1668 = vpack.c.bf16 %v1401, %v1401
      %v1669 = vpack.c.bf16 %v1403, %v1403
      %v1670 = vpack.c.bf16 %v1405, %v1405
      %v1671 = vpack.c.bf16 %v1407, %v1407
      %v1672 = vpack.c.bf16 %v719, %v719
      %v1673 = vpack.c.bf16 %v721, %v721
      %v1674 = vpack.c.bf16 %v724, %v724
      %v1675 = vpack.c.bf16 %v726, %v726
      %v1676 = vpack.c.bf16 %v1025, %v1025
      %v1677 = vpack.c.bf16 %v1027, %v1027
      %v1678 = vpack.c.bf16 %v1029, %v1029
      %v1679 = vpack.c.bf16 %v1031, %v1031
      %v1680 = vpack.c.bf16 %v1217, %v1217
      %v1681 = vpack.c.bf16 %v1219, %v1219
      %v1682 = vpack.c.bf16 %v1221, %v1221
      %v1683 = vpack.c.bf16 %v1223, %v1223
      %v1684 = vpack.c.bf16 %v1409, %v1409
      %v1685 = vpack.c.bf16 %v1411, %v1411
      %v1686 = vpack.c.bf16 %v1413, %v1413
      %v1687 = vpack.c.bf16 %v1415, %v1415
      %v1688 = vpack.c.bf16 %v746, %v746
      %v1689 = vpack.c.bf16 %v748, %v748
      %v1690 = vpack.c.bf16 %v751, %v751
      %v1691 = vpack.c.bf16 %v753, %v753
      %v1692 = vpack.c.bf16 %v1033, %v1033
      %v1693 = vpack.c.bf16 %v1035, %v1035
      %v1694 = vpack.c.bf16 %v1037, %v1037
      %v1695 = vpack.c.bf16 %v1039, %v1039
      %v1696 = vpack.c.bf16 %v1225, %v1225
      %v1697 = vpack.c.bf16 %v1227, %v1227
      %v1698 = vpack.c.bf16 %v1229, %v1229
      %v1699 = vpack.c.bf16 %v1231, %v1231
      %v1700 = vpack.c.bf16 %v1417, %v1417
      %v1701 = vpack.c.bf16 %v1419, %v1419
      %v1702 = vpack.c.bf16 %v1421, %v1421
      %v1703 = vpack.c.bf16 %v1423, %v1423
      %v1704 = vpack.c.bf16 %v773, %v773
      %v1705 = vpack.c.bf16 %v775, %v775
      %v1706 = vpack.c.bf16 %v778, %v778
      %v1707 = vpack.c.bf16 %v780, %v780
      %v1708 = vpack.c.bf16 %v1041, %v1041
      %v1709 = vpack.c.bf16 %v1043, %v1043
      %v1710 = vpack.c.bf16 %v1045, %v1045
      %v1711 = vpack.c.bf16 %v1047, %v1047
      %v1712 = vpack.c.bf16 %v1233, %v1233
      %v1713 = vpack.c.bf16 %v1235, %v1235
      %v1714 = vpack.c.bf16 %v1237, %v1237
      %v1715 = vpack.c.bf16 %v1239, %v1239
      %v1716 = vpack.c.bf16 %v1425, %v1425
      %v1717 = vpack.c.bf16 %v1427, %v1427
      %v1718 = vpack.c.bf16 %v1429, %v1429
      %v1719 = vpack.c.bf16 %v1431, %v1431
      %v1720 = vpack.c.bf16 %v800, %v800
      %v1721 = vpack.c.bf16 %v802, %v802
      %v1722 = vpack.c.bf16 %v805, %v805
      %v1723 = vpack.c.bf16 %v807, %v807
      %v1724 = vpack.c.bf16 %v1049, %v1049
      %v1725 = vpack.c.bf16 %v1051, %v1051
      %v1726 = vpack.c.bf16 %v1053, %v1053
      %v1727 = vpack.c.bf16 %v1055, %v1055
      %v1728 = vpack.c.bf16 %v1241, %v1241
      %v1729 = vpack.c.bf16 %v1243, %v1243
      %v1730 = vpack.c.bf16 %v1245, %v1245
      %v1731 = vpack.c.bf16 %v1247, %v1247
      %v1732 = vpack.c.bf16 %v1433, %v1433
      %v1733 = vpack.c.bf16 %v1435, %v1435
      %v1734 = vpack.c.bf16 %v1437, %v1437
      %v1735 = vpack.c.bf16 %v1439, %v1439
      %v1736 = vpack.c.bf16 %v827, %v827
      %v1737 = vpack.c.bf16 %v829, %v829
      %v1738 = vpack.c.bf16 %v832, %v832
      %v1739 = vpack.c.bf16 %v834, %v834
      %v1740 = vpack.c.bf16 %v1057, %v1057
      %v1741 = vpack.c.bf16 %v1059, %v1059
      %v1742 = vpack.c.bf16 %v1061, %v1061
      %v1743 = vpack.c.bf16 %v1063, %v1063
      %v1744 = vpack.c.bf16 %v1249, %v1249
      %v1745 = vpack.c.bf16 %v1251, %v1251
      %v1746 = vpack.c.bf16 %v1253, %v1253
      %v1747 = vpack.c.bf16 %v1255, %v1255
      %v1748 = vpack.c.bf16 %v1441, %v1441
      %v1749 = vpack.c.bf16 %v1443, %v1443
      %v1750 = vpack.c.bf16 %v1445, %v1445
      %v1751 = vpack.c.bf16 %v1447, %v1447
      %v1752 = vpack.c.bf16 %v854, %v854
      %v1753 = vpack.c.bf16 %v856, %v856
      %v1754 = vpack.c.bf16 %v859, %v859
      %v1755 = vpack.c.bf16 %v861, %v861
      %v1756 = vpack.c.bf16 %v1065, %v1065
      %v1757 = vpack.c.bf16 %v1067, %v1067
      %v1758 = vpack.c.bf16 %v1069, %v1069
      %v1759 = vpack.c.bf16 %v1071, %v1071
      %v1760 = vpack.c.bf16 %v1257, %v1257
      %v1761 = vpack.c.bf16 %v1259, %v1259
      %v1762 = vpack.c.bf16 %v1261, %v1261
      %v1763 = vpack.c.bf16 %v1263, %v1263
      %v1764 = vpack.c.bf16 %v1449, %v1449
      %v1765 = vpack.c.bf16 %v1451, %v1451
      %v1766 = vpack.c.bf16 %v1453, %v1453
      %v1767 = vpack.c.bf16 %v1455, %v1455
      %v1768 = vpack.c.bf16 %v879, %v879
      %v1769 = vpack.c.bf16 %v881, %v881
      %v1770 = vpack.c.bf16 %v884, %v884
      %v1771 = vpack.c.bf16 %v886, %v886
      %v1772 = vpack.c.bf16 %v1073, %v1073
      %v1773 = vpack.c.bf16 %v1075, %v1075
      %v1774 = vpack.c.bf16 %v1077, %v1077
      %v1775 = vpack.c.bf16 %v1079, %v1079
      %v1776 = vpack.c.bf16 %v1265, %v1265
      %v1777 = vpack.c.bf16 %v1267, %v1267
      %v1778 = vpack.c.bf16 %v1269, %v1269
      %v1779 = vpack.c.bf16 %v1271, %v1271
      %v1780 = vpack.c.bf16 %v1457, %v1457
      %v1781 = vpack.c.bf16 %v1459, %v1459
      %v1782 = vpack.c.bf16 %v1461, %v1461
      %v1783 = vpack.c.bf16 %v1463, %v1463
      %v1800 = vunpack.c.l.b16 %v1528
      %v1801 = vunpack.c.l.b16 %v1529
      %v1802 = vunpack.c.l.b16 %v1530
      %v1803 = vunpack.c.l.b16 %v1531
      %v1804 = vunpack.c.l.b16 %v1532
      %v1805 = vunpack.c.l.b16 %v1533
      %v1806 = vunpack.c.l.b16 %v1534
      %v1807 = vunpack.c.l.b16 %v1535
      %v1808 = vunpack.c.l.b16 %v1536
      %v1809 = vunpack.c.l.b16 %v1537
      %v1810 = vunpack.c.l.b16 %v1538
      %v1811 = vunpack.c.l.b16 %v1539
      %v1812 = vunpack.c.l.b16 %v1540
      %v1813 = vunpack.c.l.b16 %v1541
      %v1814 = vunpack.c.l.b16 %v1542
      %v1815 = vunpack.c.l.b16 %v1543
      %v1816 = vpack.c.b16 %v1801, %v1800
      %v1817 = vpack.c.b16 %v1803, %v1802
      %v1818 = vpack.c.b16 %v1805, %v1804
      %v1819 = vpack.c.b16 %v1807, %v1806
      %v1820 = vpack.c.b16 %v1809, %v1808
      %v1821 = vpack.c.b16 %v1811, %v1810
      %v1822 = vpack.c.b16 %v1813, %v1812
      %v1823 = vpack.c.b16 %v1815, %v1814
      %1832 = vmatpush.bf16.msra.mxu0 %v1823
      %1833 = vmatpush.bf16.msra.mxu0 %v1822
      %1834 = vmatpush.bf16.msra.mxu0 %v1821
      %1835 = vmatpush.bf16.msra.mxu0 %v1820
      %1836 = vmatpush.bf16.msra.mxu0 %v1819
      %1837 = vmatpush.bf16.msra.mxu0 %v1818
      %1838 = vmatpush.bf16.msra.mxu0 %v1817
      %1839 = vmatpush.bf16.msra.mxu0 %v1816
      %1840 = vmatmul.bf16.gmra.mxu0 %v402
      %v1841 = vpop.f32.mrf.mxu0
      %v1842 = vadd.f32 0.0, %v1841
      %v1843 = vpop.f32.mrf.mxu0
      %1844 = vdwg.mxu0
      %v1861 = vunpack.c.l.b16 %v1544
      %v1862 = vunpack.c.l.b16 %v1545
      %v1863 = vunpack.c.l.b16 %v1546
      %v1864 = vunpack.c.l.b16 %v1547
      %v1865 = vunpack.c.l.b16 %v1548
      %v1866 = vunpack.c.l.b16 %v1549
      %v1867 = vunpack.c.l.b16 %v1550
      %v1868 = vunpack.c.l.b16 %v1551
      %v1869 = vunpack.c.l.b16 %v1552
      %v1870 = vunpack.c.l.b16 %v1553
      %v1871 = vunpack.c.l.b16 %v1554
      %v1872 = vunpack.c.l.b16 %v1555
      %v1873 = vunpack.c.l.b16 %v1556
      %v1874 = vunpack.c.l.b16 %v1557
      %v1875 = vunpack.c.l.b16 %v1558
      %v1876 = vunpack.c.l.b16 %v1559
      %v1877 = vpack.c.b16 %v1862, %v1861
      %v1878 = vpack.c.b16 %v1864, %v1863
      %v1879 = vpack.c.b16 %v1866, %v1865
      %v1880 = vpack.c.b16 %v1868, %v1867
      %v1881 = vpack.c.b16 %v1870, %v1869
      %v1882 = vpack.c.b16 %v1872, %v1871
      %v1883 = vpack.c.b16 %v1874, %v1873
      %v1884 = vpack.c.b16 %v1876, %v1875
      %1893 = vmatpush.bf16.msra.mxu0 %v1884
      %1894 = vmatpush.bf16.msra.mxu0 %v1883
      %1895 = vmatpush.bf16.msra.mxu0 %v1882
      %1896 = vmatpush.bf16.msra.mxu0 %v1881
      %1897 = vmatpush.bf16.msra.mxu0 %v1880
      %1898 = vmatpush.bf16.msra.mxu0 %v1879
      %1899 = vmatpush.bf16.msra.mxu0 %v1878
      %1900 = vmatpush.bf16.msra.mxu0 %v1877
      %1901 = vmatmul.bf16.gmra.mxu0 %v402
      %v1902 = vpop.f32.mrf.mxu0
      %v1903 = vadd.f32 0.0, %v1902
      %v1904 = vpop.f32.mrf.mxu0
      %1905 = vdwg.mxu0
      %v1922 = vunpack.c.l.b16 %v1560
      %v1923 = vunpack.c.l.b16 %v1561
      %v1924 = vunpack.c.l.b16 %v1562
      %v1925 = vunpack.c.l.b16 %v1563
      %v1926 = vunpack.c.l.b16 %v1564
      %v1927 = vunpack.c.l.b16 %v1565
      %v1928 = vunpack.c.l.b16 %v1566
      %v1929 = vunpack.c.l.b16 %v1567
      %v1930 = vunpack.c.l.b16 %v1568
      %v1931 = vunpack.c.l.b16 %v1569
      %v1932 = vunpack.c.l.b16 %v1570
      %v1933 = vunpack.c.l.b16 %v1571
      %v1934 = vunpack.c.l.b16 %v1572
      %v1935 = vunpack.c.l.b16 %v1573
      %v1936 = vunpack.c.l.b16 %v1574
      %v1937 = vunpack.c.l.b16 %v1575
      %v1938 = vpack.c.b16 %v1923, %v1922
      %v1939 = vpack.c.b16 %v1925, %v1924
      %v1940 = vpack.c.b16 %v1927, %v1926
      %v1941 = vpack.c.b16 %v1929, %v1928
      %v1942 = vpack.c.b16 %v1931, %v1930
      %v1943 = vpack.c.b16 %v1933, %v1932
      %v1944 = vpack.c.b16 %v1935, %v1934
      %v1945 = vpack.c.b16 %v1937, %v1936
      %1954 = vmatpush.bf16.msra.mxu0 %v1945
      %1955 = vmatpush.bf16.msra.mxu0 %v1944
      %1956 = vmatpush.bf16.msra.mxu0 %v1943
      %1957 = vmatpush.bf16.msra.mxu0 %v1942
      %1958 = vmatpush.bf16.msra.mxu0 %v1941
      %1959 = vmatpush.bf16.msra.mxu0 %v1940
      %1960 = vmatpush.bf16.msra.mxu0 %v1939
      %1961 = vmatpush.bf16.msra.mxu0 %v1938
      %1962 = vmatmul.bf16.gmra.mxu0 %v402
      %v1963 = vpop.f32.mrf.mxu0
      %v1964 = vadd.f32 0.0, %v1963
      %v1965 = vpop.f32.mrf.mxu0
      %1966 = vdwg.mxu0
      %v1983 = vunpack.c.l.b16 %v1576
      %v1984 = vunpack.c.l.b16 %v1577
      %v1985 = vunpack.c.l.b16 %v1578
      %v1986 = vunpack.c.l.b16 %v1579
      %v1987 = vunpack.c.l.b16 %v1580
      %v1988 = vunpack.c.l.b16 %v1581
      %v1989 = vunpack.c.l.b16 %v1582
      %v1990 = vunpack.c.l.b16 %v1583
      %v1991 = vunpack.c.l.b16 %v1584
      %v1992 = vunpack.c.l.b16 %v1585
      %v1993 = vunpack.c.l.b16 %v1586
      %v1994 = vunpack.c.l.b16 %v1587
      %v1995 = vunpack.c.l.b16 %v1588
      %v1996 = vunpack.c.l.b16 %v1589
      %v1997 = vunpack.c.l.b16 %v1590
      %v1998 = vunpack.c.l.b16 %v1591
      %v1999 = vpack.c.b16 %v1984, %v1983
      %v2000 = vpack.c.b16 %v1986, %v1985
      %v2001 = vpack.c.b16 %v1988, %v1987
      %v2002 = vpack.c.b16 %v1990, %v1989
      %v2003 = vpack.c.b16 %v1992, %v1991
      %v2004 = vpack.c.b16 %v1994, %v1993
      %v2005 = vpack.c.b16 %v1996, %v1995
      %v2006 = vpack.c.b16 %v1998, %v1997
      %2015 = vmatpush.bf16.msra.mxu0 %v2006
      %2016 = vmatpush.bf16.msra.mxu0 %v2005
      %2017 = vmatpush.bf16.msra.mxu0 %v2004
      %2018 = vmatpush.bf16.msra.mxu0 %v2003
      %2019 = vmatpush.bf16.msra.mxu0 %v2002
      %2020 = vmatpush.bf16.msra.mxu0 %v2001
      %2021 = vmatpush.bf16.msra.mxu0 %v2000
      %2022 = vmatpush.bf16.msra.mxu0 %v1999
      %2023 = vmatmul.bf16.gmra.mxu0 %v402
      %v2024 = vpop.f32.mrf.mxu0
      %v2025 = vadd.f32 0.0, %v2024
      %v2026 = vpop.f32.mrf.mxu0
      %2027 = vdwg.mxu0
      %v2044 = vunpack.c.l.b16 %v1592
      %v2045 = vunpack.c.l.b16 %v1593
      %v2046 = vunpack.c.l.b16 %v1594
      %v2047 = vunpack.c.l.b16 %v1595
      %v2048 = vunpack.c.l.b16 %v1596
      %v2049 = vunpack.c.l.b16 %v1597
      %v2050 = vunpack.c.l.b16 %v1598
      %v2051 = vunpack.c.l.b16 %v1599
      %v2052 = vunpack.c.l.b16 %v1600
      %v2053 = vunpack.c.l.b16 %v1601
      %v2054 = vunpack.c.l.b16 %v1602
      %v2055 = vunpack.c.l.b16 %v1603
      %v2056 = vunpack.c.l.b16 %v1604
      %v2057 = vunpack.c.l.b16 %v1605
      %v2058 = vunpack.c.l.b16 %v1606
      %v2059 = vunpack.c.l.b16 %v1607
      %v2060 = vpack.c.b16 %v2045, %v2044
      %v2061 = vpack.c.b16 %v2047, %v2046
      %v2062 = vpack.c.b16 %v2049, %v2048
      %v2063 = vpack.c.b16 %v2051, %v2050
      %v2064 = vpack.c.b16 %v2053, %v2052
      %v2065 = vpack.c.b16 %v2055, %v2054
      %v2066 = vpack.c.b16 %v2057, %v2056
      %v2067 = vpack.c.b16 %v2059, %v2058
      %2076 = vmatpush.bf16.msra.mxu0 %v2067
      %2077 = vmatpush.bf16.msra.mxu0 %v2066
      %2078 = vmatpush.bf16.msra.mxu0 %v2065
      %2079 = vmatpush.bf16.msra.mxu0 %v2064
      %2080 = vmatpush.bf16.msra.mxu0 %v2063
      %2081 = vmatpush.bf16.msra.mxu0 %v2062
      %2082 = vmatpush.bf16.msra.mxu0 %v2061
      %2083 = vmatpush.bf16.msra.mxu0 %v2060
      %2084 = vmatmul.bf16.gmra.mxu0 %v402
      %v2085 = vpop.f32.mrf.mxu0
      %v2086 = vadd.f32 0.0, %v2085
      %v2087 = vpop.f32.mrf.mxu0
      %2088 = vdwg.mxu0
      %v2105 = vunpack.c.l.b16 %v1608
      %v2106 = vunpack.c.l.b16 %v1609
      %v2107 = vunpack.c.l.b16 %v1610
      %v2108 = vunpack.c.l.b16 %v1611
      %v2109 = vunpack.c.l.b16 %v1612
      %v2110 = vunpack.c.l.b16 %v1613
      %v2111 = vunpack.c.l.b16 %v1614
      %v2112 = vunpack.c.l.b16 %v1615
      %v2113 = vunpack.c.l.b16 %v1616
      %v2114 = vunpack.c.l.b16 %v1617
      %v2115 = vunpack.c.l.b16 %v1618
      %v2116 = vunpack.c.l.b16 %v1619
      %v2117 = vunpack.c.l.b16 %v1620
      %v2118 = vunpack.c.l.b16 %v1621
      %v2119 = vunpack.c.l.b16 %v1622
      %v2120 = vunpack.c.l.b16 %v1623
      %v2121 = vpack.c.b16 %v2106, %v2105
      %v2122 = vpack.c.b16 %v2108, %v2107
      %v2123 = vpack.c.b16 %v2110, %v2109
      %v2124 = vpack.c.b16 %v2112, %v2111
      %v2125 = vpack.c.b16 %v2114, %v2113
      %v2126 = vpack.c.b16 %v2116, %v2115
      %v2127 = vpack.c.b16 %v2118, %v2117
      %v2128 = vpack.c.b16 %v2120, %v2119
      %2137 = vmatpush.bf16.msra.mxu0 %v2128
      %2138 = vmatpush.bf16.msra.mxu0 %v2127
      %2139 = vmatpush.bf16.msra.mxu0 %v2126
      %2140 = vmatpush.bf16.msra.mxu0 %v2125
      %2141 = vmatpush.bf16.msra.mxu0 %v2124
      %2142 = vmatpush.bf16.msra.mxu0 %v2123
      %2143 = vmatpush.bf16.msra.mxu0 %v2122
      %2144 = vmatpush.bf16.msra.mxu0 %v2121
      %2145 = vmatmul.bf16.gmra.mxu0 %v402
      %v2146 = vpop.f32.mrf.mxu0
      %v2147 = vadd.f32 0.0, %v2146
      %v2148 = vpop.f32.mrf.mxu0
      %2149 = vdwg.mxu0
      %v2166 = vunpack.c.l.b16 %v1624
      %v2167 = vunpack.c.l.b16 %v1625
      %v2168 = vunpack.c.l.b16 %v1626
      %v2169 = vunpack.c.l.b16 %v1627
      %v2170 = vunpack.c.l.b16 %v1628
      %v2171 = vunpack.c.l.b16 %v1629
      %v2172 = vunpack.c.l.b16 %v1630
      %v2173 = vunpack.c.l.b16 %v1631
      %v2174 = vunpack.c.l.b16 %v1632
      %v2175 = vunpack.c.l.b16 %v1633
      %v2176 = vunpack.c.l.b16 %v1634
      %v2177 = vunpack.c.l.b16 %v1635
      %v2178 = vunpack.c.l.b16 %v1636
      %v2179 = vunpack.c.l.b16 %v1637
      %v2180 = vunpack.c.l.b16 %v1638
      %v2181 = vunpack.c.l.b16 %v1639
      %v2182 = vpack.c.b16 %v2167, %v2166
      %v2183 = vpack.c.b16 %v2169, %v2168
      %v2184 = vpack.c.b16 %v2171, %v2170
      %v2185 = vpack.c.b16 %v2173, %v2172
      %v2186 = vpack.c.b16 %v2175, %v2174
      %v2187 = vpack.c.b16 %v2177, %v2176
      %v2188 = vpack.c.b16 %v2179, %v2178
      %v2189 = vpack.c.b16 %v2181, %v2180
      %2198 = vmatpush.bf16.msra.mxu0 %v2189
      %2199 = vmatpush.bf16.msra.mxu0 %v2188
      %2200 = vmatpush.bf16.msra.mxu0 %v2187
      %2201 = vmatpush.bf16.msra.mxu0 %v2186
      %2202 = vmatpush.bf16.msra.mxu0 %v2185
      %2203 = vmatpush.bf16.msra.mxu0 %v2184
      %2204 = vmatpush.bf16.msra.mxu0 %v2183
      %2205 = vmatpush.bf16.msra.mxu0 %v2182
      %2206 = vmatmul.bf16.gmra.mxu0 %v402
      %v2207 = vpop.f32.mrf.mxu0
      %v2208 = vadd.f32 0.0, %v2207
      %v2209 = vpop.f32.mrf.mxu0
      %2210 = vdwg.mxu0
      %v2227 = vunpack.c.l.b16 %v1640
      %v2228 = vunpack.c.l.b16 %v1641
      %v2229 = vunpack.c.l.b16 %v1642
      %v2230 = vunpack.c.l.b16 %v1643
      %v2231 = vunpack.c.l.b16 %v1644
      %v2232 = vunpack.c.l.b16 %v1645
      %v2233 = vunpack.c.l.b16 %v1646
      %v2234 = vunpack.c.l.b16 %v1647
      %v2235 = vunpack.c.l.b16 %v1648
      %v2236 = vunpack.c.l.b16 %v1649
      %v2237 = vunpack.c.l.b16 %v1650
      %v2238 = vunpack.c.l.b16 %v1651
      %v2239 = vunpack.c.l.b16 %v1652
      %v2240 = vunpack.c.l.b16 %v1653
      %v2241 = vunpack.c.l.b16 %v1654
      %v2242 = vunpack.c.l.b16 %v1655
      %v2243 = vpack.c.b16 %v2228, %v2227
      %v2244 = vpack.c.b16 %v2230, %v2229
      %v2245 = vpack.c.b16 %v2232, %v2231
      %v2246 = vpack.c.b16 %v2234, %v2233
      %v2247 = vpack.c.b16 %v2236, %v2235
      %v2248 = vpack.c.b16 %v2238, %v2237
      %v2249 = vpack.c.b16 %v2240, %v2239
      %v2250 = vpack.c.b16 %v2242, %v2241
      %2259 = vmatpush.bf16.msra.mxu0 %v2250
      %2260 = vmatpush.bf16.msra.mxu0 %v2249
      %2261 = vmatpush.bf16.msra.mxu0 %v2248
      %2262 = vmatpush.bf16.msra.mxu0 %v2247
      %2263 = vmatpush.bf16.msra.mxu0 %v2246
      %2264 = vmatpush.bf16.msra.mxu0 %v2245
      %2265 = vmatpush.bf16.msra.mxu0 %v2244
      %2266 = vmatpush.bf16.msra.mxu0 %v2243
      %2267 = vmatmul.bf16.gmra.mxu0 %v402
      %v2268 = vpop.f32.mrf.mxu0
      %v2269 = vadd.f32 0.0, %v2268
      %v2270 = vpop.f32.mrf.mxu0
      %2271 = vdwg.mxu0
      %v2288 = vunpack.c.l.b16 %v1656
      %v2289 = vunpack.c.l.b16 %v1657
      %v2290 = vunpack.c.l.b16 %v1658
      %v2291 = vunpack.c.l.b16 %v1659
      %v2292 = vunpack.c.l.b16 %v1660
      %v2293 = vunpack.c.l.b16 %v1661
      %v2294 = vunpack.c.l.b16 %v1662
      %v2295 = vunpack.c.l.b16 %v1663
      %v2296 = vunpack.c.l.b16 %v1664
      %v2297 = vunpack.c.l.b16 %v1665
      %v2298 = vunpack.c.l.b16 %v1666
      %v2299 = vunpack.c.l.b16 %v1667
      %v2300 = vunpack.c.l.b16 %v1668
      %v2301 = vunpack.c.l.b16 %v1669
      %v2302 = vunpack.c.l.b16 %v1670
      %v2303 = vunpack.c.l.b16 %v1671
      %v2304 = vpack.c.b16 %v2289, %v2288
      %v2305 = vpack.c.b16 %v2291, %v2290
      %v2306 = vpack.c.b16 %v2293, %v2292
      %v2307 = vpack.c.b16 %v2295, %v2294
      %v2308 = vpack.c.b16 %v2297, %v2296
      %v2309 = vpack.c.b16 %v2299, %v2298
      %v2310 = vpack.c.b16 %v2301, %v2300
      %v2311 = vpack.c.b16 %v2303, %v2302
      %2320 = vmatpush.bf16.msra.mxu0 %v2311
      %2321 = vmatpush.bf16.msra.mxu0 %v2310
      %2322 = vmatpush.bf16.msra.mxu0 %v2309
      %2323 = vmatpush.bf16.msra.mxu0 %v2308
      %2324 = vmatpush.bf16.msra.mxu0 %v2307
      %2325 = vmatpush.bf16.msra.mxu0 %v2306
      %2326 = vmatpush.bf16.msra.mxu0 %v2305
      %2327 = vmatpush.bf16.msra.mxu0 %v2304
      %2328 = vmatmul.bf16.gmra.mxu0 %v402
      %v2329 = vpop.f32.mrf.mxu0
      %v2330 = vadd.f32 0.0, %v2329
      %v2331 = vpop.f32.mrf.mxu0
      %2332 = vdwg.mxu0
      %v2349 = vunpack.c.l.b16 %v1672
      %v2350 = vunpack.c.l.b16 %v1673
      %v2351 = vunpack.c.l.b16 %v1674
      %v2352 = vunpack.c.l.b16 %v1675
      %v2353 = vunpack.c.l.b16 %v1676
      %v2354 = vunpack.c.l.b16 %v1677
      %v2355 = vunpack.c.l.b16 %v1678
      %v2356 = vunpack.c.l.b16 %v1679
      %v2357 = vunpack.c.l.b16 %v1680
      %v2358 = vunpack.c.l.b16 %v1681
      %v2359 = vunpack.c.l.b16 %v1682
      %v2360 = vunpack.c.l.b16 %v1683
      %v2361 = vunpack.c.l.b16 %v1684
      %v2362 = vunpack.c.l.b16 %v1685
      %v2363 = vunpack.c.l.b16 %v1686
      %v2364 = vunpack.c.l.b16 %v1687
      %v2365 = vpack.c.b16 %v2350, %v2349
      %v2366 = vpack.c.b16 %v2352, %v2351
      %v2367 = vpack.c.b16 %v2354, %v2353
      %v2368 = vpack.c.b16 %v2356, %v2355
      %v2369 = vpack.c.b16 %v2358, %v2357
      %v2370 = vpack.c.b16 %v2360, %v2359
      %v2371 = vpack.c.b16 %v2362, %v2361
      %v2372 = vpack.c.b16 %v2364, %v2363
      %2381 = vmatpush.bf16.msra.mxu0 %v2372
      %2382 = vmatpush.bf16.msra.mxu0 %v2371
      %2383 = vmatpush.bf16.msra.mxu0 %v2370
      %2384 = vmatpush.bf16.msra.mxu0 %v2369
      %2385 = vmatpush.bf16.msra.mxu0 %v2368
      %2386 = vmatpush.bf16.msra.mxu0 %v2367
      %2387 = vmatpush.bf16.msra.mxu0 %v2366
      %2388 = vmatpush.bf16.msra.mxu0 %v2365
      %2389 = vmatmul.bf16.gmra.mxu0 %v402
      %v2390 = vpop.f32.mrf.mxu0
      %v2391 = vadd.f32 0.0, %v2390
      %v2392 = vpop.f32.mrf.mxu0
      %2393 = vdwg.mxu0
      %v2410 = vunpack.c.l.b16 %v1688
      %v2411 = vunpack.c.l.b16 %v1689
      %v2412 = vunpack.c.l.b16 %v1690
      %v2413 = vunpack.c.l.b16 %v1691
      %v2414 = vunpack.c.l.b16 %v1692
      %v2415 = vunpack.c.l.b16 %v1693
      %v2416 = vunpack.c.l.b16 %v1694
      %v2417 = vunpack.c.l.b16 %v1695
      %v2418 = vunpack.c.l.b16 %v1696
      %v2419 = vunpack.c.l.b16 %v1697
      %v2420 = vunpack.c.l.b16 %v1698
      %v2421 = vunpack.c.l.b16 %v1699
      %v2422 = vunpack.c.l.b16 %v1700
      %v2423 = vunpack.c.l.b16 %v1701
      %v2424 = vunpack.c.l.b16 %v1702
      %v2425 = vunpack.c.l.b16 %v1703
      %v2426 = vpack.c.b16 %v2411, %v2410
      %v2427 = vpack.c.b16 %v2413, %v2412
      %v2428 = vpack.c.b16 %v2415, %v2414
      %v2429 = vpack.c.b16 %v2417, %v2416
      %v2430 = vpack.c.b16 %v2419, %v2418
      %v2431 = vpack.c.b16 %v2421, %v2420
      %v2432 = vpack.c.b16 %v2423, %v2422
      %v2433 = vpack.c.b16 %v2425, %v2424
      %2442 = vmatpush.bf16.msra.mxu0 %v2433
      %2443 = vmatpush.bf16.msra.mxu0 %v2432
      %2444 = vmatpush.bf16.msra.mxu0 %v2431
      %2445 = vmatpush.bf16.msra.mxu0 %v2430
      %2446 = vmatpush.bf16.msra.mxu0 %v2429
      %2447 = vmatpush.bf16.msra.mxu0 %v2428
      %2448 = vmatpush.bf16.msra.mxu0 %v2427
      %2449 = vmatpush.bf16.msra.mxu0 %v2426
      %2450 = vmatmul.bf16.gmra.mxu0 %v402
      %v2451 = vpop.f32.mrf.mxu0
      %v2452 = vadd.f32 0.0, %v2451
      %v2453 = vpop.f32.mrf.mxu0
      %2454 = vdwg.mxu0
      %v2471 = vunpack.c.l.b16 %v1704
      %v2472 = vunpack.c.l.b16 %v1705
      %v2473 = vunpack.c.l.b16 %v1706
      %v2474 = vunpack.c.l.b16 %v1707
      %v2475 = vunpack.c.l.b16 %v1708
      %v2476 = vunpack.c.l.b16 %v1709
      %v2477 = vunpack.c.l.b16 %v1710
      %v2478 = vunpack.c.l.b16 %v1711
      %v2479 = vunpack.c.l.b16 %v1712
      %v2480 = vunpack.c.l.b16 %v1713
      %v2481 = vunpack.c.l.b16 %v1714
      %v2482 = vunpack.c.l.b16 %v1715
      %v2483 = vunpack.c.l.b16 %v1716
      %v2484 = vunpack.c.l.b16 %v1717
      %v2485 = vunpack.c.l.b16 %v1718
      %v2486 = vunpack.c.l.b16 %v1719
      %v2487 = vpack.c.b16 %v2472, %v2471
      %v2488 = vpack.c.b16 %v2474, %v2473
      %v2489 = vpack.c.b16 %v2476, %v2475
      %v2490 = vpack.c.b16 %v2478, %v2477
      %v2491 = vpack.c.b16 %v2480, %v2479
      %v2492 = vpack.c.b16 %v2482, %v2481
      %v2493 = vpack.c.b16 %v2484, %v2483
      %v2494 = vpack.c.b16 %v2486, %v2485
      %2503 = vmatpush.bf16.msra.mxu0 %v2494
      %2504 = vmatpush.bf16.msra.mxu0 %v2493
      %2505 = vmatpush.bf16.msra.mxu0 %v2492
      %2506 = vmatpush.bf16.msra.mxu0 %v2491
      %2507 = vmatpush.bf16.msra.mxu0 %v2490
      %2508 = vmatpush.bf16.msra.mxu0 %v2489
      %2509 = vmatpush.bf16.msra.mxu0 %v2488
      %2510 = vmatpush.bf16.msra.mxu0 %v2487
      %2511 = vmatmul.bf16.gmra.mxu0 %v402
      %v2512 = vpop.f32.mrf.mxu0
      %v2513 = vadd.f32 0.0, %v2512
      %v2514 = vpop.f32.mrf.mxu0
      %2515 = vdwg.mxu0
      %v2532 = vunpack.c.l.b16 %v1720
      %v2533 = vunpack.c.l.b16 %v1721
      %v2534 = vunpack.c.l.b16 %v1722
      %v2535 = vunpack.c.l.b16 %v1723
      %v2536 = vunpack.c.l.b16 %v1724
      %v2537 = vunpack.c.l.b16 %v1725
      %v2538 = vunpack.c.l.b16 %v1726
      %v2539 = vunpack.c.l.b16 %v1727
      %v2540 = vunpack.c.l.b16 %v1728
      %v2541 = vunpack.c.l.b16 %v1729
      %v2542 = vunpack.c.l.b16 %v1730
      %v2543 = vunpack.c.l.b16 %v1731
      %v2544 = vunpack.c.l.b16 %v1732
      %v2545 = vunpack.c.l.b16 %v1733
      %v2546 = vunpack.c.l.b16 %v1734
      %v2547 = vunpack.c.l.b16 %v1735
      %v2548 = vpack.c.b16 %v2533, %v2532
      %v2549 = vpack.c.b16 %v2535, %v2534
      %v2550 = vpack.c.b16 %v2537, %v2536
      %v2551 = vpack.c.b16 %v2539, %v2538
      %v2552 = vpack.c.b16 %v2541, %v2540
      %v2553 = vpack.c.b16 %v2543, %v2542
      %v2554 = vpack.c.b16 %v2545, %v2544
      %v2555 = vpack.c.b16 %v2547, %v2546
      %2564 = vmatpush.bf16.msra.mxu0 %v2555
      %2565 = vmatpush.bf16.msra.mxu0 %v2554
      %2566 = vmatpush.bf16.msra.mxu0 %v2553
      %2567 = vmatpush.bf16.msra.mxu0 %v2552
      %2568 = vmatpush.bf16.msra.mxu0 %v2551
      %2569 = vmatpush.bf16.msra.mxu0 %v2550
      %2570 = vmatpush.bf16.msra.mxu0 %v2549
      %2571 = vmatpush.bf16.msra.mxu0 %v2548
      %2572 = vmatmul.bf16.gmra.mxu0 %v402
      %v2573 = vpop.f32.mrf.mxu0
      %v2574 = vadd.f32 0.0, %v2573
      %v2575 = vpop.f32.mrf.mxu0
      %2576 = vdwg.mxu0
      %v2593 = vunpack.c.l.b16 %v1736
      %v2594 = vunpack.c.l.b16 %v1737
      %v2595 = vunpack.c.l.b16 %v1738
      %v2596 = vunpack.c.l.b16 %v1739
      %v2597 = vunpack.c.l.b16 %v1740
      %v2598 = vunpack.c.l.b16 %v1741
      %v2599 = vunpack.c.l.b16 %v1742
      %v2600 = vunpack.c.l.b16 %v1743
      %v2601 = vunpack.c.l.b16 %v1744
      %v2602 = vunpack.c.l.b16 %v1745
      %v2603 = vunpack.c.l.b16 %v1746
      %v2604 = vunpack.c.l.b16 %v1747
      %v2605 = vunpack.c.l.b16 %v1748
      %v2606 = vunpack.c.l.b16 %v1749
      %v2607 = vunpack.c.l.b16 %v1750
      %v2608 = vunpack.c.l.b16 %v1751
      %v2609 = vpack.c.b16 %v2594, %v2593
      %v2610 = vpack.c.b16 %v2596, %v2595
      %v2611 = vpack.c.b16 %v2598, %v2597
      %v2612 = vpack.c.b16 %v2600, %v2599
      %v2613 = vpack.c.b16 %v2602, %v2601
      %v2614 = vpack.c.b16 %v2604, %v2603
      %v2615 = vpack.c.b16 %v2606, %v2605
      %v2616 = vpack.c.b16 %v2608, %v2607
      %2625 = vmatpush.bf16.msra.mxu0 %v2616
      %2626 = vmatpush.bf16.msra.mxu0 %v2615
      %2627 = vmatpush.bf16.msra.mxu0 %v2614
      %2628 = vmatpush.bf16.msra.mxu0 %v2613
      %2629 = vmatpush.bf16.msra.mxu0 %v2612
      %2630 = vmatpush.bf16.msra.mxu0 %v2611
      %2631 = vmatpush.bf16.msra.mxu0 %v2610
      %2632 = vmatpush.bf16.msra.mxu0 %v2609
      %2633 = vmatmul.bf16.gmra.mxu0 %v402
      %v2634 = vpop.f32.mrf.mxu0
      %v2635 = vadd.f32 0.0, %v2634
      %v2636 = vpop.f32.mrf.mxu0
      %2637 = vdwg.mxu0
      %v2654 = vunpack.c.l.b16 %v1752
      %v2655 = vunpack.c.l.b16 %v1753
      %v2656 = vunpack.c.l.b16 %v1754
      %v2657 = vunpack.c.l.b16 %v1755
      %v2658 = vunpack.c.l.b16 %v1756
      %v2659 = vunpack.c.l.b16 %v1757
      %v2660 = vunpack.c.l.b16 %v1758
      %v2661 = vunpack.c.l.b16 %v1759
      %v2662 = vunpack.c.l.b16 %v1760
      %v2663 = vunpack.c.l.b16 %v1761
      %v2664 = vunpack.c.l.b16 %v1762
      %v2665 = vunpack.c.l.b16 %v1763
      %v2666 = vunpack.c.l.b16 %v1764
      %v2667 = vunpack.c.l.b16 %v1765
      %v2668 = vunpack.c.l.b16 %v1766
      %v2669 = vunpack.c.l.b16 %v1767
      %v2670 = vpack.c.b16 %v2655, %v2654
      %v2671 = vpack.c.b16 %v2657, %v2656
      %v2672 = vpack.c.b16 %v2659, %v2658
      %v2673 = vpack.c.b16 %v2661, %v2660
      %v2674 = vpack.c.b16 %v2663, %v2662
      %v2675 = vpack.c.b16 %v2665, %v2664
      %v2676 = vpack.c.b16 %v2667, %v2666
      %v2677 = vpack.c.b16 %v2669, %v2668
      %2686 = vmatpush.bf16.msra.mxu0 %v2677
      %2687 = vmatpush.bf16.msra.mxu0 %v2676
      %2688 = vmatpush.bf16.msra.mxu0 %v2675
      %2689 = vmatpush.bf16.msra.mxu0 %v2674
      %2690 = vmatpush.bf16.msra.mxu0 %v2673
      %2691 = vmatpush.bf16.msra.mxu0 %v2672
      %2692 = vmatpush.bf16.msra.mxu0 %v2671
      %2693 = vmatpush.bf16.msra.mxu0 %v2670
      %2694 = vmatmul.bf16.gmra.mxu0 %v402
      %v2695 = vpop.f32.mrf.mxu0
      %v2696 = vadd.f32 0.0, %v2695
      %v2697 = vpop.f32.mrf.mxu0
      %2698 = vdwg.mxu0
      %v2715 = vunpack.c.l.b16 %v1768
      %v2716 = vunpack.c.l.b16 %v1769
      %v2717 = vunpack.c.l.b16 %v1770
      %v2718 = vunpack.c.l.b16 %v1771
      %v2719 = vunpack.c.l.b16 %v1772
      %v2720 = vunpack.c.l.b16 %v1773
      %v2721 = vunpack.c.l.b16 %v1774
      %v2722 = vunpack.c.l.b16 %v1775
      %v2723 = vunpack.c.l.b16 %v1776
      %v2724 = vunpack.c.l.b16 %v1777
      %v2725 = vunpack.c.l.b16 %v1778
      %v2726 = vunpack.c.l.b16 %v1779
      %v2727 = vunpack.c.l.b16 %v1780
      %v2728 = vunpack.c.l.b16 %v1781
      %v2729 = vunpack.c.l.b16 %v1782
      %v2730 = vunpack.c.l.b16 %v1783
      %v2731 = vpack.c.b16 %v2716, %v2715
      %v2732 = vpack.c.b16 %v2718, %v2717
      %v2733 = vpack.c.b16 %v2720, %v2719
      %v2734 = vpack.c.b16 %v2722, %v2721
      %v2735 = vpack.c.b16 %v2724, %v2723
      %v2736 = vpack.c.b16 %v2726, %v2725
      %v2737 = vpack.c.b16 %v2728, %v2727
      %v2738 = vpack.c.b16 %v2730, %v2729
      %2747 = vmatpush.bf16.msra.mxu0 %v2738
      %2748 = vmatpush.bf16.msra.mxu0 %v2737
      %2749 = vmatpush.bf16.msra.mxu0 %v2736
      %2750 = vmatpush.bf16.msra.mxu0 %v2735
      %2751 = vmatpush.bf16.msra.mxu0 %v2734
      %2752 = vmatpush.bf16.msra.mxu0 %v2733
      %2753 = vmatpush.bf16.msra.mxu0 %v2732
      %2754 = vmatpush.bf16.msra.mxu0 %v2731
      %2755 = vmatmul.bf16.gmra.mxu0 %v402
      %v2756 = vpop.f32.mrf.mxu0
      %v2757 = vadd.f32 0.0, %v2756
      %v2758 = vpop.f32.mrf.mxu0
      %2759 = vdwg.mxu0
      %vm2760 = vcmask 130048
      %v2761 = vsel %vm2760, %v1842, 0.0
      %2762 = vadd.xlane.f32.xlu0 %v2761
      %v2763 = vpop.xlane.xlu0 %2762
      %v2764 = vsel %vm2760, %v1903, 0.0
      %2765 = vadd.xlane.f32.xlu0 %v2764
      %v2766 = vpop.xlane.xlu0 %2765
      %v2767 = vsel %vm2760, %v1964, 0.0
      %2768 = vadd.xlane.f32.xlu0 %v2767
      %v2769 = vpop.xlane.xlu0 %2768
      %v2770 = vsel %vm2760, %v2025, 0.0
      %2771 = vadd.xlane.f32.xlu0 %v2770
      %v2772 = vpop.xlane.xlu0 %2771
      %v2773 = vsel %vm2760, %v2086, 0.0
      %2774 = vadd.xlane.f32.xlu0 %v2773
      %v2775 = vpop.xlane.xlu0 %2774
      %v2776 = vsel %vm2760, %v2147, 0.0
      %2777 = vadd.xlane.f32.xlu0 %v2776
      %v2778 = vpop.xlane.xlu0 %2777
      %v2779 = vsel %vm2760, %v2208, 0.0
      %2780 = vadd.xlane.f32.xlu0 %v2779
      %v2781 = vpop.xlane.xlu0 %2780
      %v2782 = vsel %vm2760, %v2269, 0.0
      %2783 = vadd.xlane.f32.xlu0 %v2782
      %v2784 = vpop.xlane.xlu0 %2783
      %v2785 = vsel %vm2760, %v2330, 0.0
      %2786 = vadd.xlane.f32.xlu0 %v2785
      %v2787 = vpop.xlane.xlu0 %2786
      %v2788 = vsel %vm2760, %v2391, 0.0
      %2789 = vadd.xlane.f32.xlu0 %v2788
      %v2790 = vpop.xlane.xlu0 %2789
      %v2791 = vsel %vm2760, %v2452, 0.0
      %2792 = vadd.xlane.f32.xlu0 %v2791
      %v2793 = vpop.xlane.xlu0 %2792
      %v2794 = vsel %vm2760, %v2513, 0.0
      %2795 = vadd.xlane.f32.xlu0 %v2794
      %v2796 = vpop.xlane.xlu0 %2795
      %v2797 = vsel %vm2760, %v2574, 0.0
      %2798 = vadd.xlane.f32.xlu0 %v2797
      %v2799 = vpop.xlane.xlu0 %2798
      %v2800 = vsel %vm2760, %v2635, 0.0
      %2801 = vadd.xlane.f32.xlu0 %v2800
      %v2802 = vpop.xlane.xlu0 %2801
      %v2803 = vsel %vm2760, %v2696, 0.0
      %2804 = vadd.xlane.f32.xlu0 %v2803
      %v2805 = vpop.xlane.xlu0 %2804
      %v2806 = vsel %vm2760, %v2757, 0.0
      %2807 = vadd.xlane.f32.xlu0 %v2806
      %v2808 = vpop.xlane.xlu0 %2807
      %v2809 = vadd.f32 %v2763, %v2766
      %v2810 = vadd.f32 %v2809, %v2769
      %v2811 = vadd.f32 %v2810, %v2772
      %v2812 = vadd.f32 %v2811, %v2775
      %v2813 = vadd.f32 %v2812, %v2778
      %v2814 = vadd.f32 %v2813, %v2781
      %v2815 = vadd.f32 %v2814, %v2784
      %v2816 = vadd.f32 %v2815, %v2787
      %v2817 = vadd.f32 %v2816, %v2790
      %v2818 = vadd.f32 %v2817, %v2793
      %v2819 = vadd.f32 %v2818, %v2796
      %v2820 = vadd.f32 %v2819, %v2799
      %v2821 = vadd.f32 %v2820, %v2802
      %v2822 = vadd.f32 %v2821, %v2805
      %v2823 = vadd.f32 %v2822, %v2808
      %v2824 = vrcp.pop 256.0
      %v2825 = vmul.f32 256.0, %v2824
      %v2826 = vsub.f32 1.0, %v2825
      %v2827 = vmul.f32 %v2824, %v2826
      %v2828 = vadd.f32 %v2824, %v2827
      %vm2829 = vweird.f32 %v2824
      %v2830 = vsel %vm2829, %v2824, %v2828
      %v2831 = vmul.f32 %v2823, %v2830
      %v2832 = vsub.f32 %v1842, %v2831
      %v2833 = vsub.f32 %v1903, %v2831
      %v2834 = vsub.f32 %v1964, %v2831
      %v2835 = vsub.f32 %v2025, %v2831
      %v2836 = vsub.f32 %v2086, %v2831
      %v2837 = vsub.f32 %v2147, %v2831
      %v2838 = vsub.f32 %v2208, %v2831
      %v2839 = vsub.f32 %v2269, %v2831
      %v2840 = vsub.f32 %v2330, %v2831
      %v2841 = vsub.f32 %v2391, %v2831
      %v2842 = vsub.f32 %v2452, %v2831
      %v2843 = vsub.f32 %v2513, %v2831
      %v2844 = vsub.f32 %v2574, %v2831
      %v2845 = vsub.f32 %v2635, %v2831
      %v2846 = vsub.f32 %v2696, %v2831
      %v2847 = vsub.f32 %v2757, %v2831
      %v2848 = vmul.f32 %v2832, %v2832
      %v2849 = vmul.f32 %v2833, %v2833
      %v2850 = vmul.f32 %v2834, %v2834
      %v2851 = vmul.f32 %v2835, %v2835
      %v2852 = vmul.f32 %v2836, %v2836
      %v2853 = vmul.f32 %v2837, %v2837
      %v2854 = vmul.f32 %v2838, %v2838
      %v2855 = vmul.f32 %v2839, %v2839
      %v2856 = vmul.f32 %v2840, %v2840
      %v2857 = vmul.f32 %v2841, %v2841
      %v2858 = vmul.f32 %v2842, %v2842
      %v2859 = vmul.f32 %v2843, %v2843
      %v2860 = vmul.f32 %v2844, %v2844
      %v2861 = vmul.f32 %v2845, %v2845
      %v2862 = vmul.f32 %v2846, %v2846
      %v2863 = vmul.f32 %v2847, %v2847
      %v2864 = vsel %vm2760, %v2848, 0.0
      %2865 = vadd.xlane.f32.xlu0 %v2864
      %v2866 = vpop.xlane.xlu0 %2865
      %v2867 = vsel %vm2760, %v2849, 0.0
      %2868 = vadd.xlane.f32.xlu0 %v2867
      %v2869 = vpop.xlane.xlu0 %2868
      %v2870 = vsel %vm2760, %v2850, 0.0
      %2871 = vadd.xlane.f32.xlu0 %v2870
      %v2872 = vpop.xlane.xlu0 %2871
      %v2873 = vsel %vm2760, %v2851, 0.0
      %2874 = vadd.xlane.f32.xlu0 %v2873
      %v2875 = vpop.xlane.xlu0 %2874
      %v2876 = vsel %vm2760, %v2852, 0.0
      %2877 = vadd.xlane.f32.xlu0 %v2876
      %v2878 = vpop.xlane.xlu0 %2877
      %v2879 = vsel %vm2760, %v2853, 0.0
      %2880 = vadd.xlane.f32.xlu0 %v2879
      %v2881 = vpop.xlane.xlu0 %2880
      %v2882 = vsel %vm2760, %v2854, 0.0
      %2883 = vadd.xlane.f32.xlu0 %v2882
      %v2884 = vpop.xlane.xlu0 %2883
      %v2885 = vsel %vm2760, %v2855, 0.0
      %2886 = vadd.xlane.f32.xlu0 %v2885
      %v2887 = vpop.xlane.xlu0 %2886
      %v2888 = vsel %vm2760, %v2856, 0.0
      %2889 = vadd.xlane.f32.xlu0 %v2888
      %v2890 = vpop.xlane.xlu0 %2889
      %v2891 = vsel %vm2760, %v2857, 0.0
      %2892 = vadd.xlane.f32.xlu0 %v2891
      %v2893 = vpop.xlane.xlu0 %2892
      %v2894 = vsel %vm2760, %v2858, 0.0
      %2895 = vadd.xlane.f32.xlu0 %v2894
      %v2896 = vpop.xlane.xlu0 %2895
      %v2897 = vsel %vm2760, %v2859, 0.0
      %2898 = vadd.xlane.f32.xlu0 %v2897
      %v2899 = vpop.xlane.xlu0 %2898
      %v2900 = vsel %vm2760, %v2860, 0.0
      %2901 = vadd.xlane.f32.xlu0 %v2900
      %v2902 = vpop.xlane.xlu0 %2901
      %v2903 = vsel %vm2760, %v2861, 0.0
      %2904 = vadd.xlane.f32.xlu0 %v2903
      %v2905 = vpop.xlane.xlu0 %2904
      %v2906 = vsel %vm2760, %v2862, 0.0
      %2907 = vadd.xlane.f32.xlu0 %v2906
      %v2908 = vpop.xlane.xlu0 %2907
      %v2909 = vsel %vm2760, %v2863, 0.0
      %2910 = vadd.xlane.f32.xlu0 %v2909
      %v2911 = vpop.xlane.xlu0 %2910
      %v2912 = vadd.f32 %v2866, %v2869
      %v2913 = vadd.f32 %v2912, %v2872
      %v2914 = vadd.f32 %v2913, %v2875
      %v2915 = vadd.f32 %v2914, %v2878
      %v2916 = vadd.f32 %v2915, %v2881
      %v2917 = vadd.f32 %v2916, %v2884
      %v2918 = vadd.f32 %v2917, %v2887
      %v2919 = vadd.f32 %v2918, %v2890
      %v2920 = vadd.f32 %v2919, %v2893
      %v2921 = vadd.f32 %v2920, %v2896
      %v2922 = vadd.f32 %v2921, %v2899
      %v2923 = vadd.f32 %v2922, %v2902
      %v2924 = vadd.f32 %v2923, %v2905
      %v2925 = vadd.f32 %v2924, %v2908
      %v2926 = vadd.f32 %v2925, %v2911
      %v2927 = vmul.f32 %v2926, %v2830
      %v2928 = vadd.f32 %v2927, 1e-05
      %v2929 = vrsqrt.pop %v2928
      %v2930 = vmul.f32 %v2929, %v2928
      %v2931 = vmul.f32 %v2930, %v2929
      %v2932 = vmul.f32 0.5, %v2931
      %v2933 = vsub.f32 1.5, %v2932
      %v2934 = vmul.f32 %v2929, %v2933
      %vm2935 = vweird.f32 %v2928
      %vm2936 = vweird.f32 %v2929
      %vm2937 = vmor %vm2935, %vm2936
      %v2938 = vsel %vm2937, %v2929, %v2934
      %v2939 = vmul.f32 %v2832, %v2938
      %v2940 = vmul.f32 %v2833, %v2938
      %v2941 = vmul.f32 %v2834, %v2938
      %v2942 = vmul.f32 %v2835, %v2938
      %v2943 = vmul.f32 %v2836, %v2938
      %v2944 = vmul.f32 %v2837, %v2938
      %v2945 = vmul.f32 %v2838, %v2938
      %v2946 = vmul.f32 %v2839, %v2938
      %v2947 = vmul.f32 %v2840, %v2938
      %v2948 = vmul.f32 %v2841, %v2938
      %v2949 = vmul.f32 %v2842, %v2938
      %v2950 = vmul.f32 %v2843, %v2938
      %v2951 = vmul.f32 %v2844, %v2938
      %v2952 = vmul.f32 %v2845, %v2938
      %v2953 = vmul.f32 %v2846, %v2938
      %v2954 = vmul.f32 %v2847, %v2938
      %v2955 = vmul.f32 %v2939, 0.2
      %v2956 = vmul.f32 %v2940, 0.2
      %v2957 = vmul.f32 %v2941, 0.2
      %v2958 = vmul.f32 %v2942, 0.2
      %v2959 = vmul.f32 %v2943, 0.2
      %v2960 = vmul.f32 %v2944, 0.2
      %v2961 = vmul.f32 %v2945, 0.2
      %v2962 = vmul.f32 %v2946, 0.2
      %v2963 = vmul.f32 %v2947, 0.2
      %v2964 = vmul.f32 %v2948, 0.2
      %v2965 = vmul.f32 %v2949, 0.2
      %v2966 = vmul.f32 %v2950, 0.2
      %v2967 = vmul.f32 %v2951, 0.2
      %v2968 = vmul.f32 %v2952, 0.2
      %v2969 = vmul.f32 %v2953, 0.2
      %v2970 = vmul.f32 %v2954, 0.2
      %v2971 = vmax.f32 %v2939, %v2955
      %v2972 = vmax.f32 %v2940, %v2956
      %v2973 = vmax.f32 %v2941, %v2957
      %v2974 = vmax.f32 %v2942, %v2958
      %v2975 = vmax.f32 %v2943, %v2959
      %v2976 = vmax.f32 %v2944, %v2960
      %v2977 = vmax.f32 %v2945, %v2961
      %v2978 = vmax.f32 %v2946, %v2962
      %v2979 = vmax.f32 %v2947, %v2963
      %v2980 = vmax.f32 %v2948, %v2964
      %v2981 = vmax.f32 %v2949, %v2965
      %v2982 = vmax.f32 %v2950, %v2966
      %v2983 = vmax.f32 %v2951, %v2967
      %v2984 = vmax.f32 %v2952, %v2968
      %v2985 = vmax.f32 %v2953, %v2969
      %v2986 = vmax.f32 %v2954, %v2970
      %v2987 = vld [vmem:[%s2] sm:$0xf]
      %v2988 = vld [vmem:[%s2 + $0x4] sm:$0xf]
      %v2989 = vld [vmem:[%s5] sm:$0xf]
      %v2990 = vld [vmem:[%s5 + $0x4] sm:$0xf]
      %v2991 = vpack.c.bf16 %v2972, %v2972
      %v2992 = vpack.c.bf16 %v2971, %v2971
      %v2993 = vpack.c.bf16 %v2973, %v2973
      %v2994 = vpack.c.bf16 %v2974, %v2974
      %v2995 = vpack.c.bf16 %v2975, %v2975
      %v2996 = vpack.c.bf16 %v2976, %v2976
      %v2997 = vpack.c.bf16 %v2977, %v2977
      %v2998 = vpack.c.bf16 %v2978, %v2978
      %v2999 = vpack.c.bf16 %v2979, %v2979
      %v3000 = vpack.c.bf16 %v2980, %v2980
      %v3001 = vpack.c.bf16 %v2981, %v2981
      %v3002 = vpack.c.bf16 %v2982, %v2982
      %v3003 = vpack.c.bf16 %v2983, %v2983
      %v3004 = vpack.c.bf16 %v2984, %v2984
      %v3005 = vpack.c.bf16 %v2985, %v2985
      %v3006 = vpack.c.bf16 %v2986, %v2986
      %v3010 = vunpack.c.l.b16 %v2991
      %v3011 = vunpack.c.l.b16 %v2992
      %v3012 = vunpack.c.l.b16 %v2993
      %v3013 = vpack.c.b16 %v3011, %v3010
      %v3014 = vpack.c.b16 %v3012, %v3010
      %v3017 = vunpack.c.l.b16 %v2989
      %v3018 = vunpack.c.l.b16 %v2990
      %v3019 = vpack.c.b16 %v3018, %v3017
      %v3022 = vsel %vm2760, %v3013, 0
      %v3025 = vsel %vm2760, %v3014, 0
      %3027 = vmatpush.bf16.msra.mxu0 0
      %3028 = vmatpush.bf16.msra.mxu0 0
      %3029 = vmatpush.bf16.msra.mxu0 0
      %3030 = vmatpush.bf16.msra.mxu0 0
      %3031 = vmatpush.bf16.msra.mxu0 0
      %3032 = vmatpush.bf16.msra.mxu0 0
      %3033 = vmatpush.bf16.msra.mxu0 0
      %3034 = vmatpush.bf16.msra.mxu0 %v3019
      %3035 = vmatmul.bf16.gmra.mxu0 %v3022
      %v3036 = vpop.f32.mrf.mxu0
      %v3037 = vadd.f32 0.0, %v3036
      %v3038 = vpop.f32.mrf.mxu0
      %v3039 = vadd.f32 0.0, %v3038
      %3040 = vmatmul.bf16.gmra.mxu0 %v3025
      %v3041 = vpop.f32.mrf.mxu0
      %v3042 = vadd.f32 0.0, %v3041
      %v3043 = vpop.f32.mrf.mxu0
      %v3044 = vadd.f32 0.0, %v3043
      %3045 = vdwg.mxu0
      %v3048 = vunpack.c.l.b16 %v2994
      %v3049 = vunpack.c.l.b16 %v2995
      %v3050 = vpack.c.b16 %v3049, %v3048
      %v3052 = vsel %vm2760, %v3050, 0
      %3054 = vmatpush.bf16.msra.mxu0 0
      %3055 = vmatpush.bf16.msra.mxu0 0
      %3056 = vmatpush.bf16.msra.mxu0 0
      %3057 = vmatpush.bf16.msra.mxu0 0
      %3058 = vmatpush.bf16.msra.mxu0 0
      %3059 = vmatpush.bf16.msra.mxu0 0
      %3060 = vmatpush.bf16.msra.mxu0 0
      %3061 = vmatpush.bf16.msra.mxu0 %v3019
      %3062 = vmatmul.bf16.gmra.mxu0 %v3025
      %v3063 = vpop.f32.mrf.mxu0
      %v3064 = vadd.f32 0.0, %v3063
      %v3065 = vpop.f32.mrf.mxu0
      %v3066 = vadd.f32 0.0, %v3065
      %3067 = vmatmul.bf16.gmra.mxu0 %v3052
      %v3068 = vpop.f32.mrf.mxu0
      %v3069 = vadd.f32 0.0, %v3068
      %v3070 = vpop.f32.mrf.mxu0
      %v3071 = vadd.f32 0.0, %v3070
      %3072 = vdwg.mxu0
      %v3075 = vunpack.c.l.b16 %v2996
      %v3076 = vunpack.c.l.b16 %v2997
      %v3077 = vpack.c.b16 %v3076, %v3075
      %v3079 = vsel %vm2760, %v3077, 0
      %3081 = vmatpush.bf16.msra.mxu0 0
      %3082 = vmatpush.bf16.msra.mxu0 0
      %3083 = vmatpush.bf16.msra.mxu0 0
      %3084 = vmatpush.bf16.msra.mxu0 0
      %3085 = vmatpush.bf16.msra.mxu0 0
      %3086 = vmatpush.bf16.msra.mxu0 0
      %3087 = vmatpush.bf16.msra.mxu0 0
      %3088 = vmatpush.bf16.msra.mxu0 %v3019
      %3089 = vmatmul.bf16.gmra.mxu0 %v3052
      %v3090 = vpop.f32.mrf.mxu0
      %v3091 = vadd.f32 0.0, %v3090
      %v3092 = vpop.f32.mrf.mxu0
      %v3093 = vadd.f32 0.0, %v3092
      %3094 = vmatmul.bf16.gmra.mxu0 %v3079
      %v3095 = vpop.f32.mrf.mxu0
      %v3096 = vadd.f32 0.0, %v3095
      %v3097 = vpop.f32.mrf.mxu0
      %v3098 = vadd.f32 0.0, %v3097
      %3099 = vdwg.mxu0
      %v3102 = vunpack.c.l.b16 %v2998
      %v3103 = vunpack.c.l.b16 %v2999
      %v3104 = vpack.c.b16 %v3103, %v3102
      %v3106 = vsel %vm2760, %v3104, 0
      %3108 = vmatpush.bf16.msra.mxu0 0
      %3109 = vmatpush.bf16.msra.mxu0 0
      %3110 = vmatpush.bf16.msra.mxu0 0
      %3111 = vmatpush.bf16.msra.mxu0 0
      %3112 = vmatpush.bf16.msra.mxu0 0
      %3113 = vmatpush.bf16.msra.mxu0 0
      %3114 = vmatpush.bf16.msra.mxu0 0
      %3115 = vmatpush.bf16.msra.mxu0 %v3019
      %3116 = vmatmul.bf16.gmra.mxu0 %v3079
      %v3117 = vpop.f32.mrf.mxu0
      %v3118 = vadd.f32 0.0, %v3117
      %v3119 = vpop.f32.mrf.mxu0
      %v3120 = vadd.f32 0.0, %v3119
      %3121 = vmatmul.bf16.gmra.mxu0 %v3106
      %v3122 = vpop.f32.mrf.mxu0
      %v3123 = vadd.f32 0.0, %v3122
      %v3124 = vpop.f32.mrf.mxu0
      %v3125 = vadd.f32 0.0, %v3124
      %3126 = vdwg.mxu0
      %v3129 = vunpack.c.l.b16 %v3000
      %v3130 = vunpack.c.l.b16 %v3001
      %v3131 = vpack.c.b16 %v3130, %v3129
      %v3133 = vsel %vm2760, %v3131, 0
      %3135 = vmatpush.bf16.msra.mxu0 0
      %3136 = vmatpush.bf16.msra.mxu0 0
      %3137 = vmatpush.bf16.msra.mxu0 0
      %3138 = vmatpush.bf16.msra.mxu0 0
      %3139 = vmatpush.bf16.msra.mxu0 0
      %3140 = vmatpush.bf16.msra.mxu0 0
      %3141 = vmatpush.bf16.msra.mxu0 0
      %3142 = vmatpush.bf16.msra.mxu0 %v3019
      %3143 = vmatmul.bf16.gmra.mxu0 %v3106
      %v3144 = vpop.f32.mrf.mxu0
      %v3145 = vadd.f32 0.0, %v3144
      %v3146 = vpop.f32.mrf.mxu0
      %v3147 = vadd.f32 0.0, %v3146
      %3148 = vmatmul.bf16.gmra.mxu0 %v3133
      %v3149 = vpop.f32.mrf.mxu0
      %v3150 = vadd.f32 0.0, %v3149
      %v3151 = vpop.f32.mrf.mxu0
      %v3152 = vadd.f32 0.0, %v3151
      %3153 = vdwg.mxu0
      %v3156 = vunpack.c.l.b16 %v3002
      %v3157 = vunpack.c.l.b16 %v3003
      %v3158 = vpack.c.b16 %v3157, %v3156
      %v3160 = vsel %vm2760, %v3158, 0
      %3162 = vmatpush.bf16.msra.mxu0 0
      %3163 = vmatpush.bf16.msra.mxu0 0
      %3164 = vmatpush.bf16.msra.mxu0 0
      %3165 = vmatpush.bf16.msra.mxu0 0
      %3166 = vmatpush.bf16.msra.mxu0 0
      %3167 = vmatpush.bf16.msra.mxu0 0
      %3168 = vmatpush.bf16.msra.mxu0 0
      %3169 = vmatpush.bf16.msra.mxu0 %v3019
      %3170 = vmatmul.bf16.gmra.mxu0 %v3133
      %v3171 = vpop.f32.mrf.mxu0
      %v3172 = vadd.f32 0.0, %v3171
      %v3173 = vpop.f32.mrf.mxu0
      %v3174 = vadd.f32 0.0, %v3173
      %3175 = vmatmul.bf16.gmra.mxu0 %v3160
      %v3176 = vpop.f32.mrf.mxu0
      %v3177 = vadd.f32 0.0, %v3176
      %v3178 = vpop.f32.mrf.mxu0
      %v3179 = vadd.f32 0.0, %v3178
      %3180 = vdwg.mxu0
      %v3183 = vunpack.c.l.b16 %v3004
      %v3184 = vunpack.c.l.b16 %v3005
      %v3185 = vpack.c.b16 %v3184, %v3183
      %v3187 = vsel %vm2760, %v3185, 0
      %3189 = vmatpush.bf16.msra.mxu0 0
      %3190 = vmatpush.bf16.msra.mxu0 0
      %3191 = vmatpush.bf16.msra.mxu0 0
      %3192 = vmatpush.bf16.msra.mxu0 0
      %3193 = vmatpush.bf16.msra.mxu0 0
      %3194 = vmatpush.bf16.msra.mxu0 0
      %3195 = vmatpush.bf16.msra.mxu0 0
      %3196 = vmatpush.bf16.msra.mxu0 %v3019
      %3197 = vmatmul.bf16.gmra.mxu0 %v3160
      %v3198 = vpop.f32.mrf.mxu0
      %v3199 = vadd.f32 0.0, %v3198
      %v3200 = vpop.f32.mrf.mxu0
      %v3201 = vadd.f32 0.0, %v3200
      %3202 = vmatmul.bf16.gmra.mxu0 %v3187
      %v3203 = vpop.f32.mrf.mxu0
      %v3204 = vadd.f32 0.0, %v3203
      %v3205 = vpop.f32.mrf.mxu0
      %v3206 = vadd.f32 0.0, %v3205
      %3207 = vdwg.mxu0
      %v3209 = vunpack.c.l.b16 %v3006
      %v3210 = vpack.c.b16 %v3184, %v3209
      %v3212 = vsel %vm2760, %v3210, 0
      %3214 = vmatpush.bf16.msra.mxu0 0
      %3215 = vmatpush.bf16.msra.mxu0 0
      %3216 = vmatpush.bf16.msra.mxu0 0
      %3217 = vmatpush.bf16.msra.mxu0 0
      %3218 = vmatpush.bf16.msra.mxu0 0
      %3219 = vmatpush.bf16.msra.mxu0 0
      %3220 = vmatpush.bf16.msra.mxu0 0
      %3221 = vmatpush.bf16.msra.mxu0 %v3019
      %3222 = vmatmul.bf16.gmra.mxu0 %v3187
      %v3223 = vpop.f32.mrf.mxu0
      %v3224 = vadd.f32 0.0, %v3223
      %v3225 = vpop.f32.mrf.mxu0
      %v3226 = vadd.f32 0.0, %v3225
      %3227 = vmatmul.bf16.gmra.mxu0 %v3212
      %v3228 = vpop.f32.mrf.mxu0
      %v3229 = vadd.f32 0.0, %v3228
      %v3230 = vpop.f32.mrf.mxu0
      %v3231 = vadd.f32 0.0, %v3230
      %3232 = vdwg.mxu0
      %3265 = vrot.lane.b32.xlu0 %v3037, 120
      %v3266 = vpop.permute.xlu0 %3265
      %3267 = vrot.lane.b32.xlu0 %v3039, 120
      %v3268 = vpop.permute.xlu0 %3267
      %3269 = vrot.lane.b32.xlu0 %v3042, 120
      %v3270 = vpop.permute.xlu0 %3269
      %3271 = vrot.lane.b32.xlu0 %v3044, 120
      %v3272 = vpop.permute.xlu0 %3271
      %3273 = vrot.lane.b32.xlu0 %v3064, 120
      %v3274 = vpop.permute.xlu0 %3273
      %3275 = vrot.lane.b32.xlu0 %v3066, 120
      %v3276 = vpop.permute.xlu0 %3275
      %3277 = vrot.lane.b32.xlu0 %v3069, 120
      %v3278 = vpop.permute.xlu0 %3277
      %3279 = vrot.lane.b32.xlu0 %v3071, 120
      %v3280 = vpop.permute.xlu0 %3279
      %3281 = vrot.lane.b32.xlu0 %v3091, 120
      %v3282 = vpop.permute.xlu0 %3281
      %3283 = vrot.lane.b32.xlu0 %v3093, 120
      %v3284 = vpop.permute.xlu0 %3283
      %3285 = vrot.lane.b32.xlu0 %v3096, 120
      %v3286 = vpop.permute.xlu0 %3285
      %3287 = vrot.lane.b32.xlu0 %v3098, 120
      %v3288 = vpop.permute.xlu0 %3287
      %3289 = vrot.lane.b32.xlu0 %v3118, 120
      %v3290 = vpop.permute.xlu0 %3289
      %3291 = vrot.lane.b32.xlu0 %v3120, 120
      %v3292 = vpop.permute.xlu0 %3291
      %3293 = vrot.lane.b32.xlu0 %v3123, 120
      %v3294 = vpop.permute.xlu0 %3293
      %3295 = vrot.lane.b32.xlu0 %v3125, 120
      %v3296 = vpop.permute.xlu0 %3295
      %3297 = vrot.lane.b32.xlu0 %v3145, 120
      %v3298 = vpop.permute.xlu0 %3297
      %3299 = vrot.lane.b32.xlu0 %v3147, 120
      %v3300 = vpop.permute.xlu0 %3299
      %3301 = vrot.lane.b32.xlu0 %v3150, 120
      %v3302 = vpop.permute.xlu0 %3301
      %3303 = vrot.lane.b32.xlu0 %v3152, 120
      %v3304 = vpop.permute.xlu0 %3303
      %3305 = vrot.lane.b32.xlu0 %v3172, 120
      %v3306 = vpop.permute.xlu0 %3305
      %3307 = vrot.lane.b32.xlu0 %v3174, 120
      %v3308 = vpop.permute.xlu0 %3307
      %3309 = vrot.lane.b32.xlu0 %v3177, 120
      %v3310 = vpop.permute.xlu0 %3309
      %3311 = vrot.lane.b32.xlu0 %v3179, 120
      %v3312 = vpop.permute.xlu0 %3311
      %3313 = vrot.lane.b32.xlu0 %v3199, 120
      %v3314 = vpop.permute.xlu0 %3313
      %3315 = vrot.lane.b32.xlu0 %v3201, 120
      %v3316 = vpop.permute.xlu0 %3315
      %3317 = vrot.lane.b32.xlu0 %v3204, 120
      %v3318 = vpop.permute.xlu0 %3317
      %3319 = vrot.lane.b32.xlu0 %v3206, 120
      %v3320 = vpop.permute.xlu0 %3319
      %3321 = vrot.lane.b32.xlu0 %v3224, 120
      %v3322 = vpop.permute.xlu0 %3321
      %3323 = vrot.lane.b32.xlu0 %v3226, 120
      %v3324 = vpop.permute.xlu0 %3323
      %3325 = vrot.lane.b32.xlu0 %v3229, 120
      %v3326 = vpop.permute.xlu0 %3325
      %3327 = vrot.lane.b32.xlu0 %v3231, 120
      %v3328 = vpop.permute.xlu0 %3327
      %3361 = vrot.lane.b32.xlu0 %v3037, 112
      %v3362 = vpop.permute.xlu0 %3361
      %3363 = vrot.lane.b32.xlu0 %v3039, 112
      %v3364 = vpop.permute.xlu0 %3363
      %3365 = vrot.lane.b32.xlu0 %v3042, 112
      %v3366 = vpop.permute.xlu0 %3365
      %3367 = vrot.lane.b32.xlu0 %v3044, 112
      %v3368 = vpop.permute.xlu0 %3367
      %3369 = vrot.lane.b32.xlu0 %v3064, 112
      %v3370 = vpop.permute.xlu0 %3369
      %3371 = vrot.lane.b32.xlu0 %v3066, 112
      %v3372 = vpop.permute.xlu0 %3371
      %3373 = vrot.lane.b32.xlu0 %v3069, 112
      %v3374 = vpop.permute.xlu0 %3373
      %3375 = vrot.lane.b32.xlu0 %v3071, 112
      %v3376 = vpop.permute.xlu0 %3375
      %3377 = vrot.lane.b32.xlu0 %v3091, 112
      %v3378 = vpop.permute.xlu0 %3377
      %3379 = vrot.lane.b32.xlu0 %v3093, 112
      %v3380 = vpop.permute.xlu0 %3379
      %3381 = vrot.lane.b32.xlu0 %v3096, 112
      %v3382 = vpop.permute.xlu0 %3381
      %3383 = vrot.lane.b32.xlu0 %v3098, 112
      %v3384 = vpop.permute.xlu0 %3383
      %3385 = vrot.lane.b32.xlu0 %v3118, 112
      %v3386 = vpop.permute.xlu0 %3385
      %3387 = vrot.lane.b32.xlu0 %v3120, 112
      %v3388 = vpop.permute.xlu0 %3387
      %3389 = vrot.lane.b32.xlu0 %v3123, 112
      %v3390 = vpop.permute.xlu0 %3389
      %3391 = vrot.lane.b32.xlu0 %v3125, 112
      %v3392 = vpop.permute.xlu0 %3391
      %3393 = vrot.lane.b32.xlu0 %v3145, 112
      %v3394 = vpop.permute.xlu0 %3393
      %3395 = vrot.lane.b32.xlu0 %v3147, 112
      %v3396 = vpop.permute.xlu0 %3395
      %3397 = vrot.lane.b32.xlu0 %v3150, 112
      %v3398 = vpop.permute.xlu0 %3397
      %3399 = vrot.lane.b32.xlu0 %v3152, 112
      %v3400 = vpop.permute.xlu0 %3399
      %3401 = vrot.lane.b32.xlu0 %v3172, 112
      %v3402 = vpop.permute.xlu0 %3401
      %3403 = vrot.lane.b32.xlu0 %v3174, 112
      %v3404 = vpop.permute.xlu0 %3403
      %3405 = vrot.lane.b32.xlu0 %v3177, 112
      %v3406 = vpop.permute.xlu0 %3405
      %3407 = vrot.lane.b32.xlu0 %v3179, 112
      %v3408 = vpop.permute.xlu0 %3407
      %3409 = vrot.lane.b32.xlu0 %v3199, 112
      %v3410 = vpop.permute.xlu0 %3409
      %3411 = vrot.lane.b32.xlu0 %v3201, 112
      %v3412 = vpop.permute.xlu0 %3411
      %3413 = vrot.lane.b32.xlu0 %v3204, 112
      %v3414 = vpop.permute.xlu0 %3413
      %3415 = vrot.lane.b32.xlu0 %v3206, 112
      %v3416 = vpop.permute.xlu0 %3415
      %3417 = vrot.lane.b32.xlu0 %v3224, 112
      %v3418 = vpop.permute.xlu0 %3417
      %3419 = vrot.lane.b32.xlu0 %v3226, 112
      %v3420 = vpop.permute.xlu0 %3419
      %3421 = vrot.lane.b32.xlu0 %v3229, 112
      %v3422 = vpop.permute.xlu0 %3421
      %3423 = vrot.lane.b32.xlu0 %v3231, 112
      %v3424 = vpop.permute.xlu0 %3423
      %3457 = vrot.lane.b32.xlu0 %v3037, 104
      %v3458 = vpop.permute.xlu0 %3457
      %3459 = vrot.lane.b32.xlu0 %v3039, 104
      %v3460 = vpop.permute.xlu0 %3459
      %3461 = vrot.lane.b32.xlu0 %v3042, 104
      %v3462 = vpop.permute.xlu0 %3461
      %3463 = vrot.lane.b32.xlu0 %v3044, 104
      %v3464 = vpop.permute.xlu0 %3463
      %3465 = vrot.lane.b32.xlu0 %v3064, 104
      %v3466 = vpop.permute.xlu0 %3465
      %3467 = vrot.lane.b32.xlu0 %v3066, 104
      %v3468 = vpop.permute.xlu0 %3467
      %3469 = vrot.lane.b32.xlu0 %v3069, 104
      %v3470 = vpop.permute.xlu0 %3469
      %3471 = vrot.lane.b32.xlu0 %v3071, 104
      %v3472 = vpop.permute.xlu0 %3471
      %3473 = vrot.lane.b32.xlu0 %v3091, 104
      %v3474 = vpop.permute.xlu0 %3473
      %3475 = vrot.lane.b32.xlu0 %v3093, 104
      %v3476 = vpop.permute.xlu0 %3475
      %3477 = vrot.lane.b32.xlu0 %v3096, 104
      %v3478 = vpop.permute.xlu0 %3477
      %3479 = vrot.lane.b32.xlu0 %v3098, 104
      %v3480 = vpop.permute.xlu0 %3479
      %3481 = vrot.lane.b32.xlu0 %v3118, 104
      %v3482 = vpop.permute.xlu0 %3481
      %3483 = vrot.lane.b32.xlu0 %v3120, 104
      %v3484 = vpop.permute.xlu0 %3483
      %3485 = vrot.lane.b32.xlu0 %v3123, 104
      %v3486 = vpop.permute.xlu0 %3485
      %3487 = vrot.lane.b32.xlu0 %v3125, 104
      %v3488 = vpop.permute.xlu0 %3487
      %3489 = vrot.lane.b32.xlu0 %v3145, 104
      %v3490 = vpop.permute.xlu0 %3489
      %3491 = vrot.lane.b32.xlu0 %v3147, 104
      %v3492 = vpop.permute.xlu0 %3491
      %3493 = vrot.lane.b32.xlu0 %v3150, 104
      %v3494 = vpop.permute.xlu0 %3493
      %3495 = vrot.lane.b32.xlu0 %v3152, 104
      %v3496 = vpop.permute.xlu0 %3495
      %3497 = vrot.lane.b32.xlu0 %v3172, 104
      %v3498 = vpop.permute.xlu0 %3497
      %3499 = vrot.lane.b32.xlu0 %v3174, 104
      %v3500 = vpop.permute.xlu0 %3499
      %3501 = vrot.lane.b32.xlu0 %v3177, 104
      %v3502 = vpop.permute.xlu0 %3501
      %3503 = vrot.lane.b32.xlu0 %v3179, 104
      %v3504 = vpop.permute.xlu0 %3503
      %3505 = vrot.lane.b32.xlu0 %v3199, 104
      %v3506 = vpop.permute.xlu0 %3505
      %3507 = vrot.lane.b32.xlu0 %v3201, 104
      %v3508 = vpop.permute.xlu0 %3507
      %3509 = vrot.lane.b32.xlu0 %v3204, 104
      %v3510 = vpop.permute.xlu0 %3509
      %3511 = vrot.lane.b32.xlu0 %v3206, 104
      %v3512 = vpop.permute.xlu0 %3511
      %3513 = vrot.lane.b32.xlu0 %v3224, 104
      %v3514 = vpop.permute.xlu0 %3513
      %3515 = vrot.lane.b32.xlu0 %v3226, 104
      %v3516 = vpop.permute.xlu0 %3515
      %3517 = vrot.lane.b32.xlu0 %v3229, 104
      %v3518 = vpop.permute.xlu0 %3517
      %3519 = vrot.lane.b32.xlu0 %v3231, 104
      %v3520 = vpop.permute.xlu0 %3519
      %v3553 = vpack.c.bf16 %v3037, %v3037
      %v3554 = vpack.c.bf16 %v3039, %v3039
      %v3555 = vpack.c.bf16 %v3042, %v3042
      %v3556 = vpack.c.bf16 %v3044, %v3044
      %v3557 = vpack.c.bf16 %v3266, %v3266
      %v3558 = vpack.c.bf16 %v3268, %v3268
      %v3559 = vpack.c.bf16 %v3270, %v3270
      %v3560 = vpack.c.bf16 %v3272, %v3272
      %v3561 = vpack.c.bf16 %v3362, %v3362
      %v3562 = vpack.c.bf16 %v3364, %v3364
      %v3563 = vpack.c.bf16 %v3366, %v3366
      %v3564 = vpack.c.bf16 %v3368, %v3368
      %v3565 = vpack.c.bf16 %v3458, %v3458
      %v3566 = vpack.c.bf16 %v3460, %v3460
      %v3567 = vpack.c.bf16 %v3462, %v3462
      %v3568 = vpack.c.bf16 %v3464, %v3464
      %v3569 = vpack.c.bf16 %v3064, %v3064
      %v3570 = vpack.c.bf16 %v3066, %v3066
      %v3571 = vpack.c.bf16 %v3069, %v3069
      %v3572 = vpack.c.bf16 %v3071, %v3071
      %v3573 = vpack.c.bf16 %v3274, %v3274
      %v3574 = vpack.c.bf16 %v3276, %v3276
      %v3575 = vpack.c.bf16 %v3278, %v3278
      %v3576 = vpack.c.bf16 %v3280, %v3280
      %v3577 = vpack.c.bf16 %v3370, %v3370
      %v3578 = vpack.c.bf16 %v3372, %v3372
      %v3579 = vpack.c.bf16 %v3374, %v3374
      %v3580 = vpack.c.bf16 %v3376, %v3376
      %v3581 = vpack.c.bf16 %v3466, %v3466
      %v3582 = vpack.c.bf16 %v3468, %v3468
      %v3583 = vpack.c.bf16 %v3470, %v3470
      %v3584 = vpack.c.bf16 %v3472, %v3472
      %v3585 = vpack.c.bf16 %v3091, %v3091
      %v3586 = vpack.c.bf16 %v3093, %v3093
      %v3587 = vpack.c.bf16 %v3096, %v3096
      %v3588 = vpack.c.bf16 %v3098, %v3098
      %v3589 = vpack.c.bf16 %v3282, %v3282
      %v3590 = vpack.c.bf16 %v3284, %v3284
      %v3591 = vpack.c.bf16 %v3286, %v3286
      %v3592 = vpack.c.bf16 %v3288, %v3288
      %v3593 = vpack.c.bf16 %v3378, %v3378
      %v3594 = vpack.c.bf16 %v3380, %v3380
      %v3595 = vpack.c.bf16 %v3382, %v3382
      %v3596 = vpack.c.bf16 %v3384, %v3384
      %v3597 = vpack.c.bf16 %v3474, %v3474
      %v3598 = vpack.c.bf16 %v3476, %v3476
      %v3599 = vpack.c.bf16 %v3478, %v3478
      %v3600 = vpack.c.bf16 %v3480, %v3480
      %v3601 = vpack.c.bf16 %v3118, %v3118
      %v3602 = vpack.c.bf16 %v3120, %v3120
      %v3603 = vpack.c.bf16 %v3123, %v3123
      %v3604 = vpack.c.bf16 %v3125, %v3125
      %v3605 = vpack.c.bf16 %v3290, %v3290
      %v3606 = vpack.c.bf16 %v3292, %v3292
      %v3607 = vpack.c.bf16 %v3294, %v3294
      %v3608 = vpack.c.bf16 %v3296, %v3296
      %v3609 = vpack.c.bf16 %v3386, %v3386
      %v3610 = vpack.c.bf16 %v3388, %v3388
      %v3611 = vpack.c.bf16 %v3390, %v3390
      %v3612 = vpack.c.bf16 %v3392, %v3392
      %v3613 = vpack.c.bf16 %v3482, %v3482
      %v3614 = vpack.c.bf16 %v3484, %v3484
      %v3615 = vpack.c.bf16 %v3486, %v3486
      %v3616 = vpack.c.bf16 %v3488, %v3488
      %v3617 = vpack.c.bf16 %v3145, %v3145
      %v3618 = vpack.c.bf16 %v3147, %v3147
      %v3619 = vpack.c.bf16 %v3150, %v3150
      %v3620 = vpack.c.bf16 %v3152, %v3152
      %v3621 = vpack.c.bf16 %v3298, %v3298
      %v3622 = vpack.c.bf16 %v3300, %v3300
      %v3623 = vpack.c.bf16 %v3302, %v3302
      %v3624 = vpack.c.bf16 %v3304, %v3304
      %v3625 = vpack.c.bf16 %v3394, %v3394
      %v3626 = vpack.c.bf16 %v3396, %v3396
      %v3627 = vpack.c.bf16 %v3398, %v3398
      %v3628 = vpack.c.bf16 %v3400, %v3400
      %v3629 = vpack.c.bf16 %v3490, %v3490
      %v3630 = vpack.c.bf16 %v3492, %v3492
      %v3631 = vpack.c.bf16 %v3494, %v3494
      %v3632 = vpack.c.bf16 %v3496, %v3496
      %v3633 = vpack.c.bf16 %v3172, %v3172
      %v3634 = vpack.c.bf16 %v3174, %v3174
      %v3635 = vpack.c.bf16 %v3177, %v3177
      %v3636 = vpack.c.bf16 %v3179, %v3179
      %v3637 = vpack.c.bf16 %v3306, %v3306
      %v3638 = vpack.c.bf16 %v3308, %v3308
      %v3639 = vpack.c.bf16 %v3310, %v3310
      %v3640 = vpack.c.bf16 %v3312, %v3312
      %v3641 = vpack.c.bf16 %v3402, %v3402
      %v3642 = vpack.c.bf16 %v3404, %v3404
      %v3643 = vpack.c.bf16 %v3406, %v3406
      %v3644 = vpack.c.bf16 %v3408, %v3408
      %v3645 = vpack.c.bf16 %v3498, %v3498
      %v3646 = vpack.c.bf16 %v3500, %v3500
      %v3647 = vpack.c.bf16 %v3502, %v3502
      %v3648 = vpack.c.bf16 %v3504, %v3504
      %v3649 = vpack.c.bf16 %v3199, %v3199
      %v3650 = vpack.c.bf16 %v3201, %v3201
      %v3651 = vpack.c.bf16 %v3204, %v3204
      %v3652 = vpack.c.bf16 %v3206, %v3206
      %v3653 = vpack.c.bf16 %v3314, %v3314
      %v3654 = vpack.c.bf16 %v3316, %v3316
      %v3655 = vpack.c.bf16 %v3318, %v3318
      %v3656 = vpack.c.bf16 %v3320, %v3320
      %v3657 = vpack.c.bf16 %v3410, %v3410
      %v3658 = vpack.c.bf16 %v3412, %v3412
      %v3659 = vpack.c.bf16 %v3414, %v3414
      %v3660 = vpack.c.bf16 %v3416, %v3416
      %v3661 = vpack.c.bf16 %v3506, %v3506
      %v3662 = vpack.c.bf16 %v3508, %v3508
      %v3663 = vpack.c.bf16 %v3510, %v3510
      %v3664 = vpack.c.bf16 %v3512, %v3512
      %v3665 = vpack.c.bf16 %v3224, %v3224
      %v3666 = vpack.c.bf16 %v3226, %v3226
      %v3667 = vpack.c.bf16 %v3229, %v3229
      %v3668 = vpack.c.bf16 %v3231, %v3231
      %v3669 = vpack.c.bf16 %v3322, %v3322
      %v3670 = vpack.c.bf16 %v3324, %v3324
      %v3671 = vpack.c.bf16 %v3326, %v3326
      %v3672 = vpack.c.bf16 %v3328, %v3328
      %v3673 = vpack.c.bf16 %v3418, %v3418
      %v3674 = vpack.c.bf16 %v3420, %v3420
      %v3675 = vpack.c.bf16 %v3422, %v3422
      %v3676 = vpack.c.bf16 %v3424, %v3424
      %v3677 = vpack.c.bf16 %v3514, %v3514
      %v3678 = vpack.c.bf16 %v3516, %v3516
      %v3679 = vpack.c.bf16 %v3518, %v3518
      %v3680 = vpack.c.bf16 %v3520, %v3520
      %v3683 = vunpack.c.l.b16 %v2987
      %v3684 = vunpack.c.l.b16 %v2988
      %v3685 = vpack.c.b16 %v3684, %v3683
      %v3703 = vunpack.c.l.b16 %v3553
      %v3704 = vunpack.c.l.b16 %v3554
      %v3705 = vunpack.c.l.b16 %v3555
      %v3706 = vunpack.c.l.b16 %v3556
      %v3707 = vunpack.c.l.b16 %v3557
      %v3708 = vunpack.c.l.b16 %v3558
      %v3709 = vunpack.c.l.b16 %v3559
      %v3710 = vunpack.c.l.b16 %v3560
      %v3711 = vunpack.c.l.b16 %v3561
      %v3712 = vunpack.c.l.b16 %v3562
      %v3713 = vunpack.c.l.b16 %v3563
      %v3714 = vunpack.c.l.b16 %v3564
      %v3715 = vunpack.c.l.b16 %v3565
      %v3716 = vunpack.c.l.b16 %v3566
      %v3717 = vunpack.c.l.b16 %v3567
      %v3718 = vunpack.c.l.b16 %v3568
      %v3719 = vpack.c.b16 %v3704, %v3703
      %v3720 = vpack.c.b16 %v3706, %v3705
      %v3721 = vpack.c.b16 %v3708, %v3707
      %v3722 = vpack.c.b16 %v3710, %v3709
      %v3723 = vpack.c.b16 %v3712, %v3711
      %v3724 = vpack.c.b16 %v3714, %v3713
      %v3725 = vpack.c.b16 %v3716, %v3715
      %v3726 = vpack.c.b16 %v3718, %v3717
      %3735 = vmatpush.bf16.msra.mxu0 %v3726
      %3736 = vmatpush.bf16.msra.mxu0 %v3725
      %3737 = vmatpush.bf16.msra.mxu0 %v3724
      %3738 = vmatpush.bf16.msra.mxu0 %v3723
      %3739 = vmatpush.bf16.msra.mxu0 %v3722
      %3740 = vmatpush.bf16.msra.mxu0 %v3721
      %3741 = vmatpush.bf16.msra.mxu0 %v3720
      %3742 = vmatpush.bf16.msra.mxu0 %v3719
      %3743 = vmatmul.bf16.gmra.mxu0 %v3685
      %v3744 = vpop.f32.mrf.mxu0
      %v3745 = vadd.f32 0.0, %v3744
      %v3746 = vpop.f32.mrf.mxu0
      %v3747 = vadd.f32 0.0, %v3746
      %3748 = vdwg.mxu0
      %v3765 = vunpack.c.l.b16 %v3569
      %v3766 = vunpack.c.l.b16 %v3570
      %v3767 = vunpack.c.l.b16 %v3571
      %v3768 = vunpack.c.l.b16 %v3572
      %v3769 = vunpack.c.l.b16 %v3573
      %v3770 = vunpack.c.l.b16 %v3574
      %v3771 = vunpack.c.l.b16 %v3575
      %v3772 = vunpack.c.l.b16 %v3576
      %v3773 = vunpack.c.l.b16 %v3577
      %v3774 = vunpack.c.l.b16 %v3578
      %v3775 = vunpack.c.l.b16 %v3579
      %v3776 = vunpack.c.l.b16 %v3580
      %v3777 = vunpack.c.l.b16 %v3581
      %v3778 = vunpack.c.l.b16 %v3582
      %v3779 = vunpack.c.l.b16 %v3583
      %v3780 = vunpack.c.l.b16 %v3584
      %v3781 = vpack.c.b16 %v3766, %v3765
      %v3782 = vpack.c.b16 %v3768, %v3767
      %v3783 = vpack.c.b16 %v3770, %v3769
      %v3784 = vpack.c.b16 %v3772, %v3771
      %v3785 = vpack.c.b16 %v3774, %v3773
      %v3786 = vpack.c.b16 %v3776, %v3775
      %v3787 = vpack.c.b16 %v3778, %v3777
      %v3788 = vpack.c.b16 %v3780, %v3779
      %3797 = vmatpush.bf16.msra.mxu0 %v3788
      %3798 = vmatpush.bf16.msra.mxu0 %v3787
      %3799 = vmatpush.bf16.msra.mxu0 %v3786
      %3800 = vmatpush.bf16.msra.mxu0 %v3785
      %3801 = vmatpush.bf16.msra.mxu0 %v3784
      %3802 = vmatpush.bf16.msra.mxu0 %v3783
      %3803 = vmatpush.bf16.msra.mxu0 %v3782
      %3804 = vmatpush.bf16.msra.mxu0 %v3781
      %3805 = vmatmul.bf16.gmra.mxu0 %v3685
      %v3806 = vpop.f32.mrf.mxu0
      %v3807 = vadd.f32 0.0, %v3806
      %v3808 = vpop.f32.mrf.mxu0
      %v3809 = vadd.f32 0.0, %v3808
      %3810 = vdwg.mxu0
      %v3827 = vunpack.c.l.b16 %v3585
      %v3828 = vunpack.c.l.b16 %v3586
      %v3829 = vunpack.c.l.b16 %v3587
      %v3830 = vunpack.c.l.b16 %v3588
      %v3831 = vunpack.c.l.b16 %v3589
      %v3832 = vunpack.c.l.b16 %v3590
      %v3833 = vunpack.c.l.b16 %v3591
      %v3834 = vunpack.c.l.b16 %v3592
      %v3835 = vunpack.c.l.b16 %v3593
      %v3836 = vunpack.c.l.b16 %v3594
      %v3837 = vunpack.c.l.b16 %v3595
      %v3838 = vunpack.c.l.b16 %v3596
      %v3839 = vunpack.c.l.b16 %v3597
      %v3840 = vunpack.c.l.b16 %v3598
      %v3841 = vunpack.c.l.b16 %v3599
      %v3842 = vunpack.c.l.b16 %v3600
      %v3843 = vpack.c.b16 %v3828, %v3827
      %v3844 = vpack.c.b16 %v3830, %v3829
      %v3845 = vpack.c.b16 %v3832, %v3831
      %v3846 = vpack.c.b16 %v3834, %v3833
      %v3847 = vpack.c.b16 %v3836, %v3835
      %v3848 = vpack.c.b16 %v3838, %v3837
      %v3849 = vpack.c.b16 %v3840, %v3839
      %v3850 = vpack.c.b16 %v3842, %v3841
      %3859 = vmatpush.bf16.msra.mxu0 %v3850
      %3860 = vmatpush.bf16.msra.mxu0 %v3849
      %3861 = vmatpush.bf16.msra.mxu0 %v3848
      %3862 = vmatpush.bf16.msra.mxu0 %v3847
      %3863 = vmatpush.bf16.msra.mxu0 %v3846
      %3864 = vmatpush.bf16.msra.mxu0 %v3845
      %3865 = vmatpush.bf16.msra.mxu0 %v3844
      %3866 = vmatpush.bf16.msra.mxu0 %v3843
      %3867 = vmatmul.bf16.gmra.mxu0 %v3685
      %v3868 = vpop.f32.mrf.mxu0
      %v3869 = vadd.f32 0.0, %v3868
      %v3870 = vpop.f32.mrf.mxu0
      %v3871 = vadd.f32 0.0, %v3870
      %3872 = vdwg.mxu0
      %v3889 = vunpack.c.l.b16 %v3601
      %v3890 = vunpack.c.l.b16 %v3602
      %v3891 = vunpack.c.l.b16 %v3603
      %v3892 = vunpack.c.l.b16 %v3604
      %v3893 = vunpack.c.l.b16 %v3605
      %v3894 = vunpack.c.l.b16 %v3606
      %v3895 = vunpack.c.l.b16 %v3607
      %v3896 = vunpack.c.l.b16 %v3608
      %v3897 = vunpack.c.l.b16 %v3609
      %v3898 = vunpack.c.l.b16 %v3610
      %v3899 = vunpack.c.l.b16 %v3611
      %v3900 = vunpack.c.l.b16 %v3612
      %v3901 = vunpack.c.l.b16 %v3613
      %v3902 = vunpack.c.l.b16 %v3614
      %v3903 = vunpack.c.l.b16 %v3615
      %v3904 = vunpack.c.l.b16 %v3616
      %v3905 = vpack.c.b16 %v3890, %v3889
      %v3906 = vpack.c.b16 %v3892, %v3891
      %v3907 = vpack.c.b16 %v3894, %v3893
      %v3908 = vpack.c.b16 %v3896, %v3895
      %v3909 = vpack.c.b16 %v3898, %v3897
      %v3910 = vpack.c.b16 %v3900, %v3899
      %v3911 = vpack.c.b16 %v3902, %v3901
      %v3912 = vpack.c.b16 %v3904, %v3903
      %3921 = vmatpush.bf16.msra.mxu0 %v3912
      %3922 = vmatpush.bf16.msra.mxu0 %v3911
      %3923 = vmatpush.bf16.msra.mxu0 %v3910
      %3924 = vmatpush.bf16.msra.mxu0 %v3909
      %3925 = vmatpush.bf16.msra.mxu0 %v3908
      %3926 = vmatpush.bf16.msra.mxu0 %v3907
      %3927 = vmatpush.bf16.msra.mxu0 %v3906
      %3928 = vmatpush.bf16.msra.mxu0 %v3905
      %3929 = vmatmul.bf16.gmra.mxu0 %v3685
      %v3930 = vpop.f32.mrf.mxu0
      %v3931 = vadd.f32 0.0, %v3930
      %v3932 = vpop.f32.mrf.mxu0
      %v3933 = vadd.f32 0.0, %v3932
      %3934 = vdwg.mxu0
      %v3951 = vunpack.c.l.b16 %v3617
      %v3952 = vunpack.c.l.b16 %v3618
      %v3953 = vunpack.c.l.b16 %v3619
      %v3954 = vunpack.c.l.b16 %v3620
      %v3955 = vunpack.c.l.b16 %v3621
      %v3956 = vunpack.c.l.b16 %v3622
      %v3957 = vunpack.c.l.b16 %v3623
      %v3958 = vunpack.c.l.b16 %v3624
      %v3959 = vunpack.c.l.b16 %v3625
      %v3960 = vunpack.c.l.b16 %v3626
      %v3961 = vunpack.c.l.b16 %v3627
      %v3962 = vunpack.c.l.b16 %v3628
      %v3963 = vunpack.c.l.b16 %v3629
      %v3964 = vunpack.c.l.b16 %v3630
      %v3965 = vunpack.c.l.b16 %v3631
      %v3966 = vunpack.c.l.b16 %v3632
      %v3967 = vpack.c.b16 %v3952, %v3951
      %v3968 = vpack.c.b16 %v3954, %v3953
      %v3969 = vpack.c.b16 %v3956, %v3955
      %v3970 = vpack.c.b16 %v3958, %v3957
      %v3971 = vpack.c.b16 %v3960, %v3959
      %v3972 = vpack.c.b16 %v3962, %v3961
      %v3973 = vpack.c.b16 %v3964, %v3963
      %v3974 = vpack.c.b16 %v3966, %v3965
      %3983 = vmatpush.bf16.msra.mxu0 %v3974
      %3984 = vmatpush.bf16.msra.mxu0 %v3973
      %3985 = vmatpush.bf16.msra.mxu0 %v3972
      %3986 = vmatpush.bf16.msra.mxu0 %v3971
      %3987 = vmatpush.bf16.msra.mxu0 %v3970
      %3988 = vmatpush.bf16.msra.mxu0 %v3969
      %3989 = vmatpush.bf16.msra.mxu0 %v3968
      %3990 = vmatpush.bf16.msra.mxu0 %v3967
      %3991 = vmatmul.bf16.gmra.mxu0 %v3685
      %v3992 = vpop.f32.mrf.mxu0
      %v3993 = vadd.f32 0.0, %v3992
      %v3994 = vpop.f32.mrf.mxu0
      %v3995 = vadd.f32 0.0, %v3994
      %3996 = vdwg.mxu0
      %v4013 = vunpack.c.l.b16 %v3633
      %v4014 = vunpack.c.l.b16 %v3634
      %v4015 = vunpack.c.l.b16 %v3635
      %v4016 = vunpack.c.l.b16 %v3636
      %v4017 = vunpack.c.l.b16 %v3637
      %v4018 = vunpack.c.l.b16 %v3638
      %v4019 = vunpack.c.l.b16 %v3639
      %v4020 = vunpack.c.l.b16 %v3640
      %v4021 = vunpack.c.l.b16 %v3641
      %v4022 = vunpack.c.l.b16 %v3642
      %v4023 = vunpack.c.l.b16 %v3643
      %v4024 = vunpack.c.l.b16 %v3644
      %v4025 = vunpack.c.l.b16 %v3645
      %v4026 = vunpack.c.l.b16 %v3646
      %v4027 = vunpack.c.l.b16 %v3647
      %v4028 = vunpack.c.l.b16 %v3648
      %v4029 = vpack.c.b16 %v4014, %v4013
      %v4030 = vpack.c.b16 %v4016, %v4015
      %v4031 = vpack.c.b16 %v4018, %v4017
      %v4032 = vpack.c.b16 %v4020, %v4019
      %v4033 = vpack.c.b16 %v4022, %v4021
      %v4034 = vpack.c.b16 %v4024, %v4023
      %v4035 = vpack.c.b16 %v4026, %v4025
      %v4036 = vpack.c.b16 %v4028, %v4027
      %4045 = vmatpush.bf16.msra.mxu0 %v4036
      %4046 = vmatpush.bf16.msra.mxu0 %v4035
      %4047 = vmatpush.bf16.msra.mxu0 %v4034
      %4048 = vmatpush.bf16.msra.mxu0 %v4033
      %4049 = vmatpush.bf16.msra.mxu0 %v4032
      %4050 = vmatpush.bf16.msra.mxu0 %v4031
      %4051 = vmatpush.bf16.msra.mxu0 %v4030
      %4052 = vmatpush.bf16.msra.mxu0 %v4029
      %4053 = vmatmul.bf16.gmra.mxu0 %v3685
      %v4054 = vpop.f32.mrf.mxu0
      %v4055 = vadd.f32 0.0, %v4054
      %v4056 = vpop.f32.mrf.mxu0
      %v4057 = vadd.f32 0.0, %v4056
      %4058 = vdwg.mxu0
      %v4075 = vunpack.c.l.b16 %v3649
      %v4076 = vunpack.c.l.b16 %v3650
      %v4077 = vunpack.c.l.b16 %v3651
      %v4078 = vunpack.c.l.b16 %v3652
      %v4079 = vunpack.c.l.b16 %v3653
      %v4080 = vunpack.c.l.b16 %v3654
      %v4081 = vunpack.c.l.b16 %v3655
      %v4082 = vunpack.c.l.b16 %v3656
      %v4083 = vunpack.c.l.b16 %v3657
      %v4084 = vunpack.c.l.b16 %v3658
      %v4085 = vunpack.c.l.b16 %v3659
      %v4086 = vunpack.c.l.b16 %v3660
      %v4087 = vunpack.c.l.b16 %v3661
      %v4088 = vunpack.c.l.b16 %v3662
      %v4089 = vunpack.c.l.b16 %v3663
      %v4090 = vunpack.c.l.b16 %v3664
      %v4091 = vpack.c.b16 %v4076, %v4075
      %v4092 = vpack.c.b16 %v4078, %v4077
      %v4093 = vpack.c.b16 %v4080, %v4079
      %v4094 = vpack.c.b16 %v4082, %v4081
      %v4095 = vpack.c.b16 %v4084, %v4083
      %v4096 = vpack.c.b16 %v4086, %v4085
      %v4097 = vpack.c.b16 %v4088, %v4087
      %v4098 = vpack.c.b16 %v4090, %v4089
      %4107 = vmatpush.bf16.msra.mxu0 %v4098
      %4108 = vmatpush.bf16.msra.mxu0 %v4097
      %4109 = vmatpush.bf16.msra.mxu0 %v4096
      %4110 = vmatpush.bf16.msra.mxu0 %v4095
      %4111 = vmatpush.bf16.msra.mxu0 %v4094
      %4112 = vmatpush.bf16.msra.mxu0 %v4093
      %4113 = vmatpush.bf16.msra.mxu0 %v4092
      %4114 = vmatpush.bf16.msra.mxu0 %v4091
      %4115 = vmatmul.bf16.gmra.mxu0 %v3685
      %v4116 = vpop.f32.mrf.mxu0
      %v4117 = vadd.f32 0.0, %v4116
      %v4118 = vpop.f32.mrf.mxu0
      %v4119 = vadd.f32 0.0, %v4118
      %4120 = vdwg.mxu0
      %v4137 = vunpack.c.l.b16 %v3665
      %v4138 = vunpack.c.l.b16 %v3666
      %v4139 = vunpack.c.l.b16 %v3667
      %v4140 = vunpack.c.l.b16 %v3668
      %v4141 = vunpack.c.l.b16 %v3669
      %v4142 = vunpack.c.l.b16 %v3670
      %v4143 = vunpack.c.l.b16 %v3671
      %v4144 = vunpack.c.l.b16 %v3672
      %v4145 = vunpack.c.l.b16 %v3673
      %v4146 = vunpack.c.l.b16 %v3674
      %v4147 = vunpack.c.l.b16 %v3675
      %v4148 = vunpack.c.l.b16 %v3676
      %v4149 = vunpack.c.l.b16 %v3677
      %v4150 = vunpack.c.l.b16 %v3678
      %v4151 = vunpack.c.l.b16 %v3679
      %v4152 = vunpack.c.l.b16 %v3680
      %v4153 = vpack.c.b16 %v4138, %v4137
      %v4154 = vpack.c.b16 %v4140, %v4139
      %v4155 = vpack.c.b16 %v4142, %v4141
      %v4156 = vpack.c.b16 %v4144, %v4143
      %v4157 = vpack.c.b16 %v4146, %v4145
      %v4158 = vpack.c.b16 %v4148, %v4147
      %v4159 = vpack.c.b16 %v4150, %v4149
      %v4160 = vpack.c.b16 %v4152, %v4151
      %4169 = vmatpush.bf16.msra.mxu0 %v4160
      %4170 = vmatpush.bf16.msra.mxu0 %v4159
      %4171 = vmatpush.bf16.msra.mxu0 %v4158
      %4172 = vmatpush.bf16.msra.mxu0 %v4157
      %4173 = vmatpush.bf16.msra.mxu0 %v4156
      %4174 = vmatpush.bf16.msra.mxu0 %v4155
      %4175 = vmatpush.bf16.msra.mxu0 %v4154
      %4176 = vmatpush.bf16.msra.mxu0 %v4153
      %4177 = vmatmul.bf16.gmra.mxu0 %v3685
      %v4178 = vpop.f32.mrf.mxu0
      %v4179 = vadd.f32 0.0, %v4178
      %v4180 = vpop.f32.mrf.mxu0
      %v4181 = vadd.f32 0.0, %v4180
      %4182 = vdwg.mxu0
      %vm4183 = vcmask 64512
      %v4184 = vsel %vm4183, %v3745, 0.0
      %4185 = vadd.xlane.f32.xlu0 %v4184
      %v4186 = vpop.xlane.xlu0 %4185
      %v4187 = vsel %vm4183, %v3747, 0.0
      %4188 = vadd.xlane.f32.xlu0 %v4187
      %v4189 = vpop.xlane.xlu0 %4188
      %v4190 = vsel %vm4183, %v3807, 0.0
      %4191 = vadd.xlane.f32.xlu0 %v4190
      %v4192 = vpop.xlane.xlu0 %4191
      %v4193 = vsel %vm4183, %v3809, 0.0
      %4194 = vadd.xlane.f32.xlu0 %v4193
      %v4195 = vpop.xlane.xlu0 %4194
      %v4196 = vsel %vm4183, %v3869, 0.0
      %4197 = vadd.xlane.f32.xlu0 %v4196
      %v4198 = vpop.xlane.xlu0 %4197
      %v4199 = vsel %vm4183, %v3871, 0.0
      %4200 = vadd.xlane.f32.xlu0 %v4199
      %v4201 = vpop.xlane.xlu0 %4200
      %v4202 = vsel %vm4183, %v3931, 0.0
      %4203 = vadd.xlane.f32.xlu0 %v4202
      %v4204 = vpop.xlane.xlu0 %4203
      %v4205 = vsel %vm4183, %v3933, 0.0
      %4206 = vadd.xlane.f32.xlu0 %v4205
      %v4207 = vpop.xlane.xlu0 %4206
      %v4208 = vsel %vm4183, %v3993, 0.0
      %4209 = vadd.xlane.f32.xlu0 %v4208
      %v4210 = vpop.xlane.xlu0 %4209
      %v4211 = vsel %vm4183, %v3995, 0.0
      %4212 = vadd.xlane.f32.xlu0 %v4211
      %v4213 = vpop.xlane.xlu0 %4212
      %v4214 = vsel %vm4183, %v4055, 0.0
      %4215 = vadd.xlane.f32.xlu0 %v4214
      %v4216 = vpop.xlane.xlu0 %4215
      %v4217 = vsel %vm4183, %v4057, 0.0
      %4218 = vadd.xlane.f32.xlu0 %v4217
      %v4219 = vpop.xlane.xlu0 %4218
      %v4220 = vsel %vm4183, %v4117, 0.0
      %4221 = vadd.xlane.f32.xlu0 %v4220
      %v4222 = vpop.xlane.xlu0 %4221
      %v4223 = vsel %vm4183, %v4119, 0.0
      %4224 = vadd.xlane.f32.xlu0 %v4223
      %v4225 = vpop.xlane.xlu0 %4224
      %v4226 = vsel %vm4183, %v4179, 0.0
      %4227 = vadd.xlane.f32.xlu0 %v4226
      %v4228 = vpop.xlane.xlu0 %4227
      %v4229 = vsel %vm4183, %v4181, 0.0
      %4230 = vadd.xlane.f32.xlu0 %v4229
      %v4231 = vpop.xlane.xlu0 %4230
      %v4232 = vadd.f32 %v4186, %v4192
      %v4233 = vadd.f32 %v4232, %v4198
      %v4234 = vadd.f32 %v4233, %v4204
      %v4235 = vadd.f32 %v4234, %v4210
      %v4236 = vadd.f32 %v4235, %v4216
      %v4237 = vadd.f32 %v4236, %v4222
      %v4238 = vadd.f32 %v4237, %v4228
      %v4239 = vadd.f32 %v4189, %v4195
      %v4240 = vadd.f32 %v4239, %v4201
      %v4241 = vadd.f32 %v4240, %v4207
      %v4242 = vadd.f32 %v4241, %v4213
      %v4243 = vadd.f32 %v4242, %v4219
      %v4244 = vadd.f32 %v4243, %v4225
      %v4245 = vadd.f32 %v4244, %v4231
      %v4246 = vrcp.pop 64.0
      %v4247 = vmul.f32 64.0, %v4246
      %v4248 = vsub.f32 1.0, %v4247
      %v4249 = vmul.f32 %v4246, %v4248
      %v4250 = vadd.f32 %v4246, %v4249
      %vm4251 = vweird.f32 %v4246
      %v4252 = vsel %vm4251, %v4246, %v4250
      %v4253 = vmul.f32 %v4238, %v4252
      %v4254 = vmul.f32 %v4245, %v4252
      %v4255 = vsub.f32 %v3745, %v4253
      %v4256 = vsub.f32 %v3747, %v4254
      %v4257 = vsub.f32 %v3807, %v4253
      %v4258 = vsub.f32 %v3809, %v4254
      %v4259 = vsub.f32 %v3869, %v4253
      %v4260 = vsub.f32 %v3871, %v4254
      %v4261 = vsub.f32 %v3931, %v4253
      %v4262 = vsub.f32 %v3933, %v4254
      %v4263 = vsub.f32 %v3993, %v4253
      %v4264 = vsub.f32 %v3995, %v4254
      %v4265 = vsub.f32 %v4055, %v4253
      %v4266 = vsub.f32 %v4057, %v4254
      %v4267 = vsub.f32 %v4117, %v4253
      %v4268 = vsub.f32 %v4119, %v4254
      %v4269 = vsub.f32 %v4179, %v4253
      %v4270 = vsub.f32 %v4181, %v4254
      %v4271 = vmul.f32 %v4255, %v4255
      %v4272 = vmul.f32 %v4256, %v4256
      %v4273 = vmul.f32 %v4257, %v4257
      %v4274 = vmul.f32 %v4258, %v4258
      %v4275 = vmul.f32 %v4259, %v4259
      %v4276 = vmul.f32 %v4260, %v4260
      %v4277 = vmul.f32 %v4261, %v4261
      %v4278 = vmul.f32 %v4262, %v4262
      %v4279 = vmul.f32 %v4263, %v4263
      %v4280 = vmul.f32 %v4264, %v4264
      %v4281 = vmul.f32 %v4265, %v4265
      %v4282 = vmul.f32 %v4266, %v4266
      %v4283 = vmul.f32 %v4267, %v4267
      %v4284 = vmul.f32 %v4268, %v4268
      %v4285 = vmul.f32 %v4269, %v4269
      %v4286 = vmul.f32 %v4270, %v4270
      %v4287 = vsel %vm4183, %v4271, 0.0
      %4288 = vadd.xlane.f32.xlu0 %v4287
      %v4289 = vpop.xlane.xlu0 %4288
      %v4290 = vsel %vm4183, %v4272, 0.0
      %4291 = vadd.xlane.f32.xlu0 %v4290
      %v4292 = vpop.xlane.xlu0 %4291
      %v4293 = vsel %vm4183, %v4273, 0.0
      %4294 = vadd.xlane.f32.xlu0 %v4293
      %v4295 = vpop.xlane.xlu0 %4294
      %v4296 = vsel %vm4183, %v4274, 0.0
      %4297 = vadd.xlane.f32.xlu0 %v4296
      %v4298 = vpop.xlane.xlu0 %4297
      %v4299 = vsel %vm4183, %v4275, 0.0
      %4300 = vadd.xlane.f32.xlu0 %v4299
      %v4301 = vpop.xlane.xlu0 %4300
      %v4302 = vsel %vm4183, %v4276, 0.0
      %4303 = vadd.xlane.f32.xlu0 %v4302
      %v4304 = vpop.xlane.xlu0 %4303
      %v4305 = vsel %vm4183, %v4277, 0.0
      %4306 = vadd.xlane.f32.xlu0 %v4305
      %v4307 = vpop.xlane.xlu0 %4306
      %v4308 = vsel %vm4183, %v4278, 0.0
      %4309 = vadd.xlane.f32.xlu0 %v4308
      %v4310 = vpop.xlane.xlu0 %4309
      %v4311 = vsel %vm4183, %v4279, 0.0
      %4312 = vadd.xlane.f32.xlu0 %v4311
      %v4313 = vpop.xlane.xlu0 %4312
      %v4314 = vsel %vm4183, %v4280, 0.0
      %4315 = vadd.xlane.f32.xlu0 %v4314
      %v4316 = vpop.xlane.xlu0 %4315
      %v4317 = vsel %vm4183, %v4281, 0.0
      %4318 = vadd.xlane.f32.xlu0 %v4317
      %v4319 = vpop.xlane.xlu0 %4318
      %v4320 = vsel %vm4183, %v4282, 0.0
      %4321 = vadd.xlane.f32.xlu0 %v4320
      %v4322 = vpop.xlane.xlu0 %4321
      %v4323 = vsel %vm4183, %v4283, 0.0
      %4324 = vadd.xlane.f32.xlu0 %v4323
      %v4325 = vpop.xlane.xlu0 %4324
      %v4326 = vsel %vm4183, %v4284, 0.0
      %4327 = vadd.xlane.f32.xlu0 %v4326
      %v4328 = vpop.xlane.xlu0 %4327
      %v4329 = vsel %vm4183, %v4285, 0.0
      %4330 = vadd.xlane.f32.xlu0 %v4329
      %v4331 = vpop.xlane.xlu0 %4330
      %v4332 = vsel %vm4183, %v4286, 0.0
      %4333 = vadd.xlane.f32.xlu0 %v4332
      %v4334 = vpop.xlane.xlu0 %4333
      %v4335 = vadd.f32 %v4289, %v4295
      %v4336 = vadd.f32 %v4335, %v4301
      %v4337 = vadd.f32 %v4336, %v4307
      %v4338 = vadd.f32 %v4337, %v4313
      %v4339 = vadd.f32 %v4338, %v4319
      %v4340 = vadd.f32 %v4339, %v4325
      %v4341 = vadd.f32 %v4340, %v4331
      %v4342 = vadd.f32 %v4292, %v4298
      %v4343 = vadd.f32 %v4342, %v4304
      %v4344 = vadd.f32 %v4343, %v4310
      %v4345 = vadd.f32 %v4344, %v4316
      %v4346 = vadd.f32 %v4345, %v4322
      %v4347 = vadd.f32 %v4346, %v4328
      %v4348 = vadd.f32 %v4347, %v4334
      %v4349 = vmul.f32 %v4341, %v4252
      %v4350 = vmul.f32 %v4348, %v4252
      %v4351 = vadd.f32 %v4349, 1e-05
      %v4352 = vadd.f32 %v4350, 1e-05
      %v4353 = vrsqrt.pop %v4351
      %v4354 = vmul.f32 %v4353, %v4351
      %v4355 = vmul.f32 %v4354, %v4353
      %v4356 = vmul.f32 0.5, %v4355
      %v4357 = vsub.f32 1.5, %v4356
      %v4358 = vmul.f32 %v4353, %v4357
      %vm4359 = vweird.f32 %v4351
      %vm4360 = vweird.f32 %v4353
      %vm4361 = vmor %vm4359, %vm4360
      %v4362 = vsel %vm4361, %v4353, %v4358
      %v4363 = vrsqrt.pop %v4352
      %v4364 = vmul.f32 %v4363, %v4352
      %v4365 = vmul.f32 %v4364, %v4363
      %v4366 = vmul.f32 0.5, %v4365
      %v4367 = vsub.f32 1.5, %v4366
      %v4368 = vmul.f32 %v4363, %v4367
      %vm4369 = vweird.f32 %v4352
      %vm4370 = vweird.f32 %v4363
      %vm4371 = vmor %vm4369, %vm4370
      %v4372 = vsel %vm4371, %v4363, %v4368
      %v4373 = vmul.f32 %v4255, %v4362
      %v4374 = vmul.f32 %v4256, %v4372
      %v4375 = vmul.f32 %v4257, %v4362
      %v4376 = vmul.f32 %v4258, %v4372
      %v4377 = vmul.f32 %v4259, %v4362
      %v4378 = vmul.f32 %v4260, %v4372
      %v4379 = vmul.f32 %v4261, %v4362
      %v4380 = vmul.f32 %v4262, %v4372
      %v4381 = vmul.f32 %v4263, %v4362
      %v4382 = vmul.f32 %v4264, %v4372
      %v4383 = vmul.f32 %v4265, %v4362
      %v4384 = vmul.f32 %v4266, %v4372
      %v4385 = vmul.f32 %v4267, %v4362
      %v4386 = vmul.f32 %v4268, %v4372
      %v4387 = vmul.f32 %v4269, %v4362
      %v4388 = vmul.f32 %v4270, %v4372
      %v4389 = vmul.f32 %v4373, 0.2
      %v4390 = vmul.f32 %v4374, 0.2
      %v4391 = vmul.f32 %v4375, 0.2
      %v4392 = vmul.f32 %v4376, 0.2
      %v4393 = vmul.f32 %v4377, 0.2
      %v4394 = vmul.f32 %v4378, 0.2
      %v4395 = vmul.f32 %v4379, 0.2
      %v4396 = vmul.f32 %v4380, 0.2
      %v4397 = vmul.f32 %v4381, 0.2
      %v4398 = vmul.f32 %v4382, 0.2
      %v4399 = vmul.f32 %v4383, 0.2
      %v4400 = vmul.f32 %v4384, 0.2
      %v4401 = vmul.f32 %v4385, 0.2
      %v4402 = vmul.f32 %v4386, 0.2
      %v4403 = vmul.f32 %v4387, 0.2
      %v4404 = vmul.f32 %v4388, 0.2
      %v4405 = vmax.f32 %v4373, %v4389
      %v4406 = vmax.f32 %v4374, %v4390
      %v4407 = vmax.f32 %v4375, %v4391
      %v4408 = vmax.f32 %v4376, %v4392
      %v4409 = vmax.f32 %v4377, %v4393
      %v4410 = vmax.f32 %v4378, %v4394
      %v4411 = vmax.f32 %v4379, %v4395
      %v4412 = vmax.f32 %v4380, %v4396
      %v4413 = vmax.f32 %v4381, %v4397
      %v4414 = vmax.f32 %v4382, %v4398
      %v4415 = vmax.f32 %v4383, %v4399
      %v4416 = vmax.f32 %v4384, %v4400
      %v4417 = vmax.f32 %v4385, %v4401
      %v4418 = vmax.f32 %v4386, %v4402
      %v4419 = vmax.f32 %v4387, %v4403
      %v4420 = vmax.f32 %v4388, %v4404
      %v4421 = vld [vmem:[%s3] sm:$0xff]
      %v4422 = vld [vmem:[%s3 + $0x8] sm:$0xff]
      %v4423 = vld [vmem:[%s3 + $0x10] sm:$0xff]
      %v4424 = vld [vmem:[%s3 + $0x18] sm:$0xff]
      %v4425 = vld [vmem:[%s6] sm:$0xf]
      %v4426 = vpack.c.bf16 %v4407, %v4407
      %v4427 = vpack.c.bf16 %v4408, %v4408
      %v4428 = vpack.c.bf16 %v4405, %v4405
      %v4429 = vpack.c.bf16 %v4406, %v4406
      %v4430 = vpack.c.bf16 %v4409, %v4409
      %v4431 = vpack.c.bf16 %v4410, %v4410
      %v4432 = vpack.c.bf16 %v4411, %v4411
      %v4433 = vpack.c.bf16 %v4412, %v4412
      %v4434 = vpack.c.bf16 %v4413, %v4413
      %v4435 = vpack.c.bf16 %v4414, %v4414
      %v4436 = vpack.c.bf16 %v4415, %v4415
      %v4437 = vpack.c.bf16 %v4416, %v4416
      %v4438 = vpack.c.bf16 %v4417, %v4417
      %v4439 = vpack.c.bf16 %v4418, %v4418
      %v4440 = vpack.c.bf16 %v4419, %v4419
      %v4441 = vpack.c.bf16 %v4420, %v4420
      %v4448 = vunpack.c.l.b16 %v4426
      %v4449 = vunpack.c.l.b16 %v4427
      %v4450 = vunpack.c.l.b16 %v4428
      %v4451 = vunpack.c.l.b16 %v4429
      %v4452 = vunpack.c.l.b16 %v4430
      %v4453 = vunpack.c.l.b16 %v4431
      %v4454 = vpack.c.b16 %v4449, %v4448
      %v4455 = vpack.c.b16 %v4451, %v4450
      %v4456 = vpack.c.b16 %v4453, %v4452
      %v4458 = vsel %vm4183, %v4454, 0
      %v4461 = vsel %vm4183, %v4455, 0
      %v4464 = vsel %vm4183, %v4456, 0
      %vm4466 = vcmask 1043456
      %v4468 = vsel %vm4466, %v4425, 0
      %4470 = vmatpush.bf16.msra.mxu0 0
      %4471 = vmatpush.bf16.msra.mxu0 0
      %4472 = vmatpush.bf16.msra.mxu0 0
      %4473 = vmatpush.bf16.msra.mxu0 0
      %4474 = vmatpush.bf16.msra.mxu0 0
      %4475 = vmatpush.bf16.msra.mxu0 0
      %4476 = vmatpush.bf16.msra.mxu0 0
      %4477 = vmatpush.bf16.msra.mxu0 %v4468
      %4478 = vmatmul.bf16.gmra.mxu0 %v4458
      %v4479 = vpop.f32.mrf.mxu0
      %v4480 = vadd.f32 0.0, %v4479
      %v4481 = vpop.f32.mrf.mxu0
      %v4482 = vadd.f32 0.0, %v4481
      %4483 = vmatmul.bf16.gmra.mxu0 %v4461
      %v4484 = vpop.f32.mrf.mxu0
      %v4485 = vadd.f32 0.0, %v4484
      %v4486 = vpop.f32.mrf.mxu0
      %v4487 = vadd.f32 0.0, %v4486
      %4488 = vmatmul.bf16.gmra.mxu0 %v4458
      %v4489 = vpop.f32.mrf.mxu0
      %v4490 = vadd.f32 0.0, %v4489
      %v4491 = vpop.f32.mrf.mxu0
      %v4492 = vadd.f32 0.0, %v4491
      %4493 = vmatmul.bf16.gmra.mxu0 %v4464
      %v4494 = vpop.f32.mrf.mxu0
      %v4495 = vadd.f32 0.0, %v4494
      %v4496 = vpop.f32.mrf.mxu0
      %v4497 = vadd.f32 0.0, %v4496
      %4498 = vdwg.mxu0
      %v4503 = vunpack.c.l.b16 %v4432
      %v4504 = vunpack.c.l.b16 %v4433
      %v4505 = vunpack.c.l.b16 %v4434
      %v4506 = vunpack.c.l.b16 %v4435
      %v4507 = vpack.c.b16 %v4504, %v4503
      %v4508 = vpack.c.b16 %v4506, %v4505
      %v4510 = vsel %vm4183, %v4507, 0
      %v4513 = vsel %vm4183, %v4508, 0
      %4515 = vmatpush.bf16.msra.mxu0 0
      %4516 = vmatpush.bf16.msra.mxu0 0
      %4517 = vmatpush.bf16.msra.mxu0 0
      %4518 = vmatpush.bf16.msra.mxu0 0
      %4519 = vmatpush.bf16.msra.mxu0 0
      %4520 = vmatpush.bf16.msra.mxu0 0
      %4521 = vmatpush.bf16.msra.mxu0 0
      %4522 = vmatpush.bf16.msra.mxu0 %v4468
      %4523 = vmatmul.bf16.gmra.mxu0 %v4458
      %v4524 = vpop.f32.mrf.mxu0
      %v4525 = vadd.f32 0.0, %v4524
      %v4526 = vpop.f32.mrf.mxu0
      %v4527 = vadd.f32 0.0, %v4526
      %4528 = vmatmul.bf16.gmra.mxu0 %v4464
      %v4529 = vpop.f32.mrf.mxu0
      %v4530 = vadd.f32 0.0, %v4529
      %v4531 = vpop.f32.mrf.mxu0
      %v4532 = vadd.f32 0.0, %v4531
      %4533 = vmatmul.bf16.gmra.mxu0 %v4510
      %v4534 = vpop.f32.mrf.mxu0
      %v4535 = vadd.f32 0.0, %v4534
      %v4536 = vpop.f32.mrf.mxu0
      %v4537 = vadd.f32 0.0, %v4536
      %4538 = vmatmul.bf16.gmra.mxu0 %v4513
      %v4539 = vpop.f32.mrf.mxu0
      %v4540 = vadd.f32 0.0, %v4539
      %v4541 = vpop.f32.mrf.mxu0
      %v4542 = vadd.f32 0.0, %v4541
      %4543 = vdwg.mxu0
      %v4548 = vunpack.c.l.b16 %v4436
      %v4549 = vunpack.c.l.b16 %v4437
      %v4550 = vunpack.c.l.b16 %v4438
      %v4551 = vunpack.c.l.b16 %v4439
      %v4552 = vpack.c.b16 %v4549, %v4548
      %v4553 = vpack.c.b16 %v4551, %v4550
      %v4555 = vsel %vm4183, %v4552, 0
      %v4558 = vsel %vm4183, %v4553, 0
      %4560 = vmatpush.bf16.msra.mxu0 0
      %4561 = vmatpush.bf16.msra.mxu0 0
      %4562 = vmatpush.bf16.msra.mxu0 0
      %4563 = vmatpush.bf16.msra.mxu0 0
      %4564 = vmatpush.bf16.msra.mxu0 0
      %4565 = vmatpush.bf16.msra.mxu0 0
      %4566 = vmatpush.bf16.msra.mxu0 0
      %4567 = vmatpush.bf16.msra.mxu0 %v4468
      %4568 = vmatmul.bf16.gmra.mxu0 %v4510
      %v4569 = vpop.f32.mrf.mxu0
      %v4570 = vadd.f32 0.0, %v4569
      %v4571 = vpop.f32.mrf.mxu0
      %v4572 = vadd.f32 0.0, %v4571
      %4573 = vmatmul.bf16.gmra.mxu0 %v4513
      %v4574 = vpop.f32.mrf.mxu0
      %v4575 = vadd.f32 0.0, %v4574
      %v4576 = vpop.f32.mrf.mxu0
      %v4577 = vadd.f32 0.0, %v4576
      %4578 = vmatmul.bf16.gmra.mxu0 %v4555
      %v4579 = vpop.f32.mrf.mxu0
      %v4580 = vadd.f32 0.0, %v4579
      %v4581 = vpop.f32.mrf.mxu0
      %v4582 = vadd.f32 0.0, %v4581
      %4583 = vmatmul.bf16.gmra.mxu0 %v4558
      %v4584 = vpop.f32.mrf.mxu0
      %v4585 = vadd.f32 0.0, %v4584
      %v4586 = vpop.f32.mrf.mxu0
      %v4587 = vadd.f32 0.0, %v4586
      %4588 = vdwg.mxu0
      %v4591 = vunpack.c.l.b16 %v4440
      %v4592 = vunpack.c.l.b16 %v4441
      %v4593 = vpack.c.b16 %v4592, %v4591
      %v4595 = vsel %vm4183, %v4593, 0
      %4597 = vmatpush.bf16.msra.mxu0 0
      %4598 = vmatpush.bf16.msra.mxu0 0
      %4599 = vmatpush.bf16.msra.mxu0 0
      %4600 = vmatpush.bf16.msra.mxu0 0
      %4601 = vmatpush.bf16.msra.mxu0 0
      %4602 = vmatpush.bf16.msra.mxu0 0
      %4603 = vmatpush.bf16.msra.mxu0 0
      %4604 = vmatpush.bf16.msra.mxu0 %v4468
      %4605 = vmatmul.bf16.gmra.mxu0 %v4555
      %v4606 = vpop.f32.mrf.mxu0
      %v4607 = vadd.f32 0.0, %v4606
      %v4608 = vpop.f32.mrf.mxu0
      %v4609 = vadd.f32 0.0, %v4608
      %4610 = vmatmul.bf16.gmra.mxu0 %v4558
      %v4611 = vpop.f32.mrf.mxu0
      %v4612 = vadd.f32 0.0, %v4611
      %v4613 = vpop.f32.mrf.mxu0
      %v4614 = vadd.f32 0.0, %v4613
      %4615 = vmatmul.bf16.gmra.mxu0 %v4595
      %v4616 = vpop.f32.mrf.mxu0
      %v4617 = vadd.f32 0.0, %v4616
      %v4618 = vpop.f32.mrf.mxu0
      %v4619 = vadd.f32 0.0, %v4618
      %4620 = vmatmul.bf16.gmra.mxu0 %v4558
      %v4621 = vpop.f32.mrf.mxu0
      %v4622 = vadd.f32 0.0, %v4621
      %v4623 = vpop.f32.mrf.mxu0
      %v4624 = vadd.f32 0.0, %v4623
      %4625 = vdwg.mxu0
      %4658 = vrot.lane.b32.xlu0 %v4480, 124
      %v4659 = vpop.permute.xlu0 %4658
      %4660 = vrot.lane.b32.xlu0 %v4482, 124
      %v4661 = vpop.permute.xlu0 %4660
      %4662 = vrot.lane.b32.xlu0 %v4485, 124
      %v4663 = vpop.permute.xlu0 %4662
      %4664 = vrot.lane.b32.xlu0 %v4487, 124
      %v4665 = vpop.permute.xlu0 %4664
      %4666 = vrot.lane.b32.xlu0 %v4490, 124
      %v4667 = vpop.permute.xlu0 %4666
      %4668 = vrot.lane.b32.xlu0 %v4492, 124
      %v4669 = vpop.permute.xlu0 %4668
      %4670 = vrot.lane.b32.xlu0 %v4495, 124
      %v4671 = vpop.permute.xlu0 %4670
      %4672 = vrot.lane.b32.xlu0 %v4497, 124
      %v4673 = vpop.permute.xlu0 %4672
      %4674 = vrot.lane.b32.xlu0 %v4525, 124
      %v4675 = vpop.permute.xlu0 %4674
      %4676 = vrot.lane.b32.xlu0 %v4527, 124
      %v4677 = vpop.permute.xlu0 %4676
      %4678 = vrot.lane.b32.xlu0 %v4530, 124
      %v4679 = vpop.permute.xlu0 %4678
      %4680 = vrot.lane.b32.xlu0 %v4532, 124
      %v4681 = vpop.permute.xlu0 %4680
      %4682 = vrot.lane.b32.xlu0 %v4535, 124
      %v4683 = vpop.permute.xlu0 %4682
      %4684 = vrot.lane.b32.xlu0 %v4537, 124
      %v4685 = vpop.permute.xlu0 %4684
      %4686 = vrot.lane.b32.xlu0 %v4540, 124
      %v4687 = vpop.permute.xlu0 %4686
      %4688 = vrot.lane.b32.xlu0 %v4542, 124
      %v4689 = vpop.permute.xlu0 %4688
      %4690 = vrot.lane.b32.xlu0 %v4570, 124
      %v4691 = vpop.permute.xlu0 %4690
      %4692 = vrot.lane.b32.xlu0 %v4572, 124
      %v4693 = vpop.permute.xlu0 %4692
      %4694 = vrot.lane.b32.xlu0 %v4575, 124
      %v4695 = vpop.permute.xlu0 %4694
      %4696 = vrot.lane.b32.xlu0 %v4577, 124
      %v4697 = vpop.permute.xlu0 %4696
      %4698 = vrot.lane.b32.xlu0 %v4580, 124
      %v4699 = vpop.permute.xlu0 %4698
      %4700 = vrot.lane.b32.xlu0 %v4582, 124
      %v4701 = vpop.permute.xlu0 %4700
      %4702 = vrot.lane.b32.xlu0 %v4585, 124
      %v4703 = vpop.permute.xlu0 %4702
      %4704 = vrot.lane.b32.xlu0 %v4587, 124
      %v4705 = vpop.permute.xlu0 %4704
      %4706 = vrot.lane.b32.xlu0 %v4607, 124
      %v4707 = vpop.permute.xlu0 %4706
      %4708 = vrot.lane.b32.xlu0 %v4609, 124
      %v4709 = vpop.permute.xlu0 %4708
      %4710 = vrot.lane.b32.xlu0 %v4612, 124
      %v4711 = vpop.permute.xlu0 %4710
      %4712 = vrot.lane.b32.xlu0 %v4614, 124
      %v4713 = vpop.permute.xlu0 %4712
      %4714 = vrot.lane.b32.xlu0 %v4617, 124
      %v4715 = vpop.permute.xlu0 %4714
      %4716 = vrot.lane.b32.xlu0 %v4619, 124
      %v4717 = vpop.permute.xlu0 %4716
      %4718 = vrot.lane.b32.xlu0 %v4622, 124
      %v4719 = vpop.permute.xlu0 %4718
      %4720 = vrot.lane.b32.xlu0 %v4624, 124
      %v4721 = vpop.permute.xlu0 %4720
      %4754 = vrot.lane.b32.xlu0 %v4480, 120
      %v4755 = vpop.permute.xlu0 %4754
      %4756 = vrot.lane.b32.xlu0 %v4482, 120
      %v4757 = vpop.permute.xlu0 %4756
      %4758 = vrot.lane.b32.xlu0 %v4485, 120
      %v4759 = vpop.permute.xlu0 %4758
      %4760 = vrot.lane.b32.xlu0 %v4487, 120
      %v4761 = vpop.permute.xlu0 %4760
      %4762 = vrot.lane.b32.xlu0 %v4490, 120
      %v4763 = vpop.permute.xlu0 %4762
      %4764 = vrot.lane.b32.xlu0 %v4492, 120
      %v4765 = vpop.permute.xlu0 %4764
      %4766 = vrot.lane.b32.xlu0 %v4495, 120
      %v4767 = vpop.permute.xlu0 %4766
      %4768 = vrot.lane.b32.xlu0 %v4497, 120
      %v4769 = vpop.permute.xlu0 %4768
      %4770 = vrot.lane.b32.xlu0 %v4525, 120
      %v4771 = vpop.permute.xlu0 %4770
      %4772 = vrot.lane.b32.xlu0 %v4527, 120
      %v4773 = vpop.permute.xlu0 %4772
      %4774 = vrot.lane.b32.xlu0 %v4530, 120
      %v4775 = vpop.permute.xlu0 %4774
      %4776 = vrot.lane.b32.xlu0 %v4532, 120
      %v4777 = vpop.permute.xlu0 %4776
      %4778 = vrot.lane.b32.xlu0 %v4535, 120
      %v4779 = vpop.permute.xlu0 %4778
      %4780 = vrot.lane.b32.xlu0 %v4537, 120
      %v4781 = vpop.permute.xlu0 %4780
      %4782 = vrot.lane.b32.xlu0 %v4540, 120
      %v4783 = vpop.permute.xlu0 %4782
      %4784 = vrot.lane.b32.xlu0 %v4542, 120
      %v4785 = vpop.permute.xlu0 %4784
      %4786 = vrot.lane.b32.xlu0 %v4570, 120
      %v4787 = vpop.permute.xlu0 %4786
      %4788 = vrot.lane.b32.xlu0 %v4572, 120
      %v4789 = vpop.permute.xlu0 %4788
      %4790 = vrot.lane.b32.xlu0 %v4575, 120
      %v4791 = vpop.permute.xlu0 %4790
      %4792 = vrot.lane.b32.xlu0 %v4577, 120
      %v4793 = vpop.permute.xlu0 %4792
      %4794 = vrot.lane.b32.xlu0 %v4580, 120
      %v4795 = vpop.permute.xlu0 %4794
      %4796 = vrot.lane.b32.xlu0 %v4582, 120
      %v4797 = vpop.permute.xlu0 %4796
      %4798 = vrot.lane.b32.xlu0 %v4585, 120
      %v4799 = vpop.permute.xlu0 %4798
      %4800 = vrot.lane.b32.xlu0 %v4587, 120
      %v4801 = vpop.permute.xlu0 %4800
      %4802 = vrot.lane.b32.xlu0 %v4607, 120
      %v4803 = vpop.permute.xlu0 %4802
      %4804 = vrot.lane.b32.xlu0 %v4609, 120
      %v4805 = vpop.permute.xlu0 %4804
      %4806 = vrot.lane.b32.xlu0 %v4612, 120
      %v4807 = vpop.permute.xlu0 %4806
      %4808 = vrot.lane.b32.xlu0 %v4614, 120
      %v4809 = vpop.permute.xlu0 %4808
      %4810 = vrot.lane.b32.xlu0 %v4617, 120
      %v4811 = vpop.permute.xlu0 %4810
      %4812 = vrot.lane.b32.xlu0 %v4619, 120
      %v4813 = vpop.permute.xlu0 %4812
      %4814 = vrot.lane.b32.xlu0 %v4622, 120
      %v4815 = vpop.permute.xlu0 %4814
      %4816 = vrot.lane.b32.xlu0 %v4624, 120
      %v4817 = vpop.permute.xlu0 %4816
      %4850 = vrot.lane.b32.xlu0 %v4480, 116
      %v4851 = vpop.permute.xlu0 %4850
      %4852 = vrot.lane.b32.xlu0 %v4482, 116
      %v4853 = vpop.permute.xlu0 %4852
      %4854 = vrot.lane.b32.xlu0 %v4485, 116
      %v4855 = vpop.permute.xlu0 %4854
      %4856 = vrot.lane.b32.xlu0 %v4487, 116
      %v4857 = vpop.permute.xlu0 %4856
      %4858 = vrot.lane.b32.xlu0 %v4490, 116
      %v4859 = vpop.permute.xlu0 %4858
      %4860 = vrot.lane.b32.xlu0 %v4492, 116
      %v4861 = vpop.permute.xlu0 %4860
      %4862 = vrot.lane.b32.xlu0 %v4495, 116
      %v4863 = vpop.permute.xlu0 %4862
      %4864 = vrot.lane.b32.xlu0 %v4497, 116
      %v4865 = vpop.permute.xlu0 %4864
      %4866 = vrot.lane.b32.xlu0 %v4525, 116
      %v4867 = vpop.permute.xlu0 %4866
      %4868 = vrot.lane.b32.xlu0 %v4527, 116
      %v4869 = vpop.permute.xlu0 %4868
      %4870 = vrot.lane.b32.xlu0 %v4530, 116
      %v4871 = vpop.permute.xlu0 %4870
      %4872 = vrot.lane.b32.xlu0 %v4532, 116
      %v4873 = vpop.permute.xlu0 %4872
      %4874 = vrot.lane.b32.xlu0 %v4535, 116
      %v4875 = vpop.permute.xlu0 %4874
      %4876 = vrot.lane.b32.xlu0 %v4537, 116
      %v4877 = vpop.permute.xlu0 %4876
      %4878 = vrot.lane.b32.xlu0 %v4540, 116
      %v4879 = vpop.permute.xlu0 %4878
      %4880 = vrot.lane.b32.xlu0 %v4542, 116
      %v4881 = vpop.permute.xlu0 %4880
      %4882 = vrot.lane.b32.xlu0 %v4570, 116
      %v4883 = vpop.permute.xlu0 %4882
      %4884 = vrot.lane.b32.xlu0 %v4572, 116
      %v4885 = vpop.permute.xlu0 %4884
      %4886 = vrot.lane.b32.xlu0 %v4575, 116
      %v4887 = vpop.permute.xlu0 %4886
      %4888 = vrot.lane.b32.xlu0 %v4577, 116
      %v4889 = vpop.permute.xlu0 %4888
      %4890 = vrot.lane.b32.xlu0 %v4580, 116
      %v4891 = vpop.permute.xlu0 %4890
      %4892 = vrot.lane.b32.xlu0 %v4582, 116
      %v4893 = vpop.permute.xlu0 %4892
      %4894 = vrot.lane.b32.xlu0 %v4585, 116
      %v4895 = vpop.permute.xlu0 %4894
      %4896 = vrot.lane.b32.xlu0 %v4587, 116
      %v4897 = vpop.permute.xlu0 %4896
      %4898 = vrot.lane.b32.xlu0 %v4607, 116
      %v4899 = vpop.permute.xlu0 %4898
      %4900 = vrot.lane.b32.xlu0 %v4609, 116
      %v4901 = vpop.permute.xlu0 %4900
      %4902 = vrot.lane.b32.xlu0 %v4612, 116
      %v4903 = vpop.permute.xlu0 %4902
      %4904 = vrot.lane.b32.xlu0 %v4614, 116
      %v4905 = vpop.permute.xlu0 %4904
      %4906 = vrot.lane.b32.xlu0 %v4617, 116
      %v4907 = vpop.permute.xlu0 %4906
      %4908 = vrot.lane.b32.xlu0 %v4619, 116
      %v4909 = vpop.permute.xlu0 %4908
      %4910 = vrot.lane.b32.xlu0 %v4622, 116
      %v4911 = vpop.permute.xlu0 %4910
      %4912 = vrot.lane.b32.xlu0 %v4624, 116
      %v4913 = vpop.permute.xlu0 %4912
      %v4946 = vpack.c.bf16 %v4480, %v4480
      %v4947 = vpack.c.bf16 %v4482, %v4482
      %v4948 = vpack.c.bf16 %v4485, %v4485
      %v4949 = vpack.c.bf16 %v4487, %v4487
      %v4950 = vpack.c.bf16 %v4490, %v4490
      %v4951 = vpack.c.bf16 %v4492, %v4492
      %v4952 = vpack.c.bf16 %v4495, %v4495
      %v4953 = vpack.c.bf16 %v4497, %v4497
      %v4954 = vpack.c.bf16 %v4659, %v4659
      %v4955 = vpack.c.bf16 %v4661, %v4661
      %v4956 = vpack.c.bf16 %v4663, %v4663
      %v4957 = vpack.c.bf16 %v4665, %v4665
      %v4958 = vpack.c.bf16 %v4667, %v4667
      %v4959 = vpack.c.bf16 %v4669, %v4669
      %v4960 = vpack.c.bf16 %v4671, %v4671
      %v4961 = vpack.c.bf16 %v4673, %v4673
      %v4962 = vpack.c.bf16 %v4755, %v4755
      %v4963 = vpack.c.bf16 %v4757, %v4757
      %v4964 = vpack.c.bf16 %v4759, %v4759
      %v4965 = vpack.c.bf16 %v4761, %v4761
      %v4966 = vpack.c.bf16 %v4763, %v4763
      %v4967 = vpack.c.bf16 %v4765, %v4765
      %v4968 = vpack.c.bf16 %v4767, %v4767
      %v4969 = vpack.c.bf16 %v4769, %v4769
      %v4970 = vpack.c.bf16 %v4851, %v4851
      %v4971 = vpack.c.bf16 %v4853, %v4853
      %v4972 = vpack.c.bf16 %v4855, %v4855
      %v4973 = vpack.c.bf16 %v4857, %v4857
      %v4974 = vpack.c.bf16 %v4859, %v4859
      %v4975 = vpack.c.bf16 %v4861, %v4861
      %v4976 = vpack.c.bf16 %v4863, %v4863
      %v4977 = vpack.c.bf16 %v4865, %v4865
      %v4978 = vpack.c.bf16 %v4525, %v4525
      %v4979 = vpack.c.bf16 %v4527, %v4527
      %v4980 = vpack.c.bf16 %v4530, %v4530
      %v4981 = vpack.c.bf16 %v4532, %v4532
      %v4982 = vpack.c.bf16 %v4535, %v4535
      %v4983 = vpack.c.bf16 %v4537, %v4537
      %v4984 = vpack.c.bf16 %v4540, %v4540
      %v4985 = vpack.c.bf16 %v4542, %v4542
      %v4986 = vpack.c.bf16 %v4675, %v4675
      %v4987 = vpack.c.bf16 %v4677, %v4677
      %v4988 = vpack.c.bf16 %v4679, %v4679
      %v4989 = vpack.c.bf16 %v4681, %v4681
      %v4990 = vpack.c.bf16 %v4683, %v4683
      %v4991 = vpack.c.bf16 %v4685, %v4685
      %v4992 = vpack.c.bf16 %v4687, %v4687
      %v4993 = vpack.c.bf16 %v4689, %v4689
      %v4994 = vpack.c.bf16 %v4771, %v4771
      %v4995 = vpack.c.bf16 %v4773, %v4773
      %v4996 = vpack.c.bf16 %v4775, %v4775
      %v4997 = vpack.c.bf16 %v4777, %v4777
      %v4998 = vpack.c.bf16 %v4779, %v4779
      %v4999 = vpack.c.bf16 %v4781, %v4781
      %v5000 = vpack.c.bf16 %v4783, %v4783
      %v5001 = vpack.c.bf16 %v4785, %v4785
      %v5002 = vpack.c.bf16 %v4867, %v4867
      %v5003 = vpack.c.bf16 %v4869, %v4869
      %v5004 = vpack.c.bf16 %v4871, %v4871
      %v5005 = vpack.c.bf16 %v4873, %v4873
      %v5006 = vpack.c.bf16 %v4875, %v4875
      %v5007 = vpack.c.bf16 %v4877, %v4877
      %v5008 = vpack.c.bf16 %v4879, %v4879
      %v5009 = vpack.c.bf16 %v4881, %v4881
      %v5010 = vpack.c.bf16 %v4570, %v4570
      %v5011 = vpack.c.bf16 %v4572, %v4572
      %v5012 = vpack.c.bf16 %v4575, %v4575
      %v5013 = vpack.c.bf16 %v4577, %v4577
      %v5014 = vpack.c.bf16 %v4580, %v4580
      %v5015 = vpack.c.bf16 %v4582, %v4582
      %v5016 = vpack.c.bf16 %v4585, %v4585
      %v5017 = vpack.c.bf16 %v4587, %v4587
      %v5018 = vpack.c.bf16 %v4691, %v4691
      %v5019 = vpack.c.bf16 %v4693, %v4693
      %v5020 = vpack.c.bf16 %v4695, %v4695
      %v5021 = vpack.c.bf16 %v4697, %v4697
      %v5022 = vpack.c.bf16 %v4699, %v4699
      %v5023 = vpack.c.bf16 %v4701, %v4701
      %v5024 = vpack.c.bf16 %v4703, %v4703
      %v5025 = vpack.c.bf16 %v4705, %v4705
      %v5026 = vpack.c.bf16 %v4787, %v4787
      %v5027 = vpack.c.bf16 %v4789, %v4789
      %v5028 = vpack.c.bf16 %v4791, %v4791
      %v5029 = vpack.c.bf16 %v4793, %v4793
      %v5030 = vpack.c.bf16 %v4795, %v4795
      %v5031 = vpack.c.bf16 %v4797, %v4797
      %v5032 = vpack.c.bf16 %v4799, %v4799
      %v5033 = vpack.c.bf16 %v4801, %v4801
      %v5034 = vpack.c.bf16 %v4883, %v4883
      %v5035 = vpack.c.bf16 %v4885, %v4885
      %v5036 = vpack.c.bf16 %v4887, %v4887
      %v5037 = vpack.c.bf16 %v4889, %v4889
      %v5038 = vpack.c.bf16 %v4891, %v4891
      %v5039 = vpack.c.bf16 %v4893, %v4893
      %v5040 = vpack.c.bf16 %v4895, %v4895
      %v5041 = vpack.c.bf16 %v4897, %v4897
      %v5042 = vpack.c.bf16 %v4607, %v4607
      %v5043 = vpack.c.bf16 %v4609, %v4609
      %v5044 = vpack.c.bf16 %v4612, %v4612
      %v5045 = vpack.c.bf16 %v4614, %v4614
      %v5046 = vpack.c.bf16 %v4617, %v4617
      %v5047 = vpack.c.bf16 %v4619, %v4619
      %v5048 = vpack.c.bf16 %v4622, %v4622
      %v5049 = vpack.c.bf16 %v4624, %v4624
      %v5050 = vpack.c.bf16 %v4707, %v4707
      %v5051 = vpack.c.bf16 %v4709, %v4709
      %v5052 = vpack.c.bf16 %v4711, %v4711
      %v5053 = vpack.c.bf16 %v4713, %v4713
      %v5054 = vpack.c.bf16 %v4715, %v4715
      %v5055 = vpack.c.bf16 %v4717, %v4717
      %v5056 = vpack.c.bf16 %v4719, %v4719
      %v5057 = vpack.c.bf16 %v4721, %v4721
      %v5058 = vpack.c.bf16 %v4803, %v4803
      %v5059 = vpack.c.bf16 %v4805, %v4805
      %v5060 = vpack.c.bf16 %v4807, %v4807
      %v5061 = vpack.c.bf16 %v4809, %v4809
      %v5062 = vpack.c.bf16 %v4811, %v4811
      %v5063 = vpack.c.bf16 %v4813, %v4813
      %v5064 = vpack.c.bf16 %v4815, %v4815
      %v5065 = vpack.c.bf16 %v4817, %v4817
      %v5066 = vpack.c.bf16 %v4899, %v4899
      %v5067 = vpack.c.bf16 %v4901, %v4901
      %v5068 = vpack.c.bf16 %v4903, %v4903
      %v5069 = vpack.c.bf16 %v4905, %v4905
      %v5070 = vpack.c.bf16 %v4907, %v4907
      %v5071 = vpack.c.bf16 %v4909, %v4909
      %v5072 = vpack.c.bf16 %v4911, %v4911
      %v5073 = vpack.c.bf16 %v4913, %v4913
      %v5078 = vunpack.c.l.b16 %v4421
      %v5079 = vunpack.c.h.b16 %v4421
      %v5080 = vunpack.c.l.b16 %v4422
      %v5081 = vunpack.c.h.b16 %v4422
      %v5082 = vunpack.c.l.b16 %v4423
      %v5083 = vunpack.c.h.b16 %v4423
      %v5084 = vunpack.c.l.b16 %v4424
      %v5085 = vunpack.c.h.b16 %v4424
      %v5086 = vpack.c.b16 %v5080, %v5078
      %v5087 = vpack.c.b16 %v5081, %v5079
      %v5088 = vpack.c.b16 %v5084, %v5082
      %v5089 = vpack.c.b16 %v5085, %v5083
      %v5126 = vunpack.c.l.b16 %v4946
      %v5127 = vunpack.c.l.b16 %v4947
      %v5128 = vunpack.c.l.b16 %v4948
      %v5129 = vunpack.c.l.b16 %v4949
      %v5130 = vunpack.c.l.b16 %v4950
      %v5131 = vunpack.c.l.b16 %v4951
      %v5132 = vunpack.c.l.b16 %v4952
      %v5133 = vunpack.c.l.b16 %v4953
      %v5134 = vunpack.c.l.b16 %v4954
      %v5135 = vunpack.c.l.b16 %v4955
      %v5136 = vunpack.c.l.b16 %v4956
      %v5137 = vunpack.c.l.b16 %v4957
      %v5138 = vunpack.c.l.b16 %v4958
      %v5139 = vunpack.c.l.b16 %v4959
      %v5140 = vunpack.c.l.b16 %v4960
      %v5141 = vunpack.c.l.b16 %v4961
      %v5142 = vunpack.c.l.b16 %v4962
      %v5143 = vunpack.c.l.b16 %v4963
      %v5144 = vunpack.c.l.b16 %v4964
      %v5145 = vunpack.c.l.b16 %v4965
      %v5146 = vunpack.c.l.b16 %v4966
      %v5147 = vunpack.c.l.b16 %v4967
      %v5148 = vunpack.c.l.b16 %v4968
      %v5149 = vunpack.c.l.b16 %v4969
      %v5150 = vunpack.c.l.b16 %v4970
      %v5151 = vunpack.c.l.b16 %v4971
      %v5152 = vunpack.c.l.b16 %v4972
      %v5153 = vunpack.c.l.b16 %v4973
      %v5154 = vunpack.c.l.b16 %v4974
      %v5155 = vunpack.c.l.b16 %v4975
      %v5156 = vunpack.c.l.b16 %v4976
      %v5157 = vunpack.c.l.b16 %v4977
      %v5158 = vpack.c.b16 %v5127, %v5126
      %v5159 = vpack.c.b16 %v5129, %v5128
      %v5160 = vpack.c.b16 %v5131, %v5130
      %v5161 = vpack.c.b16 %v5133, %v5132
      %v5162 = vpack.c.b16 %v5135, %v5134
      %v5163 = vpack.c.b16 %v5137, %v5136
      %v5164 = vpack.c.b16 %v5139, %v5138
      %v5165 = vpack.c.b16 %v5141, %v5140
      %v5166 = vpack.c.b16 %v5143, %v5142
      %v5167 = vpack.c.b16 %v5145, %v5144
      %v5168 = vpack.c.b16 %v5147, %v5146
      %v5169 = vpack.c.b16 %v5149, %v5148
      %v5170 = vpack.c.b16 %v5151, %v5150
      %v5171 = vpack.c.b16 %v5153, %v5152
      %v5172 = vpack.c.b16 %v5155, %v5154
      %v5173 = vpack.c.b16 %v5157, %v5156
      %5190 = vmatpush.bf16.msra.mxu0 %v5165
      %5191 = vmatpush.bf16.msra.mxu0 %v5164
      %5192 = vmatpush.bf16.msra.mxu0 %v5163
      %5193 = vmatpush.bf16.msra.mxu0 %v5162
      %5194 = vmatpush.bf16.msra.mxu0 %v5161
      %5195 = vmatpush.bf16.msra.mxu0 %v5160
      %5196 = vmatpush.bf16.msra.mxu0 %v5159
      %5197 = vmatpush.bf16.msra.mxu0 %v5158
      %5198 = vmatmul.bf16.gmra.mxu0 %v5086
      %v5199 = vpop.f32.mrf.mxu0
      %v5200 = vadd.f32 0.0, %v5199
      %v5201 = vpop.f32.mrf.mxu0
      %v5202 = vadd.f32 0.0, %v5201
      %5203 = vmatmul.bf16.gmra.mxu0 %v5088
      %v5204 = vpop.f32.mrf.mxu0
      %v5205 = vadd.f32 0.0, %v5204
      %v5206 = vpop.f32.mrf.mxu0
      %v5207 = vadd.f32 0.0, %v5206
      %5208 = vdwg.mxu0
      %5209 = vmatpush.bf16.msra.mxu0 %v5173
      %5210 = vmatpush.bf16.msra.mxu0 %v5172
      %5211 = vmatpush.bf16.msra.mxu0 %v5171
      %5212 = vmatpush.bf16.msra.mxu0 %v5170
      %5213 = vmatpush.bf16.msra.mxu0 %v5169
      %5214 = vmatpush.bf16.msra.mxu0 %v5168
      %5215 = vmatpush.bf16.msra.mxu0 %v5167
      %5216 = vmatpush.bf16.msra.mxu0 %v5166
      %5217 = vmatmul.bf16.gmra.mxu0 %v5087
      %v5218 = vpop.f32.mrf.mxu0
      %v5219 = vadd.f32 %v5200, %v5218
      %v5220 = vpop.f32.mrf.mxu0
      %v5221 = vadd.f32 %v5202, %v5220
      %5222 = vmatmul.bf16.gmra.mxu0 %v5089
      %v5223 = vpop.f32.mrf.mxu0
      %v5224 = vadd.f32 %v5205, %v5223
      %v5225 = vpop.f32.mrf.mxu0
      %v5226 = vadd.f32 %v5207, %v5225
      %5227 = vdwg.mxu0
      %v5260 = vunpack.c.l.b16 %v4978
      %v5261 = vunpack.c.l.b16 %v4979
      %v5262 = vunpack.c.l.b16 %v4980
      %v5263 = vunpack.c.l.b16 %v4981
      %v5264 = vunpack.c.l.b16 %v4982
      %v5265 = vunpack.c.l.b16 %v4983
      %v5266 = vunpack.c.l.b16 %v4984
      %v5267 = vunpack.c.l.b16 %v4985
      %v5268 = vunpack.c.l.b16 %v4986
      %v5269 = vunpack.c.l.b16 %v4987
      %v5270 = vunpack.c.l.b16 %v4988
      %v5271 = vunpack.c.l.b16 %v4989
      %v5272 = vunpack.c.l.b16 %v4990
      %v5273 = vunpack.c.l.b16 %v4991
      %v5274 = vunpack.c.l.b16 %v4992
      %v5275 = vunpack.c.l.b16 %v4993
      %v5276 = vunpack.c.l.b16 %v4994
      %v5277 = vunpack.c.l.b16 %v4995
      %v5278 = vunpack.c.l.b16 %v4996
      %v5279 = vunpack.c.l.b16 %v4997
      %v5280 = vunpack.c.l.b16 %v4998
      %v5281 = vunpack.c.l.b16 %v4999
      %v5282 = vunpack.c.l.b16 %v5000
      %v5283 = vunpack.c.l.b16 %v5001
      %v5284 = vunpack.c.l.b16 %v5002
      %v5285 = vunpack.c.l.b16 %v5003
      %v5286 = vunpack.c.l.b16 %v5004
      %v5287 = vunpack.c.l.b16 %v5005
      %v5288 = vunpack.c.l.b16 %v5006
      %v5289 = vunpack.c.l.b16 %v5007
      %v5290 = vunpack.c.l.b16 %v5008
      %v5291 = vunpack.c.l.b16 %v5009
      %v5292 = vpack.c.b16 %v5261, %v5260
      %v5293 = vpack.c.b16 %v5263, %v5262
      %v5294 = vpack.c.b16 %v5265, %v5264
      %v5295 = vpack.c.b16 %v5267, %v5266
      %v5296 = vpack.c.b16 %v5269, %v5268
      %v5297 = vpack.c.b16 %v5271, %v5270
      %v5298 = vpack.c.b16 %v5273, %v5272
      %v5299 = vpack.c.b16 %v5275, %v5274
      %v5300 = vpack.c.b16 %v5277, %v5276
      %v5301 = vpack.c.b16 %v5279, %v5278
      %v5302 = vpack.c.b16 %v5281, %v5280
      %v5303 = vpack.c.b16 %v5283, %v5282
      %v5304 = vpack.c.b16 %v5285, %v5284
      %v5305 = vpack.c.b16 %v5287, %v5286
      %v5306 = vpack.c.b16 %v5289, %v5288
      %v5307 = vpack.c.b16 %v5291, %v5290
      %5324 = vmatpush.bf16.msra.mxu0 %v5299
      %5325 = vmatpush.bf16.msra.mxu0 %v5298
      %5326 = vmatpush.bf16.msra.mxu0 %v5297
      %5327 = vmatpush.bf16.msra.mxu0 %v5296
      %5328 = vmatpush.bf16.msra.mxu0 %v5295
      %5329 = vmatpush.bf16.msra.mxu0 %v5294
      %5330 = vmatpush.bf16.msra.mxu0 %v5293
      %5331 = vmatpush.bf16.msra.mxu0 %v5292
      %5332 = vmatmul.bf16.gmra.mxu0 %v5086
      %v5333 = vpop.f32.mrf.mxu0
      %v5334 = vadd.f32 0.0, %v5333
      %v5335 = vpop.f32.mrf.mxu0
      %v5336 = vadd.f32 0.0, %v5335
      %5337 = vmatmul.bf16.gmra.mxu0 %v5088
      %v5338 = vpop.f32.mrf.mxu0
      %v5339 = vadd.f32 0.0, %v5338
      %v5340 = vpop.f32.mrf.mxu0
      %v5341 = vadd.f32 0.0, %v5340
      %5342 = vdwg.mxu0
      %5343 = vmatpush.bf16.msra.mxu0 %v5307
      %5344 = vmatpush.bf16.msra.mxu0 %v5306
      %5345 = vmatpush.bf16.msra.mxu0 %v5305
      %5346 = vmatpush.bf16.msra.mxu0 %v5304
      %5347 = vmatpush.bf16.msra.mxu0 %v5303
      %5348 = vmatpush.bf16.msra.mxu0 %v5302
      %5349 = vmatpush.bf16.msra.mxu0 %v5301
      %5350 = vmatpush.bf16.msra.mxu0 %v5300
      %5351 = vmatmul.bf16.gmra.mxu0 %v5087
      %v5352 = vpop.f32.mrf.mxu0
      %v5353 = vadd.f32 %v5334, %v5352
      %v5354 = vpop.f32.mrf.mxu0
      %v5355 = vadd.f32 %v5336, %v5354
      %5356 = vmatmul.bf16.gmra.mxu0 %v5089
      %v5357 = vpop.f32.mrf.mxu0
      %v5358 = vadd.f32 %v5339, %v5357
      %v5359 = vpop.f32.mrf.mxu0
      %v5360 = vadd.f32 %v5341, %v5359
      %5361 = vdwg.mxu0
      %v5394 = vunpack.c.l.b16 %v5010
      %v5395 = vunpack.c.l.b16 %v5011
      %v5396 = vunpack.c.l.b16 %v5012
      %v5397 = vunpack.c.l.b16 %v5013
      %v5398 = vunpack.c.l.b16 %v5014
      %v5399 = vunpack.c.l.b16 %v5015
      %v5400 = vunpack.c.l.b16 %v5016
      %v5401 = vunpack.c.l.b16 %v5017
      %v5402 = vunpack.c.l.b16 %v5018
      %v5403 = vunpack.c.l.b16 %v5019
      %v5404 = vunpack.c.l.b16 %v5020
      %v5405 = vunpack.c.l.b16 %v5021
      %v5406 = vunpack.c.l.b16 %v5022
      %v5407 = vunpack.c.l.b16 %v5023
      %v5408 = vunpack.c.l.b16 %v5024
      %v5409 = vunpack.c.l.b16 %v5025
      %v5410 = vunpack.c.l.b16 %v5026
      %v5411 = vunpack.c.l.b16 %v5027
      %v5412 = vunpack.c.l.b16 %v5028
      %v5413 = vunpack.c.l.b16 %v5029
      %v5414 = vunpack.c.l.b16 %v5030
      %v5415 = vunpack.c.l.b16 %v5031
      %v5416 = vunpack.c.l.b16 %v5032
      %v5417 = vunpack.c.l.b16 %v5033
      %v5418 = vunpack.c.l.b16 %v5034
      %v5419 = vunpack.c.l.b16 %v5035
      %v5420 = vunpack.c.l.b16 %v5036
      %v5421 = vunpack.c.l.b16 %v5037
      %v5422 = vunpack.c.l.b16 %v5038
      %v5423 = vunpack.c.l.b16 %v5039
      %v5424 = vunpack.c.l.b16 %v5040
      %v5425 = vunpack.c.l.b16 %v5041
      %v5426 = vpack.c.b16 %v5395, %v5394
      %v5427 = vpack.c.b16 %v5397, %v5396
      %v5428 = vpack.c.b16 %v5399, %v5398
      %v5429 = vpack.c.b16 %v5401, %v5400
      %v5430 = vpack.c.b16 %v5403, %v5402
      %v5431 = vpack.c.b16 %v5405, %v5404
      %v5432 = vpack.c.b16 %v5407, %v5406
      %v5433 = vpack.c.b16 %v5409, %v5408
      %v5434 = vpack.c.b16 %v5411, %v5410
      %v5435 = vpack.c.b16 %v5413, %v5412
      %v5436 = vpack.c.b16 %v5415, %v5414
      %v5437 = vpack.c.b16 %v5417, %v5416
      %v5438 = vpack.c.b16 %v5419, %v5418
      %v5439 = vpack.c.b16 %v5421, %v5420
      %v5440 = vpack.c.b16 %v5423, %v5422
      %v5441 = vpack.c.b16 %v5425, %v5424
      %5458 = vmatpush.bf16.msra.mxu0 %v5433
      %5459 = vmatpush.bf16.msra.mxu0 %v5432
      %5460 = vmatpush.bf16.msra.mxu0 %v5431
      %5461 = vmatpush.bf16.msra.mxu0 %v5430
      %5462 = vmatpush.bf16.msra.mxu0 %v5429
      %5463 = vmatpush.bf16.msra.mxu0 %v5428
      %5464 = vmatpush.bf16.msra.mxu0 %v5427
      %5465 = vmatpush.bf16.msra.mxu0 %v5426
      %5466 = vmatmul.bf16.gmra.mxu0 %v5086
      %v5467 = vpop.f32.mrf.mxu0
      %v5468 = vadd.f32 0.0, %v5467
      %v5469 = vpop.f32.mrf.mxu0
      %v5470 = vadd.f32 0.0, %v5469
      %5471 = vmatmul.bf16.gmra.mxu0 %v5088
      %v5472 = vpop.f32.mrf.mxu0
      %v5473 = vadd.f32 0.0, %v5472
      %v5474 = vpop.f32.mrf.mxu0
      %v5475 = vadd.f32 0.0, %v5474
      %5476 = vdwg.mxu0
      %5477 = vmatpush.bf16.msra.mxu0 %v5441
      %5478 = vmatpush.bf16.msra.mxu0 %v5440
      %5479 = vmatpush.bf16.msra.mxu0 %v5439
      %5480 = vmatpush.bf16.msra.mxu0 %v5438
      %5481 = vmatpush.bf16.msra.mxu0 %v5437
      %5482 = vmatpush.bf16.msra.mxu0 %v5436
      %5483 = vmatpush.bf16.msra.mxu0 %v5435
      %5484 = vmatpush.bf16.msra.mxu0 %v5434
      %5485 = vmatmul.bf16.gmra.mxu0 %v5087
      %v5486 = vpop.f32.mrf.mxu0
      %v5487 = vadd.f32 %v5468, %v5486
      %v5488 = vpop.f32.mrf.mxu0
      %v5489 = vadd.f32 %v5470, %v5488
      %5490 = vmatmul.bf16.gmra.mxu0 %v5089
      %v5491 = vpop.f32.mrf.mxu0
      %v5492 = vadd.f32 %v5473, %v5491
      %v5493 = vpop.f32.mrf.mxu0
      %v5494 = vadd.f32 %v5475, %v5493
      %5495 = vdwg.mxu0
      %v5528 = vunpack.c.l.b16 %v5042
      %v5529 = vunpack.c.l.b16 %v5043
      %v5530 = vunpack.c.l.b16 %v5044
      %v5531 = vunpack.c.l.b16 %v5045
      %v5532 = vunpack.c.l.b16 %v5046
      %v5533 = vunpack.c.l.b16 %v5047
      %v5534 = vunpack.c.l.b16 %v5048
      %v5535 = vunpack.c.l.b16 %v5049
      %v5536 = vunpack.c.l.b16 %v5050
      %v5537 = vunpack.c.l.b16 %v5051
      %v5538 = vunpack.c.l.b16 %v5052
      %v5539 = vunpack.c.l.b16 %v5053
      %v5540 = vunpack.c.l.b16 %v5054
      %v5541 = vunpack.c.l.b16 %v5055
      %v5542 = vunpack.c.l.b16 %v5056
      %v5543 = vunpack.c.l.b16 %v5057
      %v5544 = vunpack.c.l.b16 %v5058
      %v5545 = vunpack.c.l.b16 %v5059
      %v5546 = vunpack.c.l.b16 %v5060
      %v5547 = vunpack.c.l.b16 %v5061
      %v5548 = vunpack.c.l.b16 %v5062
      %v5549 = vunpack.c.l.b16 %v5063
      %v5550 = vunpack.c.l.b16 %v5064
      %v5551 = vunpack.c.l.b16 %v5065
      %v5552 = vunpack.c.l.b16 %v5066
      %v5553 = vunpack.c.l.b16 %v5067
      %v5554 = vunpack.c.l.b16 %v5068
      %v5555 = vunpack.c.l.b16 %v5069
      %v5556 = vunpack.c.l.b16 %v5070
      %v5557 = vunpack.c.l.b16 %v5071
      %v5558 = vunpack.c.l.b16 %v5072
      %v5559 = vunpack.c.l.b16 %v5073
      %v5560 = vpack.c.b16 %v5529, %v5528
      %v5561 = vpack.c.b16 %v5531, %v5530
      %v5562 = vpack.c.b16 %v5533, %v5532
      %v5563 = vpack.c.b16 %v5535, %v5534
      %v5564 = vpack.c.b16 %v5537, %v5536
      %v5565 = vpack.c.b16 %v5539, %v5538
      %v5566 = vpack.c.b16 %v5541, %v5540
      %v5567 = vpack.c.b16 %v5543, %v5542
      %v5568 = vpack.c.b16 %v5545, %v5544
      %v5569 = vpack.c.b16 %v5547, %v5546
      %v5570 = vpack.c.b16 %v5549, %v5548
      %v5571 = vpack.c.b16 %v5551, %v5550
      %v5572 = vpack.c.b16 %v5553, %v5552
      %v5573 = vpack.c.b16 %v5555, %v5554
      %v5574 = vpack.c.b16 %v5557, %v5556
      %v5575 = vpack.c.b16 %v5559, %v5558
      %5592 = vmatpush.bf16.msra.mxu0 %v5567
      %5593 = vmatpush.bf16.msra.mxu0 %v5566
      %5594 = vmatpush.bf16.msra.mxu0 %v5565
      %5595 = vmatpush.bf16.msra.mxu0 %v5564
      %5596 = vmatpush.bf16.msra.mxu0 %v5563
      %5597 = vmatpush.bf16.msra.mxu0 %v5562
      %5598 = vmatpush.bf16.msra.mxu0 %v5561
      %5599 = vmatpush.bf16.msra.mxu0 %v5560
      %5600 = vmatmul.bf16.gmra.mxu0 %v5086
      %v5601 = vpop.f32.mrf.mxu0
      %v5602 = vadd.f32 0.0, %v5601
      %v5603 = vpop.f32.mrf.mxu0
      %v5604 = vadd.f32 0.0, %v5603
      %5605 = vmatmul.bf16.gmra.mxu0 %v5088
      %v5606 = vpop.f32.mrf.mxu0
      %v5607 = vadd.f32 0.0, %v5606
      %v5608 = vpop.f32.mrf.mxu0
      %v5609 = vadd.f32 0.0, %v5608
      %5610 = vdwg.mxu0
      %5611 = vmatpush.bf16.msra.mxu0 %v5575
      %5612 = vmatpush.bf16.msra.mxu0 %v5574
      %5613 = vmatpush.bf16.msra.mxu0 %v5573
      %5614 = vmatpush.bf16.msra.mxu0 %v5572
      %5615 = vmatpush.bf16.msra.mxu0 %v5571
      %5616 = vmatpush.bf16.msra.mxu0 %v5570
      %5617 = vmatpush.bf16.msra.mxu0 %v5569
      %5618 = vmatpush.bf16.msra.mxu0 %v5568
      %5619 = vmatmul.bf16.gmra.mxu0 %v5087
      %v5620 = vpop.f32.mrf.mxu0
      %v5621 = vadd.f32 %v5602, %v5620
      %v5622 = vpop.f32.mrf.mxu0
      %v5623 = vadd.f32 %v5604, %v5622
      %5624 = vmatmul.bf16.gmra.mxu0 %v5089
      %v5625 = vpop.f32.mrf.mxu0
      %v5626 = vadd.f32 %v5607, %v5625
      %v5627 = vpop.f32.mrf.mxu0
      %v5628 = vadd.f32 %v5609, %v5627
      %5629 = vdwg.mxu0
      %vm5630 = vcmask 31744
      %v5631 = vsel %vm5630, %v5219, 0.0
      %5632 = vadd.xlane.f32.xlu0 %v5631
      %v5633 = vpop.xlane.xlu0 %5632
      %v5634 = vsel %vm5630, %v5221, 0.0
      %5635 = vadd.xlane.f32.xlu0 %v5634
      %v5636 = vpop.xlane.xlu0 %5635
      %v5637 = vsel %vm5630, %v5224, 0.0
      %5638 = vadd.xlane.f32.xlu0 %v5637
      %v5639 = vpop.xlane.xlu0 %5638
      %v5640 = vsel %vm5630, %v5226, 0.0
      %5641 = vadd.xlane.f32.xlu0 %v5640
      %v5642 = vpop.xlane.xlu0 %5641
      %v5643 = vsel %vm5630, %v5353, 0.0
      %5644 = vadd.xlane.f32.xlu0 %v5643
      %v5645 = vpop.xlane.xlu0 %5644
      %v5646 = vsel %vm5630, %v5355, 0.0
      %5647 = vadd.xlane.f32.xlu0 %v5646
      %v5648 = vpop.xlane.xlu0 %5647
      %v5649 = vsel %vm5630, %v5358, 0.0
      %5650 = vadd.xlane.f32.xlu0 %v5649
      %v5651 = vpop.xlane.xlu0 %5650
      %v5652 = vsel %vm5630, %v5360, 0.0
      %5653 = vadd.xlane.f32.xlu0 %v5652
      %v5654 = vpop.xlane.xlu0 %5653
      %v5655 = vsel %vm5630, %v5487, 0.0
      %5656 = vadd.xlane.f32.xlu0 %v5655
      %v5657 = vpop.xlane.xlu0 %5656
      %v5658 = vsel %vm5630, %v5489, 0.0
      %5659 = vadd.xlane.f32.xlu0 %v5658
      %v5660 = vpop.xlane.xlu0 %5659
      %v5661 = vsel %vm5630, %v5492, 0.0
      %5662 = vadd.xlane.f32.xlu0 %v5661
      %v5663 = vpop.xlane.xlu0 %5662
      %v5664 = vsel %vm5630, %v5494, 0.0
      %5665 = vadd.xlane.f32.xlu0 %v5664
      %v5666 = vpop.xlane.xlu0 %5665
      %v5667 = vsel %vm5630, %v5621, 0.0
      %5668 = vadd.xlane.f32.xlu0 %v5667
      %v5669 = vpop.xlane.xlu0 %5668
      %v5670 = vsel %vm5630, %v5623, 0.0
      %5671 = vadd.xlane.f32.xlu0 %v5670
      %v5672 = vpop.xlane.xlu0 %5671
      %v5673 = vsel %vm5630, %v5626, 0.0
      %5674 = vadd.xlane.f32.xlu0 %v5673
      %v5675 = vpop.xlane.xlu0 %5674
      %v5676 = vsel %vm5630, %v5628, 0.0
      %5677 = vadd.xlane.f32.xlu0 %v5676
      %v5678 = vpop.xlane.xlu0 %5677
      %v5679 = vadd.f32 %v5633, %v5645
      %v5680 = vadd.f32 %v5679, %v5657
      %v5681 = vadd.f32 %v5680, %v5669
      %v5682 = vadd.f32 %v5636, %v5648
      %v5683 = vadd.f32 %v5682, %v5660
      %v5684 = vadd.f32 %v5683, %v5672
      %v5685 = vadd.f32 %v5639, %v5651
      %v5686 = vadd.f32 %v5685, %v5663
      %v5687 = vadd.f32 %v5686, %v5675
      %v5688 = vadd.f32 %v5642, %v5654
      %v5689 = vadd.f32 %v5688, %v5666
      %v5690 = vadd.f32 %v5689, %v5678
      %v5691 = vrcp.pop 16.0
      %v5692 = vmul.f32 16.0, %v5691
      %v5693 = vsub.f32 1.0, %v5692
      %v5694 = vmul.f32 %v5691, %v5693
      %v5695 = vadd.f32 %v5691, %v5694
      %vm5696 = vweird.f32 %v5691
      %v5697 = vsel %vm5696, %v5691, %v5695
      %v5698 = vmul.f32 %v5681, %v5697
      %v5699 = vmul.f32 %v5684, %v5697
      %v5700 = vmul.f32 %v5687, %v5697
      %v5701 = vmul.f32 %v5690, %v5697
      %v5702 = vsub.f32 %v5219, %v5698
      %v5703 = vsub.f32 %v5221, %v5699
      %v5704 = vsub.f32 %v5224, %v5700
      %v5705 = vsub.f32 %v5226, %v5701
      %v5706 = vsub.f32 %v5353, %v5698
      %v5707 = vsub.f32 %v5355, %v5699
      %v5708 = vsub.f32 %v5358, %v5700
      %v5709 = vsub.f32 %v5360, %v5701
      %v5710 = vsub.f32 %v5487, %v5698
      %v5711 = vsub.f32 %v5489, %v5699
      %v5712 = vsub.f32 %v5492, %v5700
      %v5713 = vsub.f32 %v5494, %v5701
      %v5714 = vsub.f32 %v5621, %v5698
      %v5715 = vsub.f32 %v5623, %v5699
      %v5716 = vsub.f32 %v5626, %v5700
      %v5717 = vsub.f32 %v5628, %v5701
      %v5718 = vmul.f32 %v5702, %v5702
      %v5719 = vmul.f32 %v5703, %v5703
      %v5720 = vmul.f32 %v5704, %v5704
      %v5721 = vmul.f32 %v5705, %v5705
      %v5722 = vmul.f32 %v5706, %v5706
      %v5723 = vmul.f32 %v5707, %v5707
      %v5724 = vmul.f32 %v5708, %v5708
      %v5725 = vmul.f32 %v5709, %v5709
      %v5726 = vmul.f32 %v5710, %v5710
      %v5727 = vmul.f32 %v5711, %v5711
      %v5728 = vmul.f32 %v5712, %v5712
      %v5729 = vmul.f32 %v5713, %v5713
      %v5730 = vmul.f32 %v5714, %v5714
      %v5731 = vmul.f32 %v5715, %v5715
      %v5732 = vmul.f32 %v5716, %v5716
      %v5733 = vmul.f32 %v5717, %v5717
      %v5734 = vsel %vm5630, %v5718, 0.0
      %5735 = vadd.xlane.f32.xlu0 %v5734
      %v5736 = vpop.xlane.xlu0 %5735
      %v5737 = vsel %vm5630, %v5719, 0.0
      %5738 = vadd.xlane.f32.xlu0 %v5737
      %v5739 = vpop.xlane.xlu0 %5738
      %v5740 = vsel %vm5630, %v5720, 0.0
      %5741 = vadd.xlane.f32.xlu0 %v5740
      %v5742 = vpop.xlane.xlu0 %5741
      %v5743 = vsel %vm5630, %v5721, 0.0
      %5744 = vadd.xlane.f32.xlu0 %v5743
      %v5745 = vpop.xlane.xlu0 %5744
      %v5746 = vsel %vm5630, %v5722, 0.0
      %5747 = vadd.xlane.f32.xlu0 %v5746
      %v5748 = vpop.xlane.xlu0 %5747
      %v5749 = vsel %vm5630, %v5723, 0.0
      %5750 = vadd.xlane.f32.xlu0 %v5749
      %v5751 = vpop.xlane.xlu0 %5750
      %v5752 = vsel %vm5630, %v5724, 0.0
      %5753 = vadd.xlane.f32.xlu0 %v5752
      %v5754 = vpop.xlane.xlu0 %5753
      %v5755 = vsel %vm5630, %v5725, 0.0
      %5756 = vadd.xlane.f32.xlu0 %v5755
      %v5757 = vpop.xlane.xlu0 %5756
      %v5758 = vsel %vm5630, %v5726, 0.0
      %5759 = vadd.xlane.f32.xlu0 %v5758
      %v5760 = vpop.xlane.xlu0 %5759
      %v5761 = vsel %vm5630, %v5727, 0.0
      %5762 = vadd.xlane.f32.xlu0 %v5761
      %v5763 = vpop.xlane.xlu0 %5762
      %v5764 = vsel %vm5630, %v5728, 0.0
      %5765 = vadd.xlane.f32.xlu0 %v5764
      %v5766 = vpop.xlane.xlu0 %5765
      %v5767 = vsel %vm5630, %v5729, 0.0
      %5768 = vadd.xlane.f32.xlu0 %v5767
      %v5769 = vpop.xlane.xlu0 %5768
      %v5770 = vsel %vm5630, %v5730, 0.0
      %5771 = vadd.xlane.f32.xlu0 %v5770
      %v5772 = vpop.xlane.xlu0 %5771
      %v5773 = vsel %vm5630, %v5731, 0.0
      %5774 = vadd.xlane.f32.xlu0 %v5773
      %v5775 = vpop.xlane.xlu0 %5774
      %v5776 = vsel %vm5630, %v5732, 0.0
      %5777 = vadd.xlane.f32.xlu0 %v5776
      %v5778 = vpop.xlane.xlu0 %5777
      %v5779 = vsel %vm5630, %v5733, 0.0
      %5780 = vadd.xlane.f32.xlu0 %v5779
      %v5781 = vpop.xlane.xlu0 %5780
      %v5782 = vadd.f32 %v5736, %v5748
      %v5783 = vadd.f32 %v5782, %v5760
      %v5784 = vadd.f32 %v5783, %v5772
      %v5785 = vadd.f32 %v5739, %v5751
      %v5786 = vadd.f32 %v5785, %v5763
      %v5787 = vadd.f32 %v5786, %v5775
      %v5788 = vadd.f32 %v5742, %v5754
      %v5789 = vadd.f32 %v5788, %v5766
      %v5790 = vadd.f32 %v5789, %v5778
      %v5791 = vadd.f32 %v5745, %v5757
      %v5792 = vadd.f32 %v5791, %v5769
      %v5793 = vadd.f32 %v5792, %v5781
      %v5794 = vmul.f32 %v5784, %v5697
      %v5795 = vmul.f32 %v5787, %v5697
      %v5796 = vmul.f32 %v5790, %v5697
      %v5797 = vmul.f32 %v5793, %v5697
      %v5798 = vadd.f32 %v5794, 1e-05
      %v5799 = vadd.f32 %v5795, 1e-05
      %v5800 = vadd.f32 %v5796, 1e-05
      %v5801 = vadd.f32 %v5797, 1e-05
      %v5802 = vrsqrt.pop %v5798
      %v5803 = vmul.f32 %v5802, %v5798
      %v5804 = vmul.f32 %v5803, %v5802
      %v5805 = vmul.f32 0.5, %v5804
      %v5806 = vsub.f32 1.5, %v5805
      %v5807 = vmul.f32 %v5802, %v5806
      %vm5808 = vweird.f32 %v5798
      %vm5809 = vweird.f32 %v5802
      %vm5810 = vmor %vm5808, %vm5809
      %v5811 = vsel %vm5810, %v5802, %v5807
      %v5812 = vrsqrt.pop %v5799
      %v5813 = vmul.f32 %v5812, %v5799
      %v5814 = vmul.f32 %v5813, %v5812
      %v5815 = vmul.f32 0.5, %v5814
      %v5816 = vsub.f32 1.5, %v5815
      %v5817 = vmul.f32 %v5812, %v5816
      %vm5818 = vweird.f32 %v5799
      %vm5819 = vweird.f32 %v5812
      %vm5820 = vmor %vm5818, %vm5819
      %v5821 = vsel %vm5820, %v5812, %v5817
      %v5822 = vrsqrt.pop %v5800
      %v5823 = vmul.f32 %v5822, %v5800
      %v5824 = vmul.f32 %v5823, %v5822
      %v5825 = vmul.f32 0.5, %v5824
      %v5826 = vsub.f32 1.5, %v5825
      %v5827 = vmul.f32 %v5822, %v5826
      %vm5828 = vweird.f32 %v5800
      %vm5829 = vweird.f32 %v5822
      %vm5830 = vmor %vm5828, %vm5829
      %v5831 = vsel %vm5830, %v5822, %v5827
      %v5832 = vrsqrt.pop %v5801
      %v5833 = vmul.f32 %v5832, %v5801
      %v5834 = vmul.f32 %v5833, %v5832
      %v5835 = vmul.f32 0.5, %v5834
      %v5836 = vsub.f32 1.5, %v5835
      %v5837 = vmul.f32 %v5832, %v5836
      %vm5838 = vweird.f32 %v5801
      %vm5839 = vweird.f32 %v5832
      %vm5840 = vmor %vm5838, %vm5839
      %v5841 = vsel %vm5840, %v5832, %v5837
      %v5842 = vmul.f32 %v5702, %v5811
      %v5843 = vmul.f32 %v5703, %v5821
      %v5844 = vmul.f32 %v5704, %v5831
      %v5845 = vmul.f32 %v5705, %v5841
      %v5846 = vmul.f32 %v5706, %v5811
      %v5847 = vmul.f32 %v5707, %v5821
      %v5848 = vmul.f32 %v5708, %v5831
      %v5849 = vmul.f32 %v5709, %v5841
      %v5850 = vmul.f32 %v5710, %v5811
      %v5851 = vmul.f32 %v5711, %v5821
      %v5852 = vmul.f32 %v5712, %v5831
      %v5853 = vmul.f32 %v5713, %v5841
      %v5854 = vmul.f32 %v5714, %v5811
      %v5855 = vmul.f32 %v5715, %v5821
      %v5856 = vmul.f32 %v5716, %v5831
      %v5857 = vmul.f32 %v5717, %v5841
      %v5858 = vmul.f32 %v5842, 0.2
      %v5859 = vmul.f32 %v5843, 0.2
      %v5860 = vmul.f32 %v5844, 0.2
      %v5861 = vmul.f32 %v5845, 0.2
      %v5862 = vmul.f32 %v5846, 0.2
      %v5863 = vmul.f32 %v5847, 0.2
      %v5864 = vmul.f32 %v5848, 0.2
      %v5865 = vmul.f32 %v5849, 0.2
      %v5866 = vmul.f32 %v5850, 0.2
      %v5867 = vmul.f32 %v5851, 0.2
      %v5868 = vmul.f32 %v5852, 0.2
      %v5869 = vmul.f32 %v5853, 0.2
      %v5870 = vmul.f32 %v5854, 0.2
      %v5871 = vmul.f32 %v5855, 0.2
      %v5872 = vmul.f32 %v5856, 0.2
      %v5873 = vmul.f32 %v5857, 0.2
      %v5874 = vmax.f32 %v5842, %v5858
      %v5875 = vmax.f32 %v5843, %v5859
      %v5876 = vmax.f32 %v5844, %v5860
      %v5877 = vmax.f32 %v5845, %v5861
      %v5878 = vmax.f32 %v5846, %v5862
      %v5879 = vmax.f32 %v5847, %v5863
      %v5880 = vmax.f32 %v5848, %v5864
      %v5881 = vmax.f32 %v5849, %v5865
      %v5882 = vmax.f32 %v5850, %v5866
      %v5883 = vmax.f32 %v5851, %v5867
      %v5884 = vmax.f32 %v5852, %v5868
      %v5885 = vmax.f32 %v5853, %v5869
      %v5886 = vmax.f32 %v5854, %v5870
      %v5887 = vmax.f32 %v5855, %v5871
      %v5888 = vmax.f32 %v5856, %v5872
      %v5889 = vmax.f32 %v5857, %v5873
      %v5890 = vld [vmem:[%s7] sm:$0xff]
      %v5891 = vld [vmem:[%s7 + $0x8] sm:$0xff]
      %v5892 = vld [vmem:[%s7 + $0x10] sm:$0xff]
      %v5893 = vld [vmem:[%s7 + $0x18] sm:$0xff]
      %v5894 = vld [vmem:[%s7 + $0x20] sm:$0xff]
      %v5895 = vld [vmem:[%s7 + $0x28] sm:$0xff]
      %v5896 = vld [vmem:[%s7 + $0x30] sm:$0xff]
      %v5897 = vld [vmem:[%s7 + $0x38] sm:$0xff]
      %v5898 = vld [vmem:[%s7 + $0x40] sm:$0xff]
      %v5899 = vld [vmem:[%s7 + $0x48] sm:$0xff]
      %v5900 = vld [vmem:[%s7 + $0x50] sm:$0xff]
      %v5901 = vld [vmem:[%s7 + $0x58] sm:$0xff]
      %v5902 = vld [vmem:[%s7 + $0x60] sm:$0xff]
      %v5903 = vld [vmem:[%s7 + $0x68] sm:$0xff]
      %v5904 = vld [vmem:[%s7 + $0x70] sm:$0xff]
      %v5905 = vld [vmem:[%s7 + $0x78] sm:$0xff]
      %5907 = vset.pattern.permute.xlu0 0
      %5908 = vperm.xlu0 %5907, %v5890
      %v5909 = vpop.permute.xlu0 %5908
      %5912 = vset.pattern.permute.xlu0 0
      %5913 = vperm.xlu0 %5912, %v5891
      %v5914 = vpop.permute.xlu0 %5913
      %5917 = vset.pattern.permute.xlu0 0
      %5918 = vperm.xlu0 %5917, %v5892
      %v5919 = vpop.permute.xlu0 %5918
      %5922 = vset.pattern.permute.xlu0 0
      %5923 = vperm.xlu0 %5922, %v5893
      %v5924 = vpop.permute.xlu0 %5923
      %v5926 = vmul.f32 %v5874, %v5909
      %v5927 = vmul.f32 %v5875, %v5914
      %v5928 = vmul.f32 %v5876, %v5919
      %v5929 = vmul.f32 %v5877, %v5924
      %v5930 = vmul.f32 %v5878, %v5909
      %v5931 = vmul.f32 %v5879, %v5914
      %v5932 = vmul.f32 %v5880, %v5919
      %v5933 = vmul.f32 %v5881, %v5924
      %v5934 = vmul.f32 %v5882, %v5909
      %v5935 = vmul.f32 %v5883, %v5914
      %v5936 = vmul.f32 %v5884, %v5919
      %v5937 = vmul.f32 %v5885, %v5924
      %vm5938 = vcmask 23552
      %v5939 = vsel %vm5938, %v5926, 0.0
      %v5940 = vsel %vm5938, %v5927, 0.0
      %v5941 = vadd.f32 %v5939, %v5940
      %v5942 = vsel %vm5938, %v5928, 0.0
      %v5943 = vadd.f32 %v5941, %v5942
      %v5944 = vsel %vm5938, %v5929, 0.0
      %v5945 = vadd.f32 %v5943, %v5944
      %v5946 = vrot.slane %v5945, 4
      %v5947 = vadd.f32 %v5945, %v5946
      %v5948 = vrot.slane %v5947, 2
      %v5949 = vadd.f32 %v5947, %v5948
      %v5950 = vrot.slane %v5949, 1
      %v5951 = vadd.f32 %v5949, %v5950
      %v5952 = vsel %vm5938, %v5930, 0.0
      %v5953 = vsel %vm5938, %v5931, 0.0
      %v5954 = vadd.f32 %v5952, %v5953
      %v5955 = vsel %vm5938, %v5932, 0.0
      %v5956 = vadd.f32 %v5954, %v5955
      %v5957 = vsel %vm5938, %v5933, 0.0
      %v5958 = vadd.f32 %v5956, %v5957
      %v5959 = vrot.slane %v5958, 4
      %v5960 = vadd.f32 %v5958, %v5959
      %v5961 = vrot.slane %v5960, 2
      %v5962 = vadd.f32 %v5960, %v5961
      %v5963 = vrot.slane %v5962, 1
      %v5964 = vadd.f32 %v5962, %v5963
      %v5965 = vsel %vm5938, %v5934, 0.0
      %v5966 = vsel %vm5938, %v5935, 0.0
      %v5967 = vadd.f32 %v5965, %v5966
      %v5968 = vsel %vm5938, %v5936, 0.0
      %v5969 = vadd.f32 %v5967, %v5968
      %v5970 = vsel %vm5938, %v5937, 0.0
      %v5971 = vadd.f32 %v5969, %v5970
      %v5972 = vrot.slane %v5971, 4
      %v5973 = vadd.f32 %v5971, %v5972
      %v5974 = vrot.slane %v5973, 2
      %v5975 = vadd.f32 %v5973, %v5974
      %v5976 = vrot.slane %v5975, 1
      %v5977 = vadd.f32 %v5975, %v5976
      %v5978 = vadd.f32 %v5951, 0.0
      %v5979 = vadd.f32 %v5964, 0.0
      %v5980 = vadd.f32 %v5977, 0.0
      %5982 = vset.pattern.permute.xlu0 0
      %5983 = vperm.xlu0 %5982, %v5894
      %v5984 = vpop.permute.xlu0 %5983
      %5987 = vset.pattern.permute.xlu0 0
      %5988 = vperm.xlu0 %5987, %v5895
      %v5989 = vpop.permute.xlu0 %5988
      %5992 = vset.pattern.permute.xlu0 0
      %5993 = vperm.xlu0 %5992, %v5896
      %v5994 = vpop.permute.xlu0 %5993
      %5997 = vset.pattern.permute.xlu0 0
      %5998 = vperm.xlu0 %5997, %v5897
      %v5999 = vpop.permute.xlu0 %5998
      %v6001 = vmul.f32 %v5874, %v5984
      %v6002 = vmul.f32 %v5875, %v5989
      %v6003 = vmul.f32 %v5876, %v5994
      %v6004 = vmul.f32 %v5877, %v5999
      %v6005 = vmul.f32 %v5878, %v5984
      %v6006 = vmul.f32 %v5879, %v5989
      %v6007 = vmul.f32 %v5880, %v5994
      %v6008 = vmul.f32 %v5881, %v5999
      %v6009 = vmul.f32 %v5882, %v5984
      %v6010 = vmul.f32 %v5883, %v5989
      %v6011 = vmul.f32 %v5884, %v5994
      %v6012 = vmul.f32 %v5885, %v5999
      %vm6013 = vcmask 31752
      %v6014 = vsel %vm6013, %v6001, 0.0
      %v6015 = vsel %vm6013, %v6002, 0.0
      %v6016 = vadd.f32 %v6014, %v6015
      %v6017 = vsel %vm6013, %v6003, 0.0
      %v6018 = vadd.f32 %v6016, %v6017
      %v6019 = vsel %vm6013, %v6004, 0.0
      %v6020 = vadd.f32 %v6018, %v6019
      %v6021 = vrot.slane %v6020, 4
      %v6022 = vadd.f32 %v6020, %v6021
      %v6023 = vrot.slane %v6022, 2
      %v6024 = vadd.f32 %v6022, %v6023
      %v6025 = vrot.slane %v6024, 1
      %v6026 = vadd.f32 %v6024, %v6025
      %v6027 = vsel %vm6013, %v6005, 0.0
      %v6028 = vsel %vm6013, %v6006, 0.0
      %v6029 = vadd.f32 %v6027, %v6028
      %v6030 = vsel %vm6013, %v6007, 0.0
      %v6031 = vadd.f32 %v6029, %v6030
      %v6032 = vsel %vm6013, %v6008, 0.0
      %v6033 = vadd.f32 %v6031, %v6032
      %v6034 = vrot.slane %v6033, 4
      %v6035 = vadd.f32 %v6033, %v6034
      %v6036 = vrot.slane %v6035, 2
      %v6037 = vadd.f32 %v6035, %v6036
      %v6038 = vrot.slane %v6037, 1
      %v6039 = vadd.f32 %v6037, %v6038
      %v6040 = vsel %vm6013, %v6009, 0.0
      %v6041 = vsel %vm6013, %v6010, 0.0
      %v6042 = vadd.f32 %v6040, %v6041
      %v6043 = vsel %vm6013, %v6011, 0.0
      %v6044 = vadd.f32 %v6042, %v6043
      %v6045 = vsel %vm6013, %v6012, 0.0
      %v6046 = vadd.f32 %v6044, %v6045
      %v6047 = vrot.slane %v6046, 4
      %v6048 = vadd.f32 %v6046, %v6047
      %v6049 = vrot.slane %v6048, 2
      %v6050 = vadd.f32 %v6048, %v6049
      %v6051 = vrot.slane %v6050, 1
      %v6052 = vadd.f32 %v6050, %v6051
      %6056 = vrot.lane.b32.xlu0 %v6026, 127
      %v6057 = vpop.permute.xlu0 %6056
      %6058 = vrot.lane.b32.xlu0 %v6039, 127
      %v6059 = vpop.permute.xlu0 %6058
      %6060 = vrot.lane.b32.xlu0 %v6052, 127
      %v6061 = vpop.permute.xlu0 %6060
      %v6065 = vadd.f32 %v5978, %v6057
      %v6066 = vadd.f32 %v5979, %v6059
      %v6067 = vadd.f32 %v5980, %v6061
      %6069 = vset.pattern.permute.xlu0 0
      %6070 = vperm.xlu0 %6069, %v5898
      %v6071 = vpop.permute.xlu0 %6070
      %6074 = vset.pattern.permute.xlu0 0
      %6075 = vperm.xlu0 %6074, %v5899
      %v6076 = vpop.permute.xlu0 %6075
      %6079 = vset.pattern.permute.xlu0 0
      %6080 = vperm.xlu0 %6079, %v5900
      %v6081 = vpop.permute.xlu0 %6080
      %6084 = vset.pattern.permute.xlu0 0
      %6085 = vperm.xlu0 %6084, %v5901
      %v6086 = vpop.permute.xlu0 %6085
      %v6088 = vmul.f32 %v5878, %v6071
      %v6089 = vmul.f32 %v5879, %v6076
      %v6090 = vmul.f32 %v5880, %v6081
      %v6091 = vmul.f32 %v5881, %v6086
      %v6092 = vmul.f32 %v5882, %v6071
      %v6093 = vmul.f32 %v5883, %v6076
      %v6094 = vmul.f32 %v5884, %v6081
      %v6095 = vmul.f32 %v5885, %v6086
      %v6096 = vmul.f32 %v5886, %v6071
      %v6097 = vmul.f32 %v5887, %v6076
      %v6098 = vmul.f32 %v5888, %v6081
      %v6099 = vmul.f32 %v5889, %v6086
      %v6100 = vsel %vm5938, %v6088, 0.0
      %v6101 = vsel %vm5938, %v6089, 0.0
      %v6102 = vadd.f32 %v6100, %v6101
      %v6103 = vsel %vm5938, %v6090, 0.0
      %v6104 = vadd.f32 %v6102, %v6103
      %v6105 = vsel %vm5938, %v6091, 0.0
      %v6106 = vadd.f32 %v6104, %v6105
      %v6107 = vrot.slane %v6106, 4
      %v6108 = vadd.f32 %v6106, %v6107
      %v6109 = vrot.slane %v6108, 2
      %v6110 = vadd.f32 %v6108, %v6109
      %v6111 = vrot.slane %v6110, 1
      %v6112 = vadd.f32 %v6110, %v6111
      %v6113 = vsel %vm5938, %v6092, 0.0
      %v6114 = vsel %vm5938, %v6093, 0.0
      %v6115 = vadd.f32 %v6113, %v6114
      %v6116 = vsel %vm5938, %v6094, 0.0
      %v6117 = vadd.f32 %v6115, %v6116
      %v6118 = vsel %vm5938, %v6095, 0.0
      %v6119 = vadd.f32 %v6117, %v6118
      %v6120 = vrot.slane %v6119, 4
      %v6121 = vadd.f32 %v6119, %v6120
      %v6122 = vrot.slane %v6121, 2
      %v6123 = vadd.f32 %v6121, %v6122
      %v6124 = vrot.slane %v6123, 1
      %v6125 = vadd.f32 %v6123, %v6124
      %v6126 = vsel %vm5938, %v6096, 0.0
      %v6127 = vsel %vm5938, %v6097, 0.0
      %v6128 = vadd.f32 %v6126, %v6127
      %v6129 = vsel %vm5938, %v6098, 0.0
      %v6130 = vadd.f32 %v6128, %v6129
      %v6131 = vsel %vm5938, %v6099, 0.0
      %v6132 = vadd.f32 %v6130, %v6131
      %v6133 = vrot.slane %v6132, 4
      %v6134 = vadd.f32 %v6132, %v6133
      %v6135 = vrot.slane %v6134, 2
      %v6136 = vadd.f32 %v6134, %v6135
      %v6137 = vrot.slane %v6136, 1
      %v6138 = vadd.f32 %v6136, %v6137
      %v6139 = vadd.f32 %v6065, %v6112
      %v6140 = vadd.f32 %v6066, %v6125
      %v6141 = vadd.f32 %v6067, %v6138
      %6143 = vset.pattern.permute.xlu0 0
      %6144 = vperm.xlu0 %6143, %v5902
      %v6145 = vpop.permute.xlu0 %6144
      %6148 = vset.pattern.permute.xlu0 0
      %6149 = vperm.xlu0 %6148, %v5903
      %v6150 = vpop.permute.xlu0 %6149
      %6153 = vset.pattern.permute.xlu0 0
      %6154 = vperm.xlu0 %6153, %v5904
      %v6155 = vpop.permute.xlu0 %6154
      %6158 = vset.pattern.permute.xlu0 0
      %6159 = vperm.xlu0 %6158, %v5905
      %v6160 = vpop.permute.xlu0 %6159
      %v6162 = vmul.f32 %v5878, %v6145
      %v6163 = vmul.f32 %v5879, %v6150
      %v6164 = vmul.f32 %v5880, %v6155
      %v6165 = vmul.f32 %v5881, %v6160
      %v6166 = vmul.f32 %v5882, %v6145
      %v6167 = vmul.f32 %v5883, %v6150
      %v6168 = vmul.f32 %v5884, %v6155
      %v6169 = vmul.f32 %v5885, %v6160
      %v6170 = vmul.f32 %v5886, %v6145
      %v6171 = vmul.f32 %v5887, %v6150
      %v6172 = vmul.f32 %v5888, %v6155
      %v6173 = vmul.f32 %v5889, %v6160
      %v6174 = vsel %vm6013, %v6162, 0.0
      %v6175 = vsel %vm6013, %v6163, 0.0
      %v6176 = vadd.f32 %v6174, %v6175
      %v6177 = vsel %vm6013, %v6164, 0.0
      %v6178 = vadd.f32 %v6176, %v6177
      %v6179 = vsel %vm6013, %v6165, 0.0
      %v6180 = vadd.f32 %v6178, %v6179
      %v6181 = vrot.slane %v6180, 4
      %v6182 = vadd.f32 %v6180, %v6181
      %v6183 = vrot.slane %v6182, 2
      %v6184 = vadd.f32 %v6182, %v6183
      %v6185 = vrot.slane %v6184, 1
      %v6186 = vadd.f32 %v6184, %v6185
      %v6187 = vsel %vm6013, %v6166, 0.0
      %v6188 = vsel %vm6013, %v6167, 0.0
      %v6189 = vadd.f32 %v6187, %v6188
      %v6190 = vsel %vm6013, %v6168, 0.0
      %v6191 = vadd.f32 %v6189, %v6190
      %v6192 = vsel %vm6013, %v6169, 0.0
      %v6193 = vadd.f32 %v6191, %v6192
      %v6194 = vrot.slane %v6193, 4
      %v6195 = vadd.f32 %v6193, %v6194
      %v6196 = vrot.slane %v6195, 2
      %v6197 = vadd.f32 %v6195, %v6196
      %v6198 = vrot.slane %v6197, 1
      %v6199 = vadd.f32 %v6197, %v6198
      %v6200 = vsel %vm6013, %v6170, 0.0
      %v6201 = vsel %vm6013, %v6171, 0.0
      %v6202 = vadd.f32 %v6200, %v6201
      %v6203 = vsel %vm6013, %v6172, 0.0
      %v6204 = vadd.f32 %v6202, %v6203
      %v6205 = vsel %vm6013, %v6173, 0.0
      %v6206 = vadd.f32 %v6204, %v6205
      %v6207 = vrot.slane %v6206, 4
      %v6208 = vadd.f32 %v6206, %v6207
      %v6209 = vrot.slane %v6208, 2
      %v6210 = vadd.f32 %v6208, %v6209
      %v6211 = vrot.slane %v6210, 1
      %v6212 = vadd.f32 %v6210, %v6211
      %6216 = vrot.lane.b32.xlu0 %v6186, 127
      %v6217 = vpop.permute.xlu0 %6216
      %6218 = vrot.lane.b32.xlu0 %v6199, 127
      %v6219 = vpop.permute.xlu0 %6218
      %6220 = vrot.lane.b32.xlu0 %v6212, 127
      %v6221 = vpop.permute.xlu0 %6220
      %v6225 = vadd.f32 %v6139, %v6217
      %v6226 = vadd.f32 %v6140, %v6219
      %v6227 = vadd.f32 %v6141, %v6221
      %vm6228 = vcmask 16384
      %6229 = vst.msk [vmem:[%s364] sm:$0x1] %vm6228, %v6225
      %6230 = vst.msk [vmem:[%s364 + $0x1] sm:$0x1] %vm6228, %v6226
      %6231 = vst.msk [vmem:[%s364 + $0x2] sm:$0x1] %vm6228, %v6227
      %v6232 = vld [vmem:[%s8] sm:$0xff]
      %v6233 = vld [vmem:[%s8 + $0x8] sm:$0xff]
      %v6234 = vld [vmem:[%s8 + $0x10] sm:$0xff]
      %v6235 = vld [vmem:[%s8 + $0x18] sm:$0xff]
      %v6236 = vld [vmem:[%s8 + $0x20] sm:$0xff]
      %v6237 = vld [vmem:[%s8 + $0x28] sm:$0xff]
      %v6238 = vld [vmem:[%s8 + $0x30] sm:$0xff]
      %v6239 = vld [vmem:[%s8 + $0x38] sm:$0xff]
      %v6240 = vld [vmem:[%s8 + $0x40] sm:$0xff]
      %v6241 = vld [vmem:[%s8 + $0x48] sm:$0xff]
      %v6242 = vld [vmem:[%s8 + $0x50] sm:$0xff]
      %v6243 = vld [vmem:[%s8 + $0x58] sm:$0xff]
      %v6244 = vld [vmem:[%s8 + $0x60] sm:$0xff]
      %v6245 = vld [vmem:[%s8 + $0x68] sm:$0xff]
      %v6246 = vld [vmem:[%s8 + $0x70] sm:$0xff]
      %v6247 = vld [vmem:[%s8 + $0x78] sm:$0xff]
      %v6248 = vld [vmem:[%s8 + $0x80] sm:$0xff]
      %v6249 = vld [vmem:[%s8 + $0x88] sm:$0xff]
      %v6250 = vld [vmem:[%s8 + $0x90] sm:$0xff]
      %v6251 = vld [vmem:[%s8 + $0x98] sm:$0xff]
      %v6252 = vld [vmem:[%s8 + $0xa0] sm:$0xff]
      %v6253 = vld [vmem:[%s8 + $0xa8] sm:$0xff]
      %v6254 = vld [vmem:[%s8 + $0xb0] sm:$0xff]
      %v6255 = vld [vmem:[%s8 + $0xb8] sm:$0xff]
      %v6256 = vld [vmem:[%s8 + $0xc0] sm:$0xff]
      %v6257 = vld [vmem:[%s8 + $0xc8] sm:$0xff]
      %v6258 = vld [vmem:[%s8 + $0xd0] sm:$0xff]
      %v6259 = vld [vmem:[%s8 + $0xd8] sm:$0xff]
      %v6260 = vld [vmem:[%s8 + $0xe0] sm:$0xff]
      %v6261 = vld [vmem:[%s8 + $0xe8] sm:$0xff]
      %v6262 = vld [vmem:[%s8 + $0xf0] sm:$0xff]
      %v6263 = vld [vmem:[%s8 + $0xf8] sm:$0xff]
      %v6264 = vld [vmem:[%s8 + $0x100] sm:$0xff]
      %v6265 = vld [vmem:[%s8 + $0x108] sm:$0xff]
      %v6266 = vld [vmem:[%s8 + $0x110] sm:$0xff]
      %v6267 = vld [vmem:[%s8 + $0x118] sm:$0xff]
      %v6268 = vld [vmem:[%s8 + $0x120] sm:$0xff]
      %v6269 = vld [vmem:[%s8 + $0x128] sm:$0xff]
      %v6270 = vld [vmem:[%s8 + $0x130] sm:$0xff]
      %v6271 = vld [vmem:[%s8 + $0x138] sm:$0xff]
      %v6272 = vld [vmem:[%s8 + $0x140] sm:$0xff]
      %v6273 = vld [vmem:[%s8 + $0x148] sm:$0xff]
      %v6274 = vld [vmem:[%s8 + $0x150] sm:$0xff]
      %v6275 = vld [vmem:[%s8 + $0x158] sm:$0xff]
      %v6276 = vld [vmem:[%s8 + $0x160] sm:$0xff]
      %v6277 = vld [vmem:[%s8 + $0x168] sm:$0xff]
      %v6278 = vld [vmem:[%s8 + $0x170] sm:$0xff]
      %v6279 = vld [vmem:[%s8 + $0x178] sm:$0xff]
      %v6280 = vld [vmem:[%s8 + $0x180] sm:$0xff]
      %v6281 = vld [vmem:[%s8 + $0x188] sm:$0xff]
      %v6282 = vld [vmem:[%s8 + $0x190] sm:$0xff]
      %v6283 = vld [vmem:[%s8 + $0x198] sm:$0xff]
      %v6284 = vld [vmem:[%s8 + $0x1a0] sm:$0xff]
      %v6285 = vld [vmem:[%s8 + $0x1a8] sm:$0xff]
      %v6286 = vld [vmem:[%s8 + $0x1b0] sm:$0xff]
      %v6287 = vld [vmem:[%s8 + $0x1b8] sm:$0xff]
      %v6288 = vld [vmem:[%s8 + $0x1c0] sm:$0xff]
      %v6289 = vld [vmem:[%s8 + $0x1c8] sm:$0xff]
      %v6290 = vld [vmem:[%s8 + $0x1d0] sm:$0xff]
      %v6291 = vld [vmem:[%s8 + $0x1d8] sm:$0xff]
      %v6292 = vld [vmem:[%s8 + $0x1e0] sm:$0xff]
      %v6293 = vld [vmem:[%s8 + $0x1e8] sm:$0xff]
      %v6294 = vld [vmem:[%s8 + $0x1f0] sm:$0xff]
      %v6295 = vld [vmem:[%s8 + $0x1f8] sm:$0xff]
      %v6296 = vld [vmem:[%s8 + $0x200] sm:$0xff]
      %v6297 = vld [vmem:[%s8 + $0x208] sm:$0xff]
      %v6298 = vld [vmem:[%s8 + $0x210] sm:$0xff]
      %v6299 = vld [vmem:[%s8 + $0x218] sm:$0xff]
      %v6300 = vld [vmem:[%s8 + $0x220] sm:$0xff]
      %v6301 = vld [vmem:[%s8 + $0x228] sm:$0xff]
      %v6302 = vld [vmem:[%s8 + $0x230] sm:$0xff]
      %v6303 = vld [vmem:[%s8 + $0x238] sm:$0xff]
      %v6304 = vld [vmem:[%s8 + $0x240] sm:$0xff]
      %v6305 = vld [vmem:[%s8 + $0x248] sm:$0xff]
      %v6306 = vld [vmem:[%s8 + $0x250] sm:$0xff]
      %v6307 = vld [vmem:[%s8 + $0x258] sm:$0xff]
      %v6308 = vld [vmem:[%s8 + $0x260] sm:$0xff]
      %v6309 = vld [vmem:[%s8 + $0x268] sm:$0xff]
      %v6310 = vld [vmem:[%s8 + $0x270] sm:$0xff]
      %v6311 = vld [vmem:[%s8 + $0x278] sm:$0xff]
      %v6312 = vld [vmem:[%s8 + $0x280] sm:$0xff]
      %v6313 = vld [vmem:[%s8 + $0x288] sm:$0xff]
      %v6314 = vld [vmem:[%s8 + $0x290] sm:$0xff]
      %v6315 = vld [vmem:[%s8 + $0x298] sm:$0xff]
      %v6316 = vld [vmem:[%s8 + $0x2a0] sm:$0xff]
      %v6317 = vld [vmem:[%s8 + $0x2a8] sm:$0xff]
      %v6318 = vld [vmem:[%s8 + $0x2b0] sm:$0xff]
      %v6319 = vld [vmem:[%s8 + $0x2b8] sm:$0xff]
      %v6320 = vld [vmem:[%s8 + $0x2c0] sm:$0xff]
      %v6321 = vld [vmem:[%s8 + $0x2c8] sm:$0xff]
      %v6322 = vld [vmem:[%s8 + $0x2d0] sm:$0xff]
      %v6323 = vld [vmem:[%s8 + $0x2d8] sm:$0xff]
      %v6324 = vld [vmem:[%s8 + $0x2e0] sm:$0xff]
      %v6325 = vld [vmem:[%s8 + $0x2e8] sm:$0xff]
      %v6326 = vld [vmem:[%s8 + $0x2f0] sm:$0xff]
      %v6327 = vld [vmem:[%s8 + $0x2f8] sm:$0xff]
      %v6328 = vld [vmem:[%s8 + $0x300] sm:$0xff]
      %v6329 = vld [vmem:[%s8 + $0x308] sm:$0xff]
      %v6330 = vld [vmem:[%s8 + $0x310] sm:$0xff]
      %v6331 = vld [vmem:[%s8 + $0x318] sm:$0xff]
      %v6332 = vld [vmem:[%s8 + $0x320] sm:$0xff]
      %v6333 = vld [vmem:[%s8 + $0x328] sm:$0xff]
      %v6334 = vld [vmem:[%s8 + $0x330] sm:$0xff]
      %v6335 = vld [vmem:[%s8 + $0x338] sm:$0xff]
      %v6336 = vld [vmem:[%s8 + $0x340] sm:$0xff]
      %v6337 = vld [vmem:[%s8 + $0x348] sm:$0xff]
      %v6338 = vld [vmem:[%s8 + $0x350] sm:$0xff]
      %v6339 = vld [vmem:[%s8 + $0x358] sm:$0xff]
      %v6340 = vld [vmem:[%s8 + $0x360] sm:$0xff]
      %v6341 = vld [vmem:[%s8 + $0x368] sm:$0xff]
      %v6342 = vld [vmem:[%s8 + $0x370] sm:$0xff]
      %v6343 = vld [vmem:[%s8 + $0x378] sm:$0xff]
      %v6344 = vld [vmem:[%s8 + $0x380] sm:$0xff]
      %v6345 = vld [vmem:[%s8 + $0x388] sm:$0xff]
      %v6346 = vld [vmem:[%s8 + $0x390] sm:$0xff]
      %v6347 = vld [vmem:[%s8 + $0x398] sm:$0xff]
      %v6348 = vld [vmem:[%s8 + $0x3a0] sm:$0xff]
      %v6349 = vld [vmem:[%s8 + $0x3a8] sm:$0xff]
      %v6350 = vld [vmem:[%s8 + $0x3b0] sm:$0xff]
      %v6351 = vld [vmem:[%s8 + $0x3b8] sm:$0xff]
      %v6352 = vld [vmem:[%s8 + $0x3c0] sm:$0xff]
      %v6353 = vld [vmem:[%s8 + $0x3c8] sm:$0xff]
      %v6354 = vld [vmem:[%s8 + $0x3d0] sm:$0xff]
      %v6355 = vld [vmem:[%s8 + $0x3d8] sm:$0xff]
      %v6356 = vld [vmem:[%s8 + $0x3e0] sm:$0xff]
      %v6357 = vld [vmem:[%s8 + $0x3e8] sm:$0xff]
      %v6358 = vld [vmem:[%s8 + $0x3f0] sm:$0xff]
      %v6359 = vld [vmem:[%s8 + $0x3f8] sm:$0xff]
      %v6360 = vmul.f32 %v6232, %v5874
      %v6361 = vmul.f32 %v6233, %v5875
      %v6362 = vmul.f32 %v6234, %v5876
      %v6363 = vmul.f32 %v6235, %v5877
      %v6364 = vmul.f32 %v6236, %v5878
      %v6365 = vmul.f32 %v6237, %v5879
      %v6366 = vmul.f32 %v6238, %v5880
      %v6367 = vmul.f32 %v6239, %v5881
      %v6368 = vmul.f32 %v6240, %v5882
      %v6369 = vmul.f32 %v6241, %v5883
      %v6370 = vmul.f32 %v6242, %v5884
      %v6371 = vmul.f32 %v6243, %v5885
      %v6372 = vmul.f32 %v6244, %v5886
      %v6373 = vmul.f32 %v6245, %v5887
      %v6374 = vmul.f32 %v6246, %v5888
      %v6375 = vmul.f32 %v6247, %v5889
      %v6376 = vmul.f32 %v6248, %v5874
      %v6377 = vmul.f32 %v6249, %v5875
      %v6378 = vmul.f32 %v6250, %v5876
      %v6379 = vmul.f32 %v6251, %v5877
      %v6380 = vmul.f32 %v6252, %v5878
      %v6381 = vmul.f32 %v6253, %v5879
      %v6382 = vmul.f32 %v6254, %v5880
      %v6383 = vmul.f32 %v6255, %v5881
      %v6384 = vmul.f32 %v6256, %v5882
      %v6385 = vmul.f32 %v6257, %v5883
      %v6386 = vmul.f32 %v6258, %v5884
      %v6387 = vmul.f32 %v6259, %v5885
      %v6388 = vmul.f32 %v6260, %v5886
      %v6389 = vmul.f32 %v6261, %v5887
      %v6390 = vmul.f32 %v6262, %v5888
      %v6391 = vmul.f32 %v6263, %v5889
      %v6392 = vmul.f32 %v6264, %v5874
      %v6393 = vmul.f32 %v6265, %v5875
      %v6394 = vmul.f32 %v6266, %v5876
      %v6395 = vmul.f32 %v6267, %v5877
      %v6396 = vmul.f32 %v6268, %v5878
      %v6397 = vmul.f32 %v6269, %v5879
      %v6398 = vmul.f32 %v6270, %v5880
      %v6399 = vmul.f32 %v6271, %v5881
      %v6400 = vmul.f32 %v6272, %v5882
      %v6401 = vmul.f32 %v6273, %v5883
      %v6402 = vmul.f32 %v6274, %v5884
      %v6403 = vmul.f32 %v6275, %v5885
      %v6404 = vmul.f32 %v6276, %v5886
      %v6405 = vmul.f32 %v6277, %v5887
      %v6406 = vmul.f32 %v6278, %v5888
      %v6407 = vmul.f32 %v6279, %v5889
      %v6408 = vmul.f32 %v6280, %v5874
      %v6409 = vmul.f32 %v6281, %v5875
      %v6410 = vmul.f32 %v6282, %v5876
      %v6411 = vmul.f32 %v6283, %v5877
      %v6412 = vmul.f32 %v6284, %v5878
      %v6413 = vmul.f32 %v6285, %v5879
      %v6414 = vmul.f32 %v6286, %v5880
      %v6415 = vmul.f32 %v6287, %v5881
      %v6416 = vmul.f32 %v6288, %v5882
      %v6417 = vmul.f32 %v6289, %v5883
      %v6418 = vmul.f32 %v6290, %v5884
      %v6419 = vmul.f32 %v6291, %v5885
      %v6420 = vmul.f32 %v6292, %v5886
      %v6421 = vmul.f32 %v6293, %v5887
      %v6422 = vmul.f32 %v6294, %v5888
      %v6423 = vmul.f32 %v6295, %v5889
      %v6424 = vmul.f32 %v6296, %v5874
      %v6425 = vmul.f32 %v6297, %v5875
      %v6426 = vmul.f32 %v6298, %v5876
      %v6427 = vmul.f32 %v6299, %v5877
      %v6428 = vmul.f32 %v6300, %v5878
      %v6429 = vmul.f32 %v6301, %v5879
      %v6430 = vmul.f32 %v6302, %v5880
      %v6431 = vmul.f32 %v6303, %v5881
      %v6432 = vmul.f32 %v6304, %v5882
      %v6433 = vmul.f32 %v6305, %v5883
      %v6434 = vmul.f32 %v6306, %v5884
      %v6435 = vmul.f32 %v6307, %v5885
      %v6436 = vmul.f32 %v6308, %v5886
      %v6437 = vmul.f32 %v6309, %v5887
      %v6438 = vmul.f32 %v6310, %v5888
      %v6439 = vmul.f32 %v6311, %v5889
      %v6440 = vmul.f32 %v6312, %v5874
      %v6441 = vmul.f32 %v6313, %v5875
      %v6442 = vmul.f32 %v6314, %v5876
      %v6443 = vmul.f32 %v6315, %v5877
      %v6444 = vmul.f32 %v6316, %v5878
      %v6445 = vmul.f32 %v6317, %v5879
      %v6446 = vmul.f32 %v6318, %v5880
      %v6447 = vmul.f32 %v6319, %v5881
      %v6448 = vmul.f32 %v6320, %v5882
      %v6449 = vmul.f32 %v6321, %v5883
      %v6450 = vmul.f32 %v6322, %v5884
      %v6451 = vmul.f32 %v6323, %v5885
      %v6452 = vmul.f32 %v6324, %v5886
      %v6453 = vmul.f32 %v6325, %v5887
      %v6454 = vmul.f32 %v6326, %v5888
      %v6455 = vmul.f32 %v6327, %v5889
      %v6456 = vmul.f32 %v6328, %v5874
      %v6457 = vmul.f32 %v6329, %v5875
      %v6458 = vmul.f32 %v6330, %v5876
      %v6459 = vmul.f32 %v6331, %v5877
      %v6460 = vmul.f32 %v6332, %v5878
      %v6461 = vmul.f32 %v6333, %v5879
      %v6462 = vmul.f32 %v6334, %v5880
      %v6463 = vmul.f32 %v6335, %v5881
      %v6464 = vmul.f32 %v6336, %v5882
      %v6465 = vmul.f32 %v6337, %v5883
      %v6466 = vmul.f32 %v6338, %v5884
      %v6467 = vmul.f32 %v6339, %v5885
      %v6468 = vmul.f32 %v6340, %v5886
      %v6469 = vmul.f32 %v6341, %v5887
      %v6470 = vmul.f32 %v6342, %v5888
      %v6471 = vmul.f32 %v6343, %v5889
      %v6472 = vmul.f32 %v6344, %v5874
      %v6473 = vmul.f32 %v6345, %v5875
      %v6474 = vmul.f32 %v6346, %v5876
      %v6475 = vmul.f32 %v6347, %v5877
      %v6476 = vmul.f32 %v6348, %v5878
      %v6477 = vmul.f32 %v6349, %v5879
      %v6478 = vmul.f32 %v6350, %v5880
      %v6479 = vmul.f32 %v6351, %v5881
      %v6480 = vmul.f32 %v6352, %v5882
      %v6481 = vmul.f32 %v6353, %v5883
      %v6482 = vmul.f32 %v6354, %v5884
      %v6483 = vmul.f32 %v6355, %v5885
      %v6484 = vmul.f32 %v6356, %v5886
      %v6485 = vmul.f32 %v6357, %v5887
      %v6486 = vmul.f32 %v6358, %v5888
      %v6487 = vmul.f32 %v6359, %v5889
      %v6488 = vsel %vm5630, %v6360, 0.0
      %6489 = vadd.xlane.f32.xlu0 %v6488
      %v6490 = vpop.xlane.xlu0 %6489
      %v6491 = vsel %vm5630, %v6361, 0.0
      %6492 = vadd.xlane.f32.xlu0 %v6491
      %v6493 = vpop.xlane.xlu0 %6492
      %v6494 = vsel %vm5630, %v6362, 0.0
      %6495 = vadd.xlane.f32.xlu0 %v6494
      %v6496 = vpop.xlane.xlu0 %6495
      %v6497 = vsel %vm5630, %v6363, 0.0
      %6498 = vadd.xlane.f32.xlu0 %v6497
      %v6499 = vpop.xlane.xlu0 %6498
      %v6500 = vsel %vm5630, %v6364, 0.0
      %6501 = vadd.xlane.f32.xlu0 %v6500
      %v6502 = vpop.xlane.xlu0 %6501
      %v6503 = vsel %vm5630, %v6365, 0.0
      %6504 = vadd.xlane.f32.xlu0 %v6503
      %v6505 = vpop.xlane.xlu0 %6504
      %v6506 = vsel %vm5630, %v6366, 0.0
      %6507 = vadd.xlane.f32.xlu0 %v6506
      %v6508 = vpop.xlane.xlu0 %6507
      %v6509 = vsel %vm5630, %v6367, 0.0
      %6510 = vadd.xlane.f32.xlu0 %v6509
      %v6511 = vpop.xlane.xlu0 %6510
      %v6512 = vsel %vm5630, %v6368, 0.0
      %6513 = vadd.xlane.f32.xlu0 %v6512
      %v6514 = vpop.xlane.xlu0 %6513
      %v6515 = vsel %vm5630, %v6369, 0.0
      %6516 = vadd.xlane.f32.xlu0 %v6515
      %v6517 = vpop.xlane.xlu0 %6516
      %v6518 = vsel %vm5630, %v6370, 0.0
      %6519 = vadd.xlane.f32.xlu0 %v6518
      %v6520 = vpop.xlane.xlu0 %6519
      %v6521 = vsel %vm5630, %v6371, 0.0
      %6522 = vadd.xlane.f32.xlu0 %v6521
      %v6523 = vpop.xlane.xlu0 %6522
      %v6524 = vsel %vm5630, %v6372, 0.0
      %6525 = vadd.xlane.f32.xlu0 %v6524
      %v6526 = vpop.xlane.xlu0 %6525
      %v6527 = vsel %vm5630, %v6373, 0.0
      %6528 = vadd.xlane.f32.xlu0 %v6527
      %v6529 = vpop.xlane.xlu0 %6528
      %v6530 = vsel %vm5630, %v6374, 0.0
      %6531 = vadd.xlane.f32.xlu0 %v6530
      %v6532 = vpop.xlane.xlu0 %6531
      %v6533 = vsel %vm5630, %v6375, 0.0
      %6534 = vadd.xlane.f32.xlu0 %v6533
      %v6535 = vpop.xlane.xlu0 %6534
      %v6536 = vsel %vm5630, %v6376, 0.0
      %6537 = vadd.xlane.f32.xlu0 %v6536
      %v6538 = vpop.xlane.xlu0 %6537
      %v6539 = vsel %vm5630, %v6377, 0.0
      %6540 = vadd.xlane.f32.xlu0 %v6539
      %v6541 = vpop.xlane.xlu0 %6540
      %v6542 = vsel %vm5630, %v6378, 0.0
      %6543 = vadd.xlane.f32.xlu0 %v6542
      %v6544 = vpop.xlane.xlu0 %6543
      %v6545 = vsel %vm5630, %v6379, 0.0
      %6546 = vadd.xlane.f32.xlu0 %v6545
      %v6547 = vpop.xlane.xlu0 %6546
      %v6548 = vsel %vm5630, %v6380, 0.0
      %6549 = vadd.xlane.f32.xlu0 %v6548
      %v6550 = vpop.xlane.xlu0 %6549
      %v6551 = vsel %vm5630, %v6381, 0.0
      %6552 = vadd.xlane.f32.xlu0 %v6551
      %v6553 = vpop.xlane.xlu0 %6552
      %v6554 = vsel %vm5630, %v6382, 0.0
      %6555 = vadd.xlane.f32.xlu0 %v6554
      %v6556 = vpop.xlane.xlu0 %6555
      %v6557 = vsel %vm5630, %v6383, 0.0
      %6558 = vadd.xlane.f32.xlu0 %v6557
      %v6559 = vpop.xlane.xlu0 %6558
      %v6560 = vsel %vm5630, %v6384, 0.0
      %6561 = vadd.xlane.f32.xlu0 %v6560
      %v6562 = vpop.xlane.xlu0 %6561
      %v6563 = vsel %vm5630, %v6385, 0.0
      %6564 = vadd.xlane.f32.xlu0 %v6563
      %v6565 = vpop.xlane.xlu0 %6564
      %v6566 = vsel %vm5630, %v6386, 0.0
      %6567 = vadd.xlane.f32.xlu0 %v6566
      %v6568 = vpop.xlane.xlu0 %6567
      %v6569 = vsel %vm5630, %v6387, 0.0
      %6570 = vadd.xlane.f32.xlu0 %v6569
      %v6571 = vpop.xlane.xlu0 %6570
      %v6572 = vsel %vm5630, %v6388, 0.0
      %6573 = vadd.xlane.f32.xlu0 %v6572
      %v6574 = vpop.xlane.xlu0 %6573
      %v6575 = vsel %vm5630, %v6389, 0.0
      %6576 = vadd.xlane.f32.xlu0 %v6575
      %v6577 = vpop.xlane.xlu0 %6576
      %v6578 = vsel %vm5630, %v6390, 0.0
      %6579 = vadd.xlane.f32.xlu0 %v6578
      %v6580 = vpop.xlane.xlu0 %6579
      %v6581 = vsel %vm5630, %v6391, 0.0
      %6582 = vadd.xlane.f32.xlu0 %v6581
      %v6583 = vpop.xlane.xlu0 %6582
      %v6584 = vsel %vm5630, %v6392, 0.0
      %6585 = vadd.xlane.f32.xlu0 %v6584
      %v6586 = vpop.xlane.xlu0 %6585
      %v6587 = vsel %vm5630, %v6393, 0.0
      %6588 = vadd.xlane.f32.xlu0 %v6587
      %v6589 = vpop.xlane.xlu0 %6588
      %v6590 = vsel %vm5630, %v6394, 0.0
      %6591 = vadd.xlane.f32.xlu0 %v6590
      %v6592 = vpop.xlane.xlu0 %6591
      %v6593 = vsel %vm5630, %v6395, 0.0
      %6594 = vadd.xlane.f32.xlu0 %v6593
      %v6595 = vpop.xlane.xlu0 %6594
      %v6596 = vsel %vm5630, %v6396, 0.0
      %6597 = vadd.xlane.f32.xlu0 %v6596
      %v6598 = vpop.xlane.xlu0 %6597
      %v6599 = vsel %vm5630, %v6397, 0.0
      %6600 = vadd.xlane.f32.xlu0 %v6599
      %v6601 = vpop.xlane.xlu0 %6600
      %v6602 = vsel %vm5630, %v6398, 0.0
      %6603 = vadd.xlane.f32.xlu0 %v6602
      %v6604 = vpop.xlane.xlu0 %6603
      %v6605 = vsel %vm5630, %v6399, 0.0
      %6606 = vadd.xlane.f32.xlu0 %v6605
      %v6607 = vpop.xlane.xlu0 %6606
      %v6608 = vsel %vm5630, %v6400, 0.0
      %6609 = vadd.xlane.f32.xlu0 %v6608
      %v6610 = vpop.xlane.xlu0 %6609
      %v6611 = vsel %vm5630, %v6401, 0.0
      %6612 = vadd.xlane.f32.xlu0 %v6611
      %v6613 = vpop.xlane.xlu0 %6612
      %v6614 = vsel %vm5630, %v6402, 0.0
      %6615 = vadd.xlane.f32.xlu0 %v6614
      %v6616 = vpop.xlane.xlu0 %6615
      %v6617 = vsel %vm5630, %v6403, 0.0
      %6618 = vadd.xlane.f32.xlu0 %v6617
      %v6619 = vpop.xlane.xlu0 %6618
      %v6620 = vsel %vm5630, %v6404, 0.0
      %6621 = vadd.xlane.f32.xlu0 %v6620
      %v6622 = vpop.xlane.xlu0 %6621
      %v6623 = vsel %vm5630, %v6405, 0.0
      %6624 = vadd.xlane.f32.xlu0 %v6623
      %v6625 = vpop.xlane.xlu0 %6624
      %v6626 = vsel %vm5630, %v6406, 0.0
      %6627 = vadd.xlane.f32.xlu0 %v6626
      %v6628 = vpop.xlane.xlu0 %6627
      %v6629 = vsel %vm5630, %v6407, 0.0
      %6630 = vadd.xlane.f32.xlu0 %v6629
      %v6631 = vpop.xlane.xlu0 %6630
      %v6632 = vsel %vm5630, %v6408, 0.0
      %6633 = vadd.xlane.f32.xlu0 %v6632
      %v6634 = vpop.xlane.xlu0 %6633
      %v6635 = vsel %vm5630, %v6409, 0.0
      %6636 = vadd.xlane.f32.xlu0 %v6635
      %v6637 = vpop.xlane.xlu0 %6636
      %v6638 = vsel %vm5630, %v6410, 0.0
      %6639 = vadd.xlane.f32.xlu0 %v6638
      %v6640 = vpop.xlane.xlu0 %6639
      %v6641 = vsel %vm5630, %v6411, 0.0
      %6642 = vadd.xlane.f32.xlu0 %v6641
      %v6643 = vpop.xlane.xlu0 %6642
      %v6644 = vsel %vm5630, %v6412, 0.0
      %6645 = vadd.xlane.f32.xlu0 %v6644
      %v6646 = vpop.xlane.xlu0 %6645
      %v6647 = vsel %vm5630, %v6413, 0.0
      %6648 = vadd.xlane.f32.xlu0 %v6647
      %v6649 = vpop.xlane.xlu0 %6648
      %v6650 = vsel %vm5630, %v6414, 0.0
      %6651 = vadd.xlane.f32.xlu0 %v6650
      %v6652 = vpop.xlane.xlu0 %6651
      %v6653 = vsel %vm5630, %v6415, 0.0
      %6654 = vadd.xlane.f32.xlu0 %v6653
      %v6655 = vpop.xlane.xlu0 %6654
      %v6656 = vsel %vm5630, %v6416, 0.0
      %6657 = vadd.xlane.f32.xlu0 %v6656
      %v6658 = vpop.xlane.xlu0 %6657
      %v6659 = vsel %vm5630, %v6417, 0.0
      %6660 = vadd.xlane.f32.xlu0 %v6659
      %v6661 = vpop.xlane.xlu0 %6660
      %v6662 = vsel %vm5630, %v6418, 0.0
      %6663 = vadd.xlane.f32.xlu0 %v6662
      %v6664 = vpop.xlane.xlu0 %6663
      %v6665 = vsel %vm5630, %v6419, 0.0
      %6666 = vadd.xlane.f32.xlu0 %v6665
      %v6667 = vpop.xlane.xlu0 %6666
      %v6668 = vsel %vm5630, %v6420, 0.0
      %6669 = vadd.xlane.f32.xlu0 %v6668
      %v6670 = vpop.xlane.xlu0 %6669
      %v6671 = vsel %vm5630, %v6421, 0.0
      %6672 = vadd.xlane.f32.xlu0 %v6671
      %v6673 = vpop.xlane.xlu0 %6672
      %v6674 = vsel %vm5630, %v6422, 0.0
      %6675 = vadd.xlane.f32.xlu0 %v6674
      %v6676 = vpop.xlane.xlu0 %6675
      %v6677 = vsel %vm5630, %v6423, 0.0
      %6678 = vadd.xlane.f32.xlu0 %v6677
      %v6679 = vpop.xlane.xlu0 %6678
      %v6680 = vsel %vm5630, %v6424, 0.0
      %6681 = vadd.xlane.f32.xlu0 %v6680
      %v6682 = vpop.xlane.xlu0 %6681
      %v6683 = vsel %vm5630, %v6425, 0.0
      %6684 = vadd.xlane.f32.xlu0 %v6683
      %v6685 = vpop.xlane.xlu0 %6684
      %v6686 = vsel %vm5630, %v6426, 0.0
      %6687 = vadd.xlane.f32.xlu0 %v6686
      %v6688 = vpop.xlane.xlu0 %6687
      %v6689 = vsel %vm5630, %v6427, 0.0
      %6690 = vadd.xlane.f32.xlu0 %v6689
      %v6691 = vpop.xlane.xlu0 %6690
      %v6692 = vsel %vm5630, %v6428, 0.0
      %6693 = vadd.xlane.f32.xlu0 %v6692
      %v6694 = vpop.xlane.xlu0 %6693
      %v6695 = vsel %vm5630, %v6429, 0.0
      %6696 = vadd.xlane.f32.xlu0 %v6695
      %v6697 = vpop.xlane.xlu0 %6696
      %v6698 = vsel %vm5630, %v6430, 0.0
      %6699 = vadd.xlane.f32.xlu0 %v6698
      %v6700 = vpop.xlane.xlu0 %6699
      %v6701 = vsel %vm5630, %v6431, 0.0
      %6702 = vadd.xlane.f32.xlu0 %v6701
      %v6703 = vpop.xlane.xlu0 %6702
      %v6704 = vsel %vm5630, %v6432, 0.0
      %6705 = vadd.xlane.f32.xlu0 %v6704
      %v6706 = vpop.xlane.xlu0 %6705
      %v6707 = vsel %vm5630, %v6433, 0.0
      %6708 = vadd.xlane.f32.xlu0 %v6707
      %v6709 = vpop.xlane.xlu0 %6708
      %v6710 = vsel %vm5630, %v6434, 0.0
      %6711 = vadd.xlane.f32.xlu0 %v6710
      %v6712 = vpop.xlane.xlu0 %6711
      %v6713 = vsel %vm5630, %v6435, 0.0
      %6714 = vadd.xlane.f32.xlu0 %v6713
      %v6715 = vpop.xlane.xlu0 %6714
      %v6716 = vsel %vm5630, %v6436, 0.0
      %6717 = vadd.xlane.f32.xlu0 %v6716
      %v6718 = vpop.xlane.xlu0 %6717
      %v6719 = vsel %vm5630, %v6437, 0.0
      %6720 = vadd.xlane.f32.xlu0 %v6719
      %v6721 = vpop.xlane.xlu0 %6720
      %v6722 = vsel %vm5630, %v6438, 0.0
      %6723 = vadd.xlane.f32.xlu0 %v6722
      %v6724 = vpop.xlane.xlu0 %6723
      %v6725 = vsel %vm5630, %v6439, 0.0
      %6726 = vadd.xlane.f32.xlu0 %v6725
      %v6727 = vpop.xlane.xlu0 %6726
      %v6728 = vsel %vm5630, %v6440, 0.0
      %6729 = vadd.xlane.f32.xlu0 %v6728
      %v6730 = vpop.xlane.xlu0 %6729
      %v6731 = vsel %vm5630, %v6441, 0.0
      %6732 = vadd.xlane.f32.xlu0 %v6731
      %v6733 = vpop.xlane.xlu0 %6732
      %v6734 = vsel %vm5630, %v6442, 0.0
      %6735 = vadd.xlane.f32.xlu0 %v6734
      %v6736 = vpop.xlane.xlu0 %6735
      %v6737 = vsel %vm5630, %v6443, 0.0
      %6738 = vadd.xlane.f32.xlu0 %v6737
      %v6739 = vpop.xlane.xlu0 %6738
      %v6740 = vsel %vm5630, %v6444, 0.0
      %6741 = vadd.xlane.f32.xlu0 %v6740
      %v6742 = vpop.xlane.xlu0 %6741
      %v6743 = vsel %vm5630, %v6445, 0.0
      %6744 = vadd.xlane.f32.xlu0 %v6743
      %v6745 = vpop.xlane.xlu0 %6744
      %v6746 = vsel %vm5630, %v6446, 0.0
      %6747 = vadd.xlane.f32.xlu0 %v6746
      %v6748 = vpop.xlane.xlu0 %6747
      %v6749 = vsel %vm5630, %v6447, 0.0
      %6750 = vadd.xlane.f32.xlu0 %v6749
      %v6751 = vpop.xlane.xlu0 %6750
      %v6752 = vsel %vm5630, %v6448, 0.0
      %6753 = vadd.xlane.f32.xlu0 %v6752
      %v6754 = vpop.xlane.xlu0 %6753
      %v6755 = vsel %vm5630, %v6449, 0.0
      %6756 = vadd.xlane.f32.xlu0 %v6755
      %v6757 = vpop.xlane.xlu0 %6756
      %v6758 = vsel %vm5630, %v6450, 0.0
      %6759 = vadd.xlane.f32.xlu0 %v6758
      %v6760 = vpop.xlane.xlu0 %6759
      %v6761 = vsel %vm5630, %v6451, 0.0
      %6762 = vadd.xlane.f32.xlu0 %v6761
      %v6763 = vpop.xlane.xlu0 %6762
      %v6764 = vsel %vm5630, %v6452, 0.0
      %6765 = vadd.xlane.f32.xlu0 %v6764
      %v6766 = vpop.xlane.xlu0 %6765
      %v6767 = vsel %vm5630, %v6453, 0.0
      %6768 = vadd.xlane.f32.xlu0 %v6767
      %v6769 = vpop.xlane.xlu0 %6768
      %v6770 = vsel %vm5630, %v6454, 0.0
      %6771 = vadd.xlane.f32.xlu0 %v6770
      %v6772 = vpop.xlane.xlu0 %6771
      %v6773 = vsel %vm5630, %v6455, 0.0
      %6774 = vadd.xlane.f32.xlu0 %v6773
      %v6775 = vpop.xlane.xlu0 %6774
      %v6776 = vsel %vm5630, %v6456, 0.0
      %6777 = vadd.xlane.f32.xlu0 %v6776
      %v6778 = vpop.xlane.xlu0 %6777
      %v6779 = vsel %vm5630, %v6457, 0.0
      %6780 = vadd.xlane.f32.xlu0 %v6779
      %v6781 = vpop.xlane.xlu0 %6780
      %v6782 = vsel %vm5630, %v6458, 0.0
      %6783 = vadd.xlane.f32.xlu0 %v6782
      %v6784 = vpop.xlane.xlu0 %6783
      %v6785 = vsel %vm5630, %v6459, 0.0
      %6786 = vadd.xlane.f32.xlu0 %v6785
      %v6787 = vpop.xlane.xlu0 %6786
      %v6788 = vsel %vm5630, %v6460, 0.0
      %6789 = vadd.xlane.f32.xlu0 %v6788
      %v6790 = vpop.xlane.xlu0 %6789
      %v6791 = vsel %vm5630, %v6461, 0.0
      %6792 = vadd.xlane.f32.xlu0 %v6791
      %v6793 = vpop.xlane.xlu0 %6792
      %v6794 = vsel %vm5630, %v6462, 0.0
      %6795 = vadd.xlane.f32.xlu0 %v6794
      %v6796 = vpop.xlane.xlu0 %6795
      %v6797 = vsel %vm5630, %v6463, 0.0
      %6798 = vadd.xlane.f32.xlu0 %v6797
      %v6799 = vpop.xlane.xlu0 %6798
      %v6800 = vsel %vm5630, %v6464, 0.0
      %6801 = vadd.xlane.f32.xlu0 %v6800
      %v6802 = vpop.xlane.xlu0 %6801
      %v6803 = vsel %vm5630, %v6465, 0.0
      %6804 = vadd.xlane.f32.xlu0 %v6803
      %v6805 = vpop.xlane.xlu0 %6804
      %v6806 = vsel %vm5630, %v6466, 0.0
      %6807 = vadd.xlane.f32.xlu0 %v6806
      %v6808 = vpop.xlane.xlu0 %6807
      %v6809 = vsel %vm5630, %v6467, 0.0
      %6810 = vadd.xlane.f32.xlu0 %v6809
      %v6811 = vpop.xlane.xlu0 %6810
      %v6812 = vsel %vm5630, %v6468, 0.0
      %6813 = vadd.xlane.f32.xlu0 %v6812
      %v6814 = vpop.xlane.xlu0 %6813
      %v6815 = vsel %vm5630, %v6469, 0.0
      %6816 = vadd.xlane.f32.xlu0 %v6815
      %v6817 = vpop.xlane.xlu0 %6816
      %v6818 = vsel %vm5630, %v6470, 0.0
      %6819 = vadd.xlane.f32.xlu0 %v6818
      %v6820 = vpop.xlane.xlu0 %6819
      %v6821 = vsel %vm5630, %v6471, 0.0
      %6822 = vadd.xlane.f32.xlu0 %v6821
      %v6823 = vpop.xlane.xlu0 %6822
      %v6824 = vsel %vm5630, %v6472, 0.0
      %6825 = vadd.xlane.f32.xlu0 %v6824
      %v6826 = vpop.xlane.xlu0 %6825
      %v6827 = vsel %vm5630, %v6473, 0.0
      %6828 = vadd.xlane.f32.xlu0 %v6827
      %v6829 = vpop.xlane.xlu0 %6828
      %v6830 = vsel %vm5630, %v6474, 0.0
      %6831 = vadd.xlane.f32.xlu0 %v6830
      %v6832 = vpop.xlane.xlu0 %6831
      %v6833 = vsel %vm5630, %v6475, 0.0
      %6834 = vadd.xlane.f32.xlu0 %v6833
      %v6835 = vpop.xlane.xlu0 %6834
      %v6836 = vsel %vm5630, %v6476, 0.0
      %6837 = vadd.xlane.f32.xlu0 %v6836
      %v6838 = vpop.xlane.xlu0 %6837
      %v6839 = vsel %vm5630, %v6477, 0.0
      %6840 = vadd.xlane.f32.xlu0 %v6839
      %v6841 = vpop.xlane.xlu0 %6840
      %v6842 = vsel %vm5630, %v6478, 0.0
      %6843 = vadd.xlane.f32.xlu0 %v6842
      %v6844 = vpop.xlane.xlu0 %6843
      %v6845 = vsel %vm5630, %v6479, 0.0
      %6846 = vadd.xlane.f32.xlu0 %v6845
      %v6847 = vpop.xlane.xlu0 %6846
      %v6848 = vsel %vm5630, %v6480, 0.0
      %6849 = vadd.xlane.f32.xlu0 %v6848
      %v6850 = vpop.xlane.xlu0 %6849
      %v6851 = vsel %vm5630, %v6481, 0.0
      %6852 = vadd.xlane.f32.xlu0 %v6851
      %v6853 = vpop.xlane.xlu0 %6852
      %v6854 = vsel %vm5630, %v6482, 0.0
      %6855 = vadd.xlane.f32.xlu0 %v6854
      %v6856 = vpop.xlane.xlu0 %6855
      %v6857 = vsel %vm5630, %v6483, 0.0
      %6858 = vadd.xlane.f32.xlu0 %v6857
      %v6859 = vpop.xlane.xlu0 %6858
      %v6860 = vsel %vm5630, %v6484, 0.0
      %6861 = vadd.xlane.f32.xlu0 %v6860
      %v6862 = vpop.xlane.xlu0 %6861
      %v6863 = vsel %vm5630, %v6485, 0.0
      %6864 = vadd.xlane.f32.xlu0 %v6863
      %v6865 = vpop.xlane.xlu0 %6864
      %v6866 = vsel %vm5630, %v6486, 0.0
      %6867 = vadd.xlane.f32.xlu0 %v6866
      %v6868 = vpop.xlane.xlu0 %6867
      %v6869 = vsel %vm5630, %v6487, 0.0
      %6870 = vadd.xlane.f32.xlu0 %v6869
      %v6871 = vpop.xlane.xlu0 %6870
      %v6872 = vadd.f32 %v6490, %v6493
      %v6873 = vadd.f32 %v6872, %v6496
      %v6874 = vadd.f32 %v6873, %v6499
      %v6875 = vrot.slane %v6874, 4
      %v6876 = vadd.f32 %v6874, %v6875
      %v6877 = vrot.slane %v6876, 2
      %v6878 = vadd.f32 %v6876, %v6877
      %v6879 = vrot.slane %v6878, 1
      %v6880 = vadd.f32 %v6878, %v6879
      %v6881 = vadd.f32 %v6502, %v6505
      %v6882 = vadd.f32 %v6881, %v6508
      %v6883 = vadd.f32 %v6882, %v6511
      %v6884 = vrot.slane %v6883, 4
      %v6885 = vadd.f32 %v6883, %v6884
      %v6886 = vrot.slane %v6885, 2
      %v6887 = vadd.f32 %v6885, %v6886
      %v6888 = vrot.slane %v6887, 1
      %v6889 = vadd.f32 %v6887, %v6888
      %v6890 = vadd.f32 %v6514, %v6517
      %v6891 = vadd.f32 %v6890, %v6520
      %v6892 = vadd.f32 %v6891, %v6523
      %v6893 = vrot.slane %v6892, 4
      %v6894 = vadd.f32 %v6892, %v6893
      %v6895 = vrot.slane %v6894, 2
      %v6896 = vadd.f32 %v6894, %v6895
      %v6897 = vrot.slane %v6896, 1
      %v6898 = vadd.f32 %v6896, %v6897
      %v6899 = vadd.f32 %v6526, %v6529
      %v6900 = vadd.f32 %v6899, %v6532
      %v6901 = vadd.f32 %v6900, %v6535
      %v6902 = vrot.slane %v6901, 4
      %v6903 = vadd.f32 %v6901, %v6902
      %v6904 = vrot.slane %v6903, 2
      %v6905 = vadd.f32 %v6903, %v6904
      %v6906 = vrot.slane %v6905, 1
      %v6907 = vadd.f32 %v6905, %v6906
      %v6908 = vadd.f32 %v6538, %v6541
      %v6909 = vadd.f32 %v6908, %v6544
      %v6910 = vadd.f32 %v6909, %v6547
      %v6911 = vrot.slane %v6910, 4
      %v6912 = vadd.f32 %v6910, %v6911
      %v6913 = vrot.slane %v6912, 2
      %v6914 = vadd.f32 %v6912, %v6913
      %v6915 = vrot.slane %v6914, 1
      %v6916 = vadd.f32 %v6914, %v6915
      %v6917 = vadd.f32 %v6550, %v6553
      %v6918 = vadd.f32 %v6917, %v6556
      %v6919 = vadd.f32 %v6918, %v6559
      %v6920 = vrot.slane %v6919, 4
      %v6921 = vadd.f32 %v6919, %v6920
      %v6922 = vrot.slane %v6921, 2
      %v6923 = vadd.f32 %v6921, %v6922
      %v6924 = vrot.slane %v6923, 1
      %v6925 = vadd.f32 %v6923, %v6924
      %v6926 = vadd.f32 %v6562, %v6565
      %v6927 = vadd.f32 %v6926, %v6568
      %v6928 = vadd.f32 %v6927, %v6571
      %v6929 = vrot.slane %v6928, 4
      %v6930 = vadd.f32 %v6928, %v6929
      %v6931 = vrot.slane %v6930, 2
      %v6932 = vadd.f32 %v6930, %v6931
      %v6933 = vrot.slane %v6932, 1
      %v6934 = vadd.f32 %v6932, %v6933
      %v6935 = vadd.f32 %v6574, %v6577
      %v6936 = vadd.f32 %v6935, %v6580
      %v6937 = vadd.f32 %v6936, %v6583
      %v6938 = vrot.slane %v6937, 4
      %v6939 = vadd.f32 %v6937, %v6938
      %v6940 = vrot.slane %v6939, 2
      %v6941 = vadd.f32 %v6939, %v6940
      %v6942 = vrot.slane %v6941, 1
      %v6943 = vadd.f32 %v6941, %v6942
      %v6944 = vadd.f32 %v6586, %v6589
      %v6945 = vadd.f32 %v6944, %v6592
      %v6946 = vadd.f32 %v6945, %v6595
      %v6947 = vrot.slane %v6946, 4
      %v6948 = vadd.f32 %v6946, %v6947
      %v6949 = vrot.slane %v6948, 2
      %v6950 = vadd.f32 %v6948, %v6949
      %v6951 = vrot.slane %v6950, 1
      %v6952 = vadd.f32 %v6950, %v6951
      %v6953 = vadd.f32 %v6598, %v6601
      %v6954 = vadd.f32 %v6953, %v6604
      %v6955 = vadd.f32 %v6954, %v6607
      %v6956 = vrot.slane %v6955, 4
      %v6957 = vadd.f32 %v6955, %v6956
      %v6958 = vrot.slane %v6957, 2
      %v6959 = vadd.f32 %v6957, %v6958
      %v6960 = vrot.slane %v6959, 1
      %v6961 = vadd.f32 %v6959, %v6960
      %v6962 = vadd.f32 %v6610, %v6613
      %v6963 = vadd.f32 %v6962, %v6616
      %v6964 = vadd.f32 %v6963, %v6619
      %v6965 = vrot.slane %v6964, 4
      %v6966 = vadd.f32 %v6964, %v6965
      %v6967 = vrot.slane %v6966, 2
      %v6968 = vadd.f32 %v6966, %v6967
      %v6969 = vrot.slane %v6968, 1
      %v6970 = vadd.f32 %v6968, %v6969
      %v6971 = vadd.f32 %v6622, %v6625
      %v6972 = vadd.f32 %v6971, %v6628
      %v6973 = vadd.f32 %v6972, %v6631
      %v6974 = vrot.slane %v6973, 4
      %v6975 = vadd.f32 %v6973, %v6974
      %v6976 = vrot.slane %v6975, 2
      %v6977 = vadd.f32 %v6975, %v6976
      %v6978 = vrot.slane %v6977, 1
      %v6979 = vadd.f32 %v6977, %v6978
      %v6980 = vadd.f32 %v6634, %v6637
      %v6981 = vadd.f32 %v6980, %v6640
      %v6982 = vadd.f32 %v6981, %v6643
      %v6983 = vrot.slane %v6982, 4
      %v6984 = vadd.f32 %v6982, %v6983
      %v6985 = vrot.slane %v6984, 2
      %v6986 = vadd.f32 %v6984, %v6985
      %v6987 = vrot.slane %v6986, 1
      %v6988 = vadd.f32 %v6986, %v6987
      %v6989 = vadd.f32 %v6646, %v6649
      %v6990 = vadd.f32 %v6989, %v6652
      %v6991 = vadd.f32 %v6990, %v6655
      %v6992 = vrot.slane %v6991, 4
      %v6993 = vadd.f32 %v6991, %v6992
      %v6994 = vrot.slane %v6993, 2
      %v6995 = vadd.f32 %v6993, %v6994
      %v6996 = vrot.slane %v6995, 1
      %v6997 = vadd.f32 %v6995, %v6996
      %v6998 = vadd.f32 %v6658, %v6661
      %v6999 = vadd.f32 %v6998, %v6664
      %v7000 = vadd.f32 %v6999, %v6667
      %v7001 = vrot.slane %v7000, 4
      %v7002 = vadd.f32 %v7000, %v7001
      %v7003 = vrot.slane %v7002, 2
      %v7004 = vadd.f32 %v7002, %v7003
      %v7005 = vrot.slane %v7004, 1
      %v7006 = vadd.f32 %v7004, %v7005
      %v7007 = vadd.f32 %v6670, %v6673
      %v7008 = vadd.f32 %v7007, %v6676
      %v7009 = vadd.f32 %v7008, %v6679
      %v7010 = vrot.slane %v7009, 4
      %v7011 = vadd.f32 %v7009, %v7010
      %v7012 = vrot.slane %v7011, 2
      %v7013 = vadd.f32 %v7011, %v7012
      %v7014 = vrot.slane %v7013, 1
      %v7015 = vadd.f32 %v7013, %v7014
      %v7016 = vadd.f32 %v6682, %v6685
      %v7017 = vadd.f32 %v7016, %v6688
      %v7018 = vadd.f32 %v7017, %v6691
      %v7019 = vrot.slane %v7018, 4
      %v7020 = vadd.f32 %v7018, %v7019
      %v7021 = vrot.slane %v7020, 2
      %v7022 = vadd.f32 %v7020, %v7021
      %v7023 = vrot.slane %v7022, 1
      %v7024 = vadd.f32 %v7022, %v7023
      %v7025 = vadd.f32 %v6694, %v6697
      %v7026 = vadd.f32 %v7025, %v6700
      %v7027 = vadd.f32 %v7026, %v6703
      %v7028 = vrot.slane %v7027, 4
      %v7029 = vadd.f32 %v7027, %v7028
      %v7030 = vrot.slane %v7029, 2
      %v7031 = vadd.f32 %v7029, %v7030
      %v7032 = vrot.slane %v7031, 1
      %v7033 = vadd.f32 %v7031, %v7032
      %v7034 = vadd.f32 %v6706, %v6709
      %v7035 = vadd.f32 %v7034, %v6712
      %v7036 = vadd.f32 %v7035, %v6715
      %v7037 = vrot.slane %v7036, 4
      %v7038 = vadd.f32 %v7036, %v7037
      %v7039 = vrot.slane %v7038, 2
      %v7040 = vadd.f32 %v7038, %v7039
      %v7041 = vrot.slane %v7040, 1
      %v7042 = vadd.f32 %v7040, %v7041
      %v7043 = vadd.f32 %v6718, %v6721
      %v7044 = vadd.f32 %v7043, %v6724
      %v7045 = vadd.f32 %v7044, %v6727
      %v7046 = vrot.slane %v7045, 4
      %v7047 = vadd.f32 %v7045, %v7046
      %v7048 = vrot.slane %v7047, 2
      %v7049 = vadd.f32 %v7047, %v7048
      %v7050 = vrot.slane %v7049, 1
      %v7051 = vadd.f32 %v7049, %v7050
      %v7052 = vadd.f32 %v6730, %v6733
      %v7053 = vadd.f32 %v7052, %v6736
      %v7054 = vadd.f32 %v7053, %v6739
      %v7055 = vrot.slane %v7054, 4
      %v7056 = vadd.f32 %v7054, %v7055
      %v7057 = vrot.slane %v7056, 2
      %v7058 = vadd.f32 %v7056, %v7057
      %v7059 = vrot.slane %v7058, 1
      %v7060 = vadd.f32 %v7058, %v7059
      %v7061 = vadd.f32 %v6742, %v6745
      %v7062 = vadd.f32 %v7061, %v6748
      %v7063 = vadd.f32 %v7062, %v6751
      %v7064 = vrot.slane %v7063, 4
      %v7065 = vadd.f32 %v7063, %v7064
      %v7066 = vrot.slane %v7065, 2
      %v7067 = vadd.f32 %v7065, %v7066
      %v7068 = vrot.slane %v7067, 1
      %v7069 = vadd.f32 %v7067, %v7068
      %v7070 = vadd.f32 %v6754, %v6757
      %v7071 = vadd.f32 %v7070, %v6760
      %v7072 = vadd.f32 %v7071, %v6763
      %v7073 = vrot.slane %v7072, 4
      %v7074 = vadd.f32 %v7072, %v7073
      %v7075 = vrot.slane %v7074, 2
      %v7076 = vadd.f32 %v7074, %v7075
      %v7077 = vrot.slane %v7076, 1
      %v7078 = vadd.f32 %v7076, %v7077
      %v7079 = vadd.f32 %v6766, %v6769
      %v7080 = vadd.f32 %v7079, %v6772
      %v7081 = vadd.f32 %v7080, %v6775
      %v7082 = vrot.slane %v7081, 4
      %v7083 = vadd.f32 %v7081, %v7082
      %v7084 = vrot.slane %v7083, 2
      %v7085 = vadd.f32 %v7083, %v7084
      %v7086 = vrot.slane %v7085, 1
      %v7087 = vadd.f32 %v7085, %v7086
      %v7088 = vadd.f32 %v6778, %v6781
      %v7089 = vadd.f32 %v7088, %v6784
      %v7090 = vadd.f32 %v7089, %v6787
      %v7091 = vrot.slane %v7090, 4
      %v7092 = vadd.f32 %v7090, %v7091
      %v7093 = vrot.slane %v7092, 2
      %v7094 = vadd.f32 %v7092, %v7093
      %v7095 = vrot.slane %v7094, 1
      %v7096 = vadd.f32 %v7094, %v7095
      %v7097 = vadd.f32 %v6790, %v6793
      %v7098 = vadd.f32 %v7097, %v6796
      %v7099 = vadd.f32 %v7098, %v6799
      %v7100 = vrot.slane %v7099, 4
      %v7101 = vadd.f32 %v7099, %v7100
      %v7102 = vrot.slane %v7101, 2
      %v7103 = vadd.f32 %v7101, %v7102
      %v7104 = vrot.slane %v7103, 1
      %v7105 = vadd.f32 %v7103, %v7104
      %v7106 = vadd.f32 %v6802, %v6805
      %v7107 = vadd.f32 %v7106, %v6808
      %v7108 = vadd.f32 %v7107, %v6811
      %v7109 = vrot.slane %v7108, 4
      %v7110 = vadd.f32 %v7108, %v7109
      %v7111 = vrot.slane %v7110, 2
      %v7112 = vadd.f32 %v7110, %v7111
      %v7113 = vrot.slane %v7112, 1
      %v7114 = vadd.f32 %v7112, %v7113
      %v7115 = vadd.f32 %v6814, %v6817
      %v7116 = vadd.f32 %v7115, %v6820
      %v7117 = vadd.f32 %v7116, %v6823
      %v7118 = vrot.slane %v7117, 4
      %v7119 = vadd.f32 %v7117, %v7118
      %v7120 = vrot.slane %v7119, 2
      %v7121 = vadd.f32 %v7119, %v7120
      %v7122 = vrot.slane %v7121, 1
      %v7123 = vadd.f32 %v7121, %v7122
      %v7124 = vadd.f32 %v6826, %v6829
      %v7125 = vadd.f32 %v7124, %v6832
      %v7126 = vadd.f32 %v7125, %v6835
      %v7127 = vrot.slane %v7126, 4
      %v7128 = vadd.f32 %v7126, %v7127
      %v7129 = vrot.slane %v7128, 2
      %v7130 = vadd.f32 %v7128, %v7129
      %v7131 = vrot.slane %v7130, 1
      %v7132 = vadd.f32 %v7130, %v7131
      %v7133 = vadd.f32 %v6838, %v6841
      %v7134 = vadd.f32 %v7133, %v6844
      %v7135 = vadd.f32 %v7134, %v6847
      %v7136 = vrot.slane %v7135, 4
      %v7137 = vadd.f32 %v7135, %v7136
      %v7138 = vrot.slane %v7137, 2
      %v7139 = vadd.f32 %v7137, %v7138
      %v7140 = vrot.slane %v7139, 1
      %v7141 = vadd.f32 %v7139, %v7140
      %v7142 = vadd.f32 %v6850, %v6853
      %v7143 = vadd.f32 %v7142, %v6856
      %v7144 = vadd.f32 %v7143, %v6859
      %v7145 = vrot.slane %v7144, 4
      %v7146 = vadd.f32 %v7144, %v7145
      %v7147 = vrot.slane %v7146, 2
      %v7148 = vadd.f32 %v7146, %v7147
      %v7149 = vrot.slane %v7148, 1
      %v7150 = vadd.f32 %v7148, %v7149
      %v7151 = vadd.f32 %v6862, %v6865
      %v7152 = vadd.f32 %v7151, %v6868
      %v7153 = vadd.f32 %v7152, %v6871
      %v7154 = vrot.slane %v7153, 4
      %v7155 = vadd.f32 %v7153, %v7154
      %v7156 = vrot.slane %v7155, 2
      %v7157 = vadd.f32 %v7155, %v7156
      %v7158 = vrot.slane %v7157, 1
      %v7159 = vadd.f32 %v7157, %v7158
      %v7160 = vadd.f32 %v6880, %v6889
      %v7161 = vadd.f32 %v7160, %v6898
      %v7162 = vadd.f32 %v7161, %v6907
      %v7163 = vadd.f32 %v6916, %v6925
      %v7164 = vadd.f32 %v7163, %v6934
      %v7165 = vadd.f32 %v7164, %v6943
      %v7166 = vadd.f32 %v6952, %v6961
      %v7167 = vadd.f32 %v7166, %v6970
      %v7168 = vadd.f32 %v7167, %v6979
      %v7169 = vadd.f32 %v6988, %v6997
      %v7170 = vadd.f32 %v7169, %v7006
      %v7171 = vadd.f32 %v7170, %v7015
      %v7172 = vadd.f32 %v7024, %v7033
      %v7173 = vadd.f32 %v7172, %v7042
      %v7174 = vadd.f32 %v7173, %v7051
      %v7175 = vadd.f32 %v7060, %v7069
      %v7176 = vadd.f32 %v7175, %v7078
      %v7177 = vadd.f32 %v7176, %v7087
      %v7178 = vadd.f32 %v7096, %v7105
      %v7179 = vadd.f32 %v7178, %v7114
      %v7180 = vadd.f32 %v7179, %v7123
      %v7181 = vadd.f32 %v7132, %v7141
      %v7182 = vadd.f32 %v7181, %v7150
      %v7183 = vadd.f32 %v7182, %v7159
      %vm7184 = vcmask 0
      %7185 = vst.msk [vmem:[%s368] sm:$0x1] %vm7184, %v7162
      %7186 = vst.msk [vmem:[%s368 + $0x1] sm:$0x1] %vm7184, %v7165
      %7187 = vst.msk [vmem:[%s368 + $0x2] sm:$0x1] %vm7184, %v7168
      %7188 = vst.msk [vmem:[%s368 + $0x3] sm:$0x1] %vm7184, %v7171
      %7189 = vst.msk [vmem:[%s368 + $0x4] sm:$0x1] %vm7184, %v7174
      %7190 = vst.msk [vmem:[%s368 + $0x5] sm:$0x1] %vm7184, %v7177
      %7191 = vst.msk [vmem:[%s368 + $0x6] sm:$0x1] %vm7184, %v7180
      %7192 = vst.msk [vmem:[%s368 + $0x7] sm:$0x1] %vm7184, %v7183
      %p7193 = scmp.lt.s32.totalorder %s22, 1
      %s7194 = scalar_select %p7193, %s22, 1
      %s7195 = smul.addr %s7194, 3
      %s7196 = scalar_lea.vmem %s9, %s7195
      %p7197 = scmp.lt.s32.totalorder %s22, 1
      %s7198 = scalar_select %p7197, %s22, 1
      %s7199 = smul.addr %s7198, 8
      %s7200 = scalar_lea.vmem %s10, %s7199
      // Predicated region
      $region57: #{forward.1} parent=55 // pred_check
        %p7201 = pneg %p234
      $region58: #{forward.1} parent=55 // pred_check_branch
        %7203 = sbr.rel (%p7201) target = $region60
      $region59: #{forward.1} parent=55 // pred_region
        _
      $region60: #{forward.1} parent=55 // pred_fallthru
        _
      // Predicated region
      $region61: #{forward.1} parent=55 // pred_check
        %p7204 = pneg %p260
      $region62: #{forward.1} parent=55 // pred_check_branch
        %7206 = sbr.rel (%p7204) target = $region64
      $region63: #{forward.1} parent=55 // pred_region
        _
      $region64: #{forward.1} parent=55 // pred_fallthru
        _
    $region56: #{forward.1} parent=5 // pred_fallthru
      _
    %p7207 = scmp.le.s32.totalorder 2, %s17
    // Predicated region
    $region65: #{forward.1} parent=5 // pred_check
      %p7208 = pneg %p7207
    $region66: #{forward.1} parent=5 // pred_check_branch
      %7210 = sbr.rel (%p7208) target = $region68
    $region67: #{forward.1} parent=5 // pred_region
      %s7211 = ssub.s32 %s17, 2
      // Predicated region
      $region69: #{forward.1} parent=67 // pred_check
        %p7212 = pneg %p240
      $region70: #{forward.1} parent=67 // pred_check_branch
        %7214 = sbr.rel (%p7212) target = $region72
      $region71: #{forward.1} parent=67 // pred_region
        %p7215 = scmp.lt.s32.totalorder %s23, 1
        %s7216 = scalar_select %p7215, %s23, 1
        %s7217 = smul.addr %s7216, 3
        %s7218 = scalar_lea.vmem %s9, %s7217
      $region72: #{forward.1} parent=67 // pred_fallthru
        _
      // Predicated region
      $region73: #{forward.1} parent=67 // pred_check
        %p7219 = pneg %p266
      $region74: #{forward.1} parent=67 // pred_check_branch
        %7221 = sbr.rel (%p7219) target = $region76
      $region75: #{forward.1} parent=67 // pred_region
        %p7222 = scmp.lt.s32.totalorder %s23, 1
        %s7223 = scalar_select %p7222, %s23, 1
        %s7224 = smul.addr %s7223, 8
        %s7225 = scalar_lea.vmem %s10, %s7224
      $region76: #{forward.1} parent=67 // pred_fallthru
        _
    $region68: #{forward.1} parent=5 // pred_fallthru
      _
  $region6: #{forward.1} parent=0 // loop_footer
    %s21 = sadd.s32 1, %s17
  $region7: #{forward.1} parent=0 // loop_footer_branch
    %16 = sbr.rel target = $region3
  $region8: #{forward.1} parent=0 // loop_exit
    _

</llo_original>
